<compile_context>
chip_gen: v6e
topology: v6e:2x2x1
jax: 0.10.0
libtpu: 0.0.40
codegen_flags: <defaults>
</compile_context>

<pallas_src>
import functools

import jax
import jax.numpy as jnp
import numpy as np
from jax import lax
from jax.experimental import pallas as pl
from jax.experimental.pallas import tpu as pltpu

N_TERMS = 16
PART_DIM = 256
CLASSES = 2
BN_EPS = 1e-5
LN_EPS = 1e-5


def _const_spec(shape):
    n = len(shape)
    return pl.BlockSpec(shape, lambda e: (0,) * n)


# ---------------------------------------------------------------------------
# Fused kernel.  Grid = (num_pair_tiles,)  (reduction over pair tiles).
#   acc_ref : VMEM (N_TERMS, N_pad) f32 -- per-particle init features (transposed)
# ---------------------------------------------------------------------------
def jetcls_fused_kernel(
    head_ref, rows_ref, pw_ref, ind_ref,
    s1_ref, t1_ref, w1_ref,
    t2_ref, w2_ref,
    t3_ref, w3_ref,
    c1_ref, c2_ref, c3_ref, c3b_ref,
    out_ref,
    acc_ref,
):
    e = pl.program_id(0)
    n_e = pl.num_programs(0)
    e_tile = head_ref.shape[0]
    n_pad = pw_ref.shape[1]
    n_jets = out_ref.shape[1]

    @pl.when(e == 0)
    def _init():
        acc_ref[...] = jnp.zeros_like(acc_ref)

    # ---- per-tile rows: rho (Legendre argument) and the pre-gathered
    # part_weight[pair_tail], packed as one (2, E_T) block (single DMA).
    rho = rows_ref[pl.ds(0, 1), :]                              # (1, E_T) f32
    pwt = rows_ref[pl.ds(1, 1), :]                              # (1, E_T) f32

    # ---- Legendre P_0..P_{N_TERMS-1}(rho): recurrence on (1, E_T) registers,
    # assembled with one sublane concatenate (no per-sublane scratch stores).
    rows = [jnp.ones_like(rho), rho]
    for k in range(1, N_TERMS - 1):
        rows.append(((2.0 * k + 1.0) * rho * rows[k] - float(k) * rows[k - 1])
                    * (1.0 / (k + 1.0)))
    src = jnp.concatenate(rows, axis=0) * pwt                   # (16, E_T) f32

    # ---- exact scatter-add over pair_head on the MXU (f32, matches .at[].add):
    #   acc(16, N_pad) += src(16, E_T) @ head_oh(E_T, N_pad)
    lane_iota = lax.broadcasted_iota(jnp.int32, (e_tile, n_pad), 1)
    head_oh = (lane_iota == head_ref[...]).astype(jnp.float32)  # (E_T, N_pad)
    acc_ref[...] += jnp.dot(src, head_oh,
                            preferred_element_type=jnp.float32)

    # ---- after the last pair tile: PartInit MLP + jet head + classifier,
    # all in transposed (channels x particles) layout.  BN2/BN3 scales were
    # folded into w1/w2 in the wrapper; only biases remain here.
    @pl.when(e == n_e - 1)
    def _finalize():
        bf = jnp.bfloat16
        h = jnp.maximum(acc_ref[...] * s1_ref[...] + t1_ref[...], 0.0)  # (16,Np)
        h = jnp.dot(w1_ref[...], h.astype(bf),
                    preferred_element_type=jnp.float32)                 # (256,Np)
        h = jnp.maximum(h + t2_ref[...], 0.0)
        h = jnp.dot(w2_ref[...], h.astype(bf),
                    preferred_element_type=jnp.float32)
        h = jnp.maximum(h + t3_ref[...], 0.0)
        h = jnp.dot(w3_ref[...], h.astype(bf),
                    preferred_element_type=jnp.float32)
        h = jnp.maximum(h, 0.0)                                         # final ReLU

        # weighted scatter into jets: jetT(D,B) = (relu(h)*w)(D,Np) @ oh(Np,B)
        # (f32 exact; padded particles have pw=0 and indicator=-1 -> drop)
        scaled = h * pw_ref[...]                                        # (256,Np)
        b_iota = lax.broadcasted_iota(jnp.int32, (n_pad, n_jets), 1)
        ind_oh = (b_iota == ind_ref[...]).astype(jnp.float32)           # (Np, B)
        jet = jnp.dot(scaled, ind_oh,
                      preferred_element_type=jnp.float32)               # (256, B)

        # layer_norm over the feature dim (axis 0); stats via a ones-row matmul
        # (keeps the reduction on the MXU instead of a cross-sublane XLU chain).
        inv_d = 1.0 / jet.shape[0]
        ones_row = jnp.ones((1, jet.shape[0]), jnp.float32)
        mean = jnp.dot(ones_row, jet, preferred_element_type=jnp.float32) * inv_d
        cen = jet - mean
        var = jnp.dot(ones_row, cen * cen,
                      preferred_element_type=jnp.float32) * inv_d
        jet_n = cen * lax.rsqrt(var + LN_EPS)

        # classifier (PyTorch (out,in) weights, transposed activations)
        hc = jnp.maximum(jnp.dot(c1_ref[...], jet_n.astype(bf),
                                 preferred_element_type=jnp.float32), 0.0)
        hc = jnp.maximum(jnp.dot(c2_ref[...], hc.astype(bf),
                                 preferred_element_type=jnp.float32), 0.0)
        out_ref[...] = jnp.dot(c3_ref[...], hc.astype(bf),
                               preferred_element_type=jnp.float32) + c3b_ref[...]


# ---------------------------------------------------------------------------
# Parameter init (deterministic, PyTorch layouts: Linear (out, in); BN per-feat)
# ---------------------------------------------------------------------------
def init_params(key):
    ks = jax.random.split(key, 16)

    def lin(k, out_f, in_f):
        bound = 1.0 / (in_f ** 0.5)
        return jax.random.uniform(k, (out_f, in_f), jnp.float32, -bound, bound)

    def bn(k, c):
        k1, k2, k3, k4 = jax.random.split(k, 4)
        gamma = jax.random.uniform(k1, (c,), jnp.float32, 0.5, 1.5)
        beta = jax.random.uniform(k2, (c,), jnp.float32, -0.1, 0.1)
        run_m = jax.random.uniform(k3, (c,), jnp.float32, -0.2, 0.2)
        run_v = jax.random.uniform(k4, (c,), jnp.float32, 0.5, 2.0)
        return gamma, beta, run_m, run_v

    return {
        "bn1": bn(ks[0], N_TERMS),
        "w1": lin(ks[1], PART_DIM, N_TERMS),
        "bn2": bn(ks[2], PART_DIM),
        "w2": lin(ks[3], PART_DIM, PART_DIM),
        "bn3": bn(ks[4], PART_DIM),
        "w3": lin(ks[5], PART_DIM, PART_DIM),
        "c1": lin(ks[6], PART_DIM, PART_DIM),
        "c2": lin(ks[7], PART_DIM, PART_DIM),
        "c3": lin(ks[8], CLASSES, PART_DIM),
        "c3b": jax.random.uniform(ks[9], (CLASSES,), jnp.float32, -0.1, 0.1),
    }


def _fold_bn(bn_p):
    g, b, rm, rv = bn_p
    s = g / jnp.sqrt(rv + BN_EPS)
    t = b - rm * s
    return (s.reshape(-1, 1).astype(jnp.float32),
            t.reshape(-1, 1).astype(jnp.float32))


# ---------------------------------------------------------------------------
# Wrapper: full JetCLS forward (jittable; batch_size is static).
# ---------------------------------------------------------------------------
def jet_cls_forward(params, part_weight, pair_head, pair_tail, pair_rho,
                    part_indicator, *, batch_size, e_tile=1024):
    N = part_weight.shape[0]
    E = pair_rho.shape[0]

    # Pad particles to a lane-dense multiple of 128 (pw=0 / indicator=-1 pads
    # contribute nothing to the jets).
    n_pad = max(128, ((N + 127) // 128) * 128)
    pad_n = n_pad - N

    # Pair tile: as large as the VMEM transient budget allows (head_oh f32 is
    # the dominant per-tile transient), but no larger than the padded E.
    cap = max(128, ((8 * 1024 * 1024) // (6 * n_pad)) // 128 * 128)
    e_tile = max(128, min((e_tile // 128) * 128, cap))
    e_pad_min = max(128, ((E + 127) // 128) * 128)
    if e_pad_min <= e_tile:
        e_tile = e_pad_min
        n_e = 1
    else:
        n_e = (E + e_tile - 1) // e_tile
    e_pad = n_e * e_tile
    pad_e = e_pad - E

    # Pad pairs; padded pairs get head=-1 (one-hot drops them) and pw_tail=0.
    head = jnp.pad(pair_head.astype(jnp.int32), ((0, pad_e), (0, 0)),
                   constant_values=-1)                            # (E_pad, 1)
    rho_row = jnp.pad(pair_rho.astype(jnp.float32),
                      ((0, pad_e), (0, 0))).reshape(1, e_pad)     # (1, E_pad)
    # Hoisted tail gather (plain XLA gather) -> (1, E_pad) row.
    pwt = jnp.take(part_weight[:, 0].astype(jnp.float32), pair_tail[:, 0])
    pwt_row = jnp.pad(pwt, (0, pad_e)).reshape(1, e_pad)          # (1, E_pad)
    rows2 = jnp.concatenate([rho_row, pwt_row], axis=0)           # (2, E_pad)

    pw_row = jnp.pad(part_weight.astype(jnp.float32).reshape(1, N),
                     ((0, 0), (0, pad_n)))                        # (1, N_pad)
    ind_col = jnp.pad(part_indicator.astype(jnp.int32).reshape(N, 1),
                      ((0, pad_n), (0, 0)), constant_values=-1)   # (N_pad, 1)

    # Eval-mode WeightedBatchNorm folded to scale/shift; BN2/BN3 scales folded
    # straight into the preceding FC weights (free in the wrapper).
    s1, t1 = _fold_bn(params["bn1"])
    s2, t2 = _fold_bn(params["bn2"])
    s3, t3 = _fold_bn(params["bn3"])
    bf = jnp.bfloat16
    w1 = (params["w1"] * s2).astype(bf)     # s2 folded into fc1 rows
    w2 = (params["w2"] * s3).astype(bf)     # s3 folded into fc2 rows
    w3 = params["w3"].astype(bf)
    c1, c2 = params["c1"].astype(bf), params["c2"].astype(bf)
    c3 = params["c3"].astype(bf)
    c3b = params["c3b"].astype(jnp.float32).reshape(CLASSES, 1)

    # TODO(synk): constant weight blocks could be single-buffered
    # (pipeline_mode=pl.Buffered(1)) to reclaim ~0.5 MiB VMEM on v7x.
    in_specs = [
        pl.BlockSpec((e_tile, 1), lambda e: (e, 0)),              # pair_head col
        pl.BlockSpec((2, e_tile), lambda e: (0, e)),              # rho + pw_tail
        _const_spec((1, n_pad)),                                  # part_weight row
        _const_spec((n_pad, 1)),                                  # part_indicator
        _const_spec((N_TERMS, 1)), _const_spec((N_TERMS, 1)),     # s1, t1
        _const_spec((PART_DIM, N_TERMS)),                         # w1'
        _const_spec((PART_DIM, 1)),                               # t2
        _const_spec((PART_DIM, PART_DIM)),                        # w2'
        _const_spec((PART_DIM, 1)),                               # t3
        _const_spec((PART_DIM, PART_DIM)),                        # w3
        _const_spec((PART_DIM, PART_DIM)),                        # c1
        _const_spec((PART_DIM, PART_DIM)),                        # c2
        _const_spec((CLASSES, PART_DIM)),                         # c3
        _const_spec((CLASSES, 1)),                                # c3 bias
    ]

    logits_t = pl.pallas_call(
        jetcls_fused_kernel,
        out_shape=jax.ShapeDtypeStruct((CLASSES, batch_size), jnp.float32),
        grid=(n_e,),
        in_specs=in_specs,
        out_specs=_const_spec((CLASSES, batch_size)),
        scratch_shapes=[pltpu.VMEM((N_TERMS, n_pad), jnp.float32)],
        compiler_params=pltpu.CompilerParams(
            dimension_semantics=("arbitrary",),
            vmem_limit_bytes=48 * 1024 * 1024),   # raise v5e's 16 MiB default
    )(head, rows2, pw_row, ind_col,
      s1, t1, w1, t2, w2, t3, w3, c1, c2, c3, c3b)

    # TODO(synk): HigherPointPart blocks are empty at the default n_point=2; the
    # training-mode WeightedBatchNorm running-stat update is stateful and only
    # the eval (running-stats) path is implemented.
    # TODO(synk): for v7x dual-TC, split the pair reduction into per-core
    # partial accumulators on a leading 'parallel' axis plus a combine step.
    return logits_t.T                                             # (B, CLASSES)


# ---------------------------------------------------------------------------
# Pure-JAX f32 reference (for correctness check only)
# ---------------------------------------------------------------------------
def _legendre_ref(rho, n):
    cols = [jnp.ones_like(rho), rho]
    for k in range(1, n - 1):
        cols.append(((2 * k + 1) * rho * cols[k] - k * cols[k - 1]) / (k + 1))
    return jnp.concatenate(cols[:n], axis=1)


def ref_forward(params, part_weight, pair_head, pair_tail, pair_rho,
                part_indicator, *, batch_size):
    N = part_weight.shape[0]
    pair_func = _legendre_ref(pair_rho, N_TERMS)
    pw_tail = part_weight[pair_tail[:, 0]]
    src = pw_tail * pair_func
    x = jnp.zeros((N, N_TERMS), jnp.float32).at[pair_head[:, 0]].add(src)

    def bn(h, p):
        g, b, rm, rv = p
        return (h - rm) / jnp.sqrt(rv + BN_EPS) * g + b

    x = jnp.maximum(bn(x, params["bn1"]), 0.0) @ params["w1"].T
    x = jnp.maximum(bn(x, params["bn2"]), 0.0) @ params["w2"].T
    x = jnp.maximum(bn(x, params["bn3"]), 0.0) @ params["w3"].T
    x = jnp.maximum(x, 0.0)

    jet = jnp.zeros((batch_size, PART_DIM), jnp.float32).at[
        part_indicator[:, 0]].add(x * part_weight)
    mean = jet.mean(-1, keepdims=True)
    var = ((jet - mean) ** 2).mean(-1, keepdims=True)
    jet = (jet - mean) / jnp.sqrt(var + LN_EPS)

    h = jnp.maximum(jet @ params["c1"].T, 0.0)
    h = jnp.maximum(h @ params["c2"].T, 0.0)
    return h @ params["c3"].T + params["c3b"]


if __name__ == "__main__":
    key = jax.random.PRNGKey(0)
    N, E, B = 96, 300, 4                      # particles, pairs, jets
    ks = jax.random.split(key, 8)

    part_weight = jax.random.uniform(ks[0], (N, 1), jnp.float32, 0.1, 1.0)
    pair_head = jax.random.randint(ks[1], (E, 1), 0, N, jnp.int32)
    pair_tail = jax.random.randint(ks[2], (E, 1), 0, N, jnp.int32)
    pair_rho = jax.random.uniform(ks[3], (E, 1), jnp.float32, -1.0, 1.0)
    part_indicator = (jnp.arange(N, dtype=jnp.int32) % B).reshape(N, 1)

    params = init_params(ks[4])

    fwd = jax.jit(functools.partial(jet_cls_forward, batch_size=B))
    out = fwd(params, part_weight, pair_head, pair_tail, pair_rho,
              part_indicator)
    out = jax.block_until_ready(out)
    assert out.shape == (B, CLASSES) and out.dtype == jnp.float32

    ref = ref_forward(params, part_weight, pair_head, pair_tail, pair_rho,
                      part_indicator, batch_size=B)
    np.testing.assert_allclose(np.asarray(out), np.asarray(ref),
                               rtol=5e-2, atol=5e-2)
    print("KERNEL_OK")
</pallas_src>

<mosaic_0001>
module attributes {stable_mosaic.version = 11 : i64} {
  func.func @jetcls_fused_kernel(%arg0: i32, %arg1: memref<384x1xi32, #tpu.memory_space<vmem>>, %arg2: memref<2x384xf32, #tpu.memory_space<vmem>>, %arg3: memref<1x128xf32, #tpu.memory_space<vmem>>, %arg4: memref<128x1xi32, #tpu.memory_space<vmem>>, %arg5: memref<16x1xf32, #tpu.memory_space<vmem>>, %arg6: memref<16x1xf32, #tpu.memory_space<vmem>>, %arg7: memref<256x16xbf16, #tpu.memory_space<vmem>>, %arg8: memref<256x1xf32, #tpu.memory_space<vmem>>, %arg9: memref<256x256xbf16, #tpu.memory_space<vmem>>, %arg10: memref<256x1xf32, #tpu.memory_space<vmem>>, %arg11: memref<256x256xbf16, #tpu.memory_space<vmem>>, %arg12: memref<256x256xbf16, #tpu.memory_space<vmem>>, %arg13: memref<256x256xbf16, #tpu.memory_space<vmem>>, %arg14: memref<2x256xbf16, #tpu.memory_space<vmem>>, %arg15: memref<2x1xf32, #tpu.memory_space<vmem>>, %arg16: memref<2x4xf32, #tpu.memory_space<vmem>>, %arg17: memref<16x128xf32, #tpu.memory_space<vmem>>) attributes {dimension_semantics = [#tpu.dimension_semantics<arbitrary>], iteration_bounds = array<i64: 1>, scalar_prefetch = 0 : i64, scratch_operands = 1 : i64, tpu.core_type = #tpu.core_type<tc>, window_params = [{transform_indices = @transform_0, window_bounds = array<i64: 384, 1>}, {transform_indices = @transform_1, window_bounds = array<i64: 2, 384>}, {pipeline_mode = #tpu.pipeline_mode<synchronous>, transform_indices = @transform_2, window_bounds = array<i64: 1, 128>}, {pipeline_mode = #tpu.pipeline_mode<synchronous>, transform_indices = @transform_3, window_bounds = array<i64: 128, 1>}, {pipeline_mode = #tpu.pipeline_mode<synchronous>, transform_indices = @transform_4, window_bounds = array<i64: 16, 1>}, {pipeline_mode = #tpu.pipeline_mode<synchronous>, transform_indices = @transform_5, window_bounds = array<i64: 16, 1>}, {pipeline_mode = #tpu.pipeline_mode<synchronous>, transform_indices = @transform_6, window_bounds = array<i64: 256, 16>}, {pipeline_mode = #tpu.pipeline_mode<synchronous>, transform_indices = @transform_7, window_bounds = array<i64: 256, 1>}, {pipeline_mode = #tpu.pipeline_mode<synchronous>, transform_indices = @transform_8, window_bounds = array<i64: 256, 256>}, {pipeline_mode = #tpu.pipeline_mode<synchronous>, transform_indices = @transform_9, window_bounds = array<i64: 256, 1>}, {pipeline_mode = #tpu.pipeline_mode<synchronous>, transform_indices = @transform_10, window_bounds = array<i64: 256, 256>}, {pipeline_mode = #tpu.pipeline_mode<synchronous>, transform_indices = @transform_11, window_bounds = array<i64: 256, 256>}, {pipeline_mode = #tpu.pipeline_mode<synchronous>, transform_indices = @transform_12, window_bounds = array<i64: 256, 256>}, {pipeline_mode = #tpu.pipeline_mode<synchronous>, transform_indices = @transform_13, window_bounds = array<i64: 2, 256>}, {pipeline_mode = #tpu.pipeline_mode<synchronous>, transform_indices = @transform_14, window_bounds = array<i64: 2, 1>}, {pipeline_mode = #tpu.pipeline_mode<synchronous>, transform_indices = @transform_15, window_bounds = array<i64: 2, 4>}]} {
    %c0_i32 = arith.constant 0 : i32
    %0 = arith.cmpi eq, %arg0, %c0_i32 : i32
    %1 = arith.extui %0 : i1 to i32
    %c0_i32_0 = arith.constant 0 : i32
    %2 = arith.cmpi ne, %1, %c0_i32_0 : i32
    scf.if %2 {
      %cst_54 = arith.constant 0.000000e+00 : f32
      %134 = vector.broadcast %cst_54 : f32 to vector<16x128xf32>
      %c0_55 = arith.constant 0 : index
      %c0_56 = arith.constant 0 : index
      %135 = vector.load %arg17[%c0_55, %c0_56] : memref<16x128xf32, #tpu.memory_space<vmem>>, vector<16x128xf32>
      tpu.vector_store %arg17[%c0_55, %c0_56], %134 {strides = array<i32>} : memref<16x128xf32, #tpu.memory_space<vmem>>, vector<16x128xf32>,
    } else {
    }
    %c0 = arith.constant 0 : index
    %c0_1 = arith.constant 0 : index
    %3 = vector.load %arg2[%c0, %c0_1] : memref<2x384xf32, #tpu.memory_space<vmem>>, vector<1x384xf32>
    %c1 = arith.constant 1 : index
    %c0_2 = arith.constant 0 : index
    %4 = vector.load %arg2[%c1, %c0_2] : memref<2x384xf32, #tpu.memory_space<vmem>>, vector<1x384xf32>
    %cst = arith.constant 1.000000e+00 : f32
    %5 = vector.broadcast %cst : f32 to vector<1x384xf32>
    %cst_3 = arith.constant 3.000000e+00 : f32
    %6 = vector.broadcast %cst_3 : f32 to vector<1x384xf32>
    %7 = arith.mulf %6, %3 : vector<1x384xf32>
    %8 = arith.mulf %7, %3 : vector<1x384xf32>
    %cst_4 = arith.constant 1.000000e+00 : f32
    %9 = vector.broadcast %cst_4 : f32 to vector<1x384xf32>
    %10 = arith.mulf %9, %5 : vector<1x384xf32>
    %11 = arith.subf %8, %10 : vector<1x384xf32>
    %cst_5 = arith.constant 5.000000e-01 : f32
    %12 = vector.broadcast %cst_5 : f32 to vector<1x384xf32>
    %13 = arith.mulf %11, %12 : vector<1x384xf32>
    %cst_6 = arith.constant 5.000000e+00 : f32
    %14 = vector.broadcast %cst_6 : f32 to vector<1x384xf32>
    %15 = arith.mulf %14, %3 : vector<1x384xf32>
    %16 = arith.mulf %15, %13 : vector<1x384xf32>
    %cst_7 = arith.constant 2.000000e+00 : f32
    %17 = vector.broadcast %cst_7 : f32 to vector<1x384xf32>
    %18 = arith.mulf %17, %3 : vector<1x384xf32>
    %19 = arith.subf %16, %18 : vector<1x384xf32>
    %cst_8 = arith.constant 0.333333343 : f32
    %20 = vector.broadcast %cst_8 : f32 to vector<1x384xf32>
    %21 = arith.mulf %19, %20 : vector<1x384xf32>
    %cst_9 = arith.constant 7.000000e+00 : f32
    %22 = vector.broadcast %cst_9 : f32 to vector<1x384xf32>
    %23 = arith.mulf %22, %3 : vector<1x384xf32>
    %24 = arith.mulf %23, %21 : vector<1x384xf32>
    %cst_10 = arith.constant 3.000000e+00 : f32
    %25 = vector.broadcast %cst_10 : f32 to vector<1x384xf32>
    %26 = arith.mulf %25, %13 : vector<1x384xf32>
    %27 = arith.subf %24, %26 : vector<1x384xf32>
    %cst_11 = arith.constant 2.500000e-01 : f32
    %28 = vector.broadcast %cst_11 : f32 to vector<1x384xf32>
    %29 = arith.mulf %27, %28 : vector<1x384xf32>
    %cst_12 = arith.constant 9.000000e+00 : f32
    %30 = vector.broadcast %cst_12 : f32 to vector<1x384xf32>
    %31 = arith.mulf %30, %3 : vector<1x384xf32>
    %32 = arith.mulf %31, %29 : vector<1x384xf32>
    %cst_13 = arith.constant 4.000000e+00 : f32
    %33 = vector.broadcast %cst_13 : f32 to vector<1x384xf32>
    %34 = arith.mulf %33, %21 : vector<1x384xf32>
    %35 = arith.subf %32, %34 : vector<1x384xf32>
    %cst_14 = arith.constant 2.000000e-01 : f32
    %36 = vector.broadcast %cst_14 : f32 to vector<1x384xf32>
    %37 = arith.mulf %35, %36 : vector<1x384xf32>
    %cst_15 = arith.constant 1.100000e+01 : f32
    %38 = vector.broadcast %cst_15 : f32 to vector<1x384xf32>
    %39 = arith.mulf %38, %3 : vector<1x384xf32>
    %40 = arith.mulf %39, %37 : vector<1x384xf32>
    %cst_16 = arith.constant 5.000000e+00 : f32
    %41 = vector.broadcast %cst_16 : f32 to vector<1x384xf32>
    %42 = arith.mulf %41, %29 : vector<1x384xf32>
    %43 = arith.subf %40, %42 : vector<1x384xf32>
    %cst_17 = arith.constant 0.166666672 : f32
    %44 = vector.broadcast %cst_17 : f32 to vector<1x384xf32>
    %45 = arith.mulf %43, %44 : vector<1x384xf32>
    %cst_18 = arith.constant 1.300000e+01 : f32
    %46 = vector.broadcast %cst_18 : f32 to vector<1x384xf32>
    %47 = arith.mulf %46, %3 : vector<1x384xf32>
    %48 = arith.mulf %47, %45 : vector<1x384xf32>
    %cst_19 = arith.constant 6.000000e+00 : f32
    %49 = vector.broadcast %cst_19 : f32 to vector<1x384xf32>
    %50 = arith.mulf %49, %37 : vector<1x384xf32>
    %51 = arith.subf %48, %50 : vector<1x384xf32>
    %cst_20 = arith.constant 0.142857149 : f32
    %52 = vector.broadcast %cst_20 : f32 to vector<1x384xf32>
    %53 = arith.mulf %51, %52 : vector<1x384xf32>
    %cst_21 = arith.constant 1.500000e+01 : f32
    %54 = vector.broadcast %cst_21 : f32 to vector<1x384xf32>
    %55 = arith.mulf %54, %3 : vector<1x384xf32>
    %56 = arith.mulf %55, %53 : vector<1x384xf32>
    %cst_22 = arith.constant 7.000000e+00 : f32
    %57 = vector.broadcast %cst_22 : f32 to vector<1x384xf32>
    %58 = arith.mulf %57, %45 : vector<1x384xf32>
    %59 = arith.subf %56, %58 : vector<1x384xf32>
    %cst_23 = arith.constant 1.250000e-01 : f32
    %60 = vector.broadcast %cst_23 : f32 to vector<1x384xf32>
    %61 = arith.mulf %59, %60 : vector<1x384xf32>
    %cst_24 = arith.constant 1.700000e+01 : f32
    %62 = vector.broadcast %cst_24 : f32 to vector<1x384xf32>
    %63 = arith.mulf %62, %3 : vector<1x384xf32>
    %64 = arith.mulf %63, %61 : vector<1x384xf32>
    %cst_25 = arith.constant 8.000000e+00 : f32
    %65 = vector.broadcast %cst_25 : f32 to vector<1x384xf32>
    %66 = arith.mulf %65, %53 : vector<1x384xf32>
    %67 = arith.subf %64, %66 : vector<1x384xf32>
    %cst_26 = arith.constant 0.111111112 : f32
    %68 = vector.broadcast %cst_26 : f32 to vector<1x384xf32>
    %69 = arith.mulf %67, %68 : vector<1x384xf32>
    %cst_27 = arith.constant 1.900000e+01 : f32
    %70 = vector.broadcast %cst_27 : f32 to vector<1x384xf32>
    %71 = arith.mulf %70, %3 : vector<1x384xf32>
    %72 = arith.mulf %71, %69 : vector<1x384xf32>
    %cst_28 = arith.constant 9.000000e+00 : f32
    %73 = vector.broadcast %cst_28 : f32 to vector<1x384xf32>
    %74 = arith.mulf %73, %61 : vector<1x384xf32>
    %75 = arith.subf %72, %74 : vector<1x384xf32>
    %cst_29 = arith.constant 1.000000e-01 : f32
    %76 = vector.broadcast %cst_29 : f32 to vector<1x384xf32>
    %77 = arith.mulf %75, %76 : vector<1x384xf32>
    %cst_30 = arith.constant 2.100000e+01 : f32
    %78 = vector.broadcast %cst_30 : f32 to vector<1x384xf32>
    %79 = arith.mulf %78, %3 : vector<1x384xf32>
    %80 = arith.mulf %79, %77 : vector<1x384xf32>
    %cst_31 = arith.constant 1.000000e+01 : f32
    %81 = vector.broadcast %cst_31 : f32 to vector<1x384xf32>
    %82 = arith.mulf %81, %69 : vector<1x384xf32>
    %83 = arith.subf %80, %82 : vector<1x384xf32>
    %cst_32 = arith.constant 0.0909090936 : f32
    %84 = vector.broadcast %cst_32 : f32 to vector<1x384xf32>
    %85 = arith.mulf %83, %84 : vector<1x384xf32>
    %cst_33 = arith.constant 2.300000e+01 : f32
    %86 = vector.broadcast %cst_33 : f32 to vector<1x384xf32>
    %87 = arith.mulf %86, %3 : vector<1x384xf32>
    %88 = arith.mulf %87, %85 : vector<1x384xf32>
    %cst_34 = arith.constant 1.100000e+01 : f32
    %89 = vector.broadcast %cst_34 : f32 to vector<1x384xf32>
    %90 = arith.mulf %89, %77 : vector<1x384xf32>
    %91 = arith.subf %88, %90 : vector<1x384xf32>
    %cst_35 = arith.constant 0.0833333358 : f32
    %92 = vector.broadcast %cst_35 : f32 to vector<1x384xf32>
    %93 = arith.mulf %91, %92 : vector<1x384xf32>
    %cst_36 = arith.constant 2.500000e+01 : f32
    %94 = vector.broadcast %cst_36 : f32 to vector<1x384xf32>
    %95 = arith.mulf %94, %3 : vector<1x384xf32>
    %96 = arith.mulf %95, %93 : vector<1x384xf32>
    %cst_37 = arith.constant 1.200000e+01 : f32
    %97 = vector.broadcast %cst_37 : f32 to vector<1x384xf32>
    %98 = arith.mulf %97, %85 : vector<1x384xf32>
    %99 = arith.subf %96, %98 : vector<1x384xf32>
    %cst_38 = arith.constant 0.0769230798 : f32
    %100 = vector.broadcast %cst_38 : f32 to vector<1x384xf32>
    %101 = arith.mulf %99, %100 : vector<1x384xf32>
    %cst_39 = arith.constant 2.700000e+01 : f32
    %102 = vector.broadcast %cst_39 : f32 to vector<1x384xf32>
    %103 = arith.mulf %102, %3 : vector<1x384xf32>
    %104 = arith.mulf %103, %101 : vector<1x384xf32>
    %cst_40 = arith.constant 1.300000e+01 : f32
    %105 = vector.broadcast %cst_40 : f32 to vector<1x384xf32>
    %106 = arith.mulf %105, %93 : vector<1x384xf32>
    %107 = arith.subf %104, %106 : vector<1x384xf32>
    %cst_41 = arith.constant 0.0714285746 : f32
    %108 = vector.broadcast %cst_41 : f32 to vector<1x384xf32>
    %109 = arith.mulf %107, %108 : vector<1x384xf32>
    %cst_42 = arith.constant 2.900000e+01 : f32
    %110 = vector.broadcast %cst_42 : f32 to vector<1x384xf32>
    %111 = arith.mulf %110, %3 : vector<1x384xf32>
    %112 = arith.mulf %111, %109 : vector<1x384xf32>
    %cst_43 = arith.constant 1.400000e+01 : f32
    %113 = vector.broadcast %cst_43 : f32 to vector<1x384xf32>
    %114 = arith.mulf %113, %101 : vector<1x384xf32>
    %115 = arith.subf %112, %114 : vector<1x384xf32>
    %cst_44 = arith.constant 0.0666666701 : f32
    %116 = vector.broadcast %cst_44 : f32 to vector<1x384xf32>
    %117 = arith.mulf %115, %116 : vector<1x384xf32>
    %118 = tpu.concatenate %5, %3, %13, %21, %29, %37, %45, %53, %61, %69, %77, %85, %93, %101, %109, %117 in 0 : vector<1x384xf32>, vector<1x384xf32>, vector<1x384xf32>, vector<1x384xf32>, vector<1x384xf32>, vector<1x384xf32>, vector<1x384xf32>, vector<1x384xf32>, vector<1x384xf32>, vector<1x384xf32>, vector<1x384xf32>, vector<1x384xf32>, vector<1x384xf32>, vector<1x384xf32>, vector<1x384xf32>, vector<1x384xf32> -> vector<16x384xf32>
    %119 = vector.broadcast %4 : vector<1x384xf32> to vector<16x384xf32>
    %120 = arith.mulf %118, %119 : vector<16x384xf32>
    %121 = tpu.iota {dimensions = array<i32: 1>} : vector<384x128xi32>
    %c0_45 = arith.constant 0 : index
    %c0_46 = arith.constant 0 : index
    %122 = vector.load %arg1[%c0_45, %c0_46] : memref<384x1xi32, #tpu.memory_space<vmem>>, vector<384x1xi32>
    %123 = vector.broadcast %122 : vector<384x1xi32> to vector<384x128xi32>
    %124 = arith.cmpi eq, %121, %123 : vector<384x128xi32>
    %125 = arith.extui %124 : vector<384x128xi1> to vector<384x128xi32>
    %126 = arith.sitofp %125 : vector<384x128xi32> to vector<384x128xf32>
    %c0_47 = arith.constant 0 : index
    %c0_48 = arith.constant 0 : index
    %127 = vector.load %arg17[%c0_47, %c0_48] : memref<16x128xf32, #tpu.memory_space<vmem>>, vector<16x128xf32>
    %cst_49 = arith.constant dense<0.000000e+00> : vector<16x128xf32>
    %128 = tpu.matmul %120, %126, %cst_49 {dimension_numbers = #tpu.dot_dimension_numbers<[1], [0], [0], [1], [0, 0, 1, 1], [], []>} : vector<16x384xf32>, vector<384x128xf32>, vector<16x128xf32> -> vector<16x128xf32>
    %129 = arith.addf %127, %128 : vector<16x128xf32>
    %c0_50 = arith.constant 0 : index
    %c0_51 = arith.constant 0 : index
    %130 = vector.load %arg17[%c0_50, %c0_51] : memref<16x128xf32, #tpu.memory_space<vmem>>, vector<16x128xf32>
    tpu.vector_store %arg17[%c0_50, %c0_51], %129 {strides = array<i32>} : memref<16x128xf32, #tpu.memory_space<vmem>>, vector<16x128xf32>,
    %c0_i32_52 = arith.constant 0 : i32
    %131 = arith.cmpi eq, %arg0, %c0_i32_52 : i32
    %132 = arith.extui %131 : i1 to i32
    %c0_i32_53 = arith.constant 0 : i32
    %133 = arith.cmpi ne, %132, %c0_i32_53 : i32
    scf.if %133 {
      %c0_54 = arith.constant 0 : index
      %c0_55 = arith.constant 0 : index
      %134 = vector.load %arg17[%c0_54, %c0_55] : memref<16x128xf32, #tpu.memory_space<vmem>>, vector<16x128xf32>
      %c0_56 = arith.constant 0 : index
      %c0_57 = arith.constant 0 : index
      %135 = vector.load %arg5[%c0_56, %c0_57] : memref<16x1xf32, #tpu.memory_space<vmem>>, vector<16x1xf32>
      %136 = vector.broadcast %135 : vector<16x1xf32> to vector<16x128xf32>
      %137 = arith.mulf %134, %136 : vector<16x128xf32>
      %c0_58 = arith.constant 0 : index
      %c0_59 = arith.constant 0 : index
      %138 = vector.load %arg6[%c0_58, %c0_59] : memref<16x1xf32, #tpu.memory_space<vmem>>, vector<16x1xf32>
      %139 = vector.broadcast %138 : vector<16x1xf32> to vector<16x128xf32>
      %140 = arith.addf %137, %139 : vector<16x128xf32>
      %cst_60 = arith.constant 0.000000e+00 : f32
      %141 = vector.broadcast %cst_60 : f32 to vector<16x128xf32>
      %142 = arith.maximumf %140, %141 : vector<16x128xf32>
      %c0_61 = arith.constant 0 : index
      %c0_62 = arith.constant 0 : index
      %143 = vector.load %arg7[%c0_61, %c0_62] : memref<256x16xbf16, #tpu.memory_space<vmem>>, vector<256x16xbf16>
      %144 = arith.truncf %142 : vector<16x128xf32> to vector<16x128xbf16>
      %cst_63 = arith.constant dense<0.000000e+00> : vector<256x128xf32>
      %145 = tpu.matmul %143, %144, %cst_63 {dimension_numbers = #tpu.dot_dimension_numbers<[1], [0], [0], [1], [0, 0, 1, 1], [], []>} : vector<256x16xbf16>, vector<16x128xbf16>, vector<256x128xf32> -> vector<256x128xf32>
      %c0_64 = arith.constant 0 : index
      %c0_65 = arith.constant 0 : index
      %146 = vector.load %arg8[%c0_64, %c0_65] : memref<256x1xf32, #tpu.memory_space<vmem>>, vector<256x1xf32>
      %147 = vector.broadcast %146 : vector<256x1xf32> to vector<256x128xf32>
      %148 = arith.addf %145, %147 : vector<256x128xf32>
      %cst_66 = arith.constant 0.000000e+00 : f32
      %149 = vector.broadcast %cst_66 : f32 to vector<256x128xf32>
      %150 = arith.maximumf %148, %149 : vector<256x128xf32>
      %c0_67 = arith.constant 0 : index
      %c0_68 = arith.constant 0 : index
      %151 = vector.load %arg9[%c0_67, %c0_68] : memref<256x256xbf16, #tpu.memory_space<vmem>>, vector<256x256xbf16>
      %152 = arith.truncf %150 : vector<256x128xf32> to vector<256x128xbf16>
      %cst_69 = arith.constant dense<0.000000e+00> : vector<256x128xf32>
      %153 = tpu.matmul %151, %152, %cst_69 {dimension_numbers = #tpu.dot_dimension_numbers<[1], [0], [0], [1], [0, 0, 1, 1], [], []>} : vector<256x256xbf16>, vector<256x128xbf16>, vector<256x128xf32> -> vector<256x128xf32>
      %c0_70 = arith.constant 0 : index
      %c0_71 = arith.constant 0 : index
      %154 = vector.load %arg10[%c0_70, %c0_71] : memref<256x1xf32, #tpu.memory_space<vmem>>, vector<256x1xf32>
      %155 = vector.broadcast %154 : vector<256x1xf32> to vector<256x128xf32>
      %156 = arith.addf %153, %155 : vector<256x128xf32>
      %cst_72 = arith.constant 0.000000e+00 : f32
      %157 = vector.broadcast %cst_72 : f32 to vector<256x128xf32>
      %158 = arith.maximumf %156, %157 : vector<256x128xf32>
      %c0_73 = arith.constant 0 : index
      %c0_74 = arith.constant 0 : index
      %159 = vector.load %arg11[%c0_73, %c0_74] : memref<256x256xbf16, #tpu.memory_space<vmem>>, vector<256x256xbf16>
      %160 = arith.truncf %158 : vector<256x128xf32> to vector<256x128xbf16>
      %cst_75 = arith.constant dense<0.000000e+00> : vector<256x128xf32>
      %161 = tpu.matmul %159, %160, %cst_75 {dimension_numbers = #tpu.dot_dimension_numbers<[1], [0], [0], [1], [0, 0, 1, 1], [], []>} : vector<256x256xbf16>, vector<256x128xbf16>, vector<256x128xf32> -> vector<256x128xf32>
      %cst_76 = arith.constant 0.000000e+00 : f32
      %162 = vector.broadcast %cst_76 : f32 to vector<256x128xf32>
      %163 = arith.maximumf %161, %162 : vector<256x128xf32>
      %c0_77 = arith.constant 0 : index
      %c0_78 = arith.constant 0 : index
      %164 = vector.load %arg3[%c0_77, %c0_78] : memref<1x128xf32, #tpu.memory_space<vmem>>, vector<1x128xf32>
      %165 = vector.broadcast %164 : vector<1x128xf32> to vector<256x128xf32>
      %166 = arith.mulf %163, %165 : vector<256x128xf32>
      %167 = tpu.iota {dimensions = array<i32: 1>} : vector<128x4xi32>
      %c0_79 = arith.constant 0 : index
      %c0_80 = arith.constant 0 : index
      %168 = vector.load %arg4[%c0_79, %c0_80] : memref<128x1xi32, #tpu.memory_space<vmem>>, vector<128x1xi32>
      %169 = vector.broadcast %168 : vector<128x1xi32> to vector<128x4xi32>
      %170 = arith.cmpi eq, %167, %169 : vector<128x4xi32>
      %171 = arith.extui %170 : vector<128x4xi1> to vector<128x4xi32>
      %172 = arith.sitofp %171 : vector<128x4xi32> to vector<128x4xf32>
      %cst_81 = arith.constant dense<0.000000e+00> : vector<256x4xf32>
      %173 = tpu.matmul %166, %172, %cst_81 {dimension_numbers = #tpu.dot_dimension_numbers<[1], [0], [0], [1], [0, 0, 1, 1], [], []>} : vector<256x128xf32>, vector<128x4xf32>, vector<256x4xf32> -> vector<256x4xf32>
      %cst_82 = arith.constant 1.000000e+00 : f32
      %174 = vector.broadcast %cst_82 : f32 to vector<1x256xf32>
      %cst_83 = arith.constant dense<0.000000e+00> : vector<1x4xf32>
      %175 = tpu.matmul %174, %173, %cst_83 {dimension_numbers = #tpu.dot_dimension_numbers<[1], [0], [0], [1], [0, 0, 1, 1], [], []>} : vector<1x256xf32>, vector<256x4xf32>, vector<1x4xf32> -> vector<1x4xf32>
      %cst_84 = arith.constant 3.906250e-03 : f32
      %176 = vector.broadcast %cst_84 : f32 to vector<1x4xf32>
      %177 = arith.mulf %175, %176 : vector<1x4xf32>
      %178 = vector.broadcast %177 : vector<1x4xf32> to vector<256x4xf32>
      %179 = arith.subf %173, %178 : vector<256x4xf32>
      %180 = arith.mulf %179, %179 : vector<256x4xf32>
      %cst_85 = arith.constant dense<0.000000e+00> : vector<1x4xf32>
      %181 = tpu.matmul %174, %180, %cst_85 {dimension_numbers = #tpu.dot_dimension_numbers<[1], [0], [0], [1], [0, 0, 1, 1], [], []>} : vector<1x256xf32>, vector<256x4xf32>, vector<1x4xf32> -> vector<1x4xf32>
      %cst_86 = arith.constant 3.906250e-03 : f32
      %182 = vector.broadcast %cst_86 : f32 to vector<1x4xf32>
      %183 = arith.mulf %181, %182 : vector<1x4xf32>
      %cst_87 = arith.constant 9.99999974E-6 : f32
      %184 = vector.broadcast %cst_87 : f32 to vector<1x4xf32>
      %185 = arith.addf %183, %184 : vector<1x4xf32>
      %186 = math.rsqrt %185 : vector<1x4xf32>
      %187 = vector.broadcast %186 : vector<1x4xf32> to vector<256x4xf32>
      %188 = arith.mulf %179, %187 : vector<256x4xf32>
      %c0_88 = arith.constant 0 : index
      %c0_89 = arith.constant 0 : index
      %189 = vector.load %arg12[%c0_88, %c0_89] : memref<256x256xbf16, #tpu.memory_space<vmem>>, vector<256x256xbf16>
      %190 = arith.truncf %188 : vector<256x4xf32> to vector<256x4xbf16>
      %cst_90 = arith.constant dense<0.000000e+00> : vector<256x4xf32>
      %191 = tpu.matmul %189, %190, %cst_90 {dimension_numbers = #tpu.dot_dimension_numbers<[1], [0], [0], [1], [0, 0, 1, 1], [], []>} : vector<256x256xbf16>, vector<256x4xbf16>, vector<256x4xf32> -> vector<256x4xf32>
      %cst_91 = arith.constant 0.000000e+00 : f32
      %192 = vector.broadcast %cst_91 : f32 to vector<256x4xf32>
      %193 = arith.maximumf %191, %192 : vector<256x4xf32>
      %c0_92 = arith.constant 0 : index
      %c0_93 = arith.constant 0 : index
      %194 = vector.load %arg13[%c0_92, %c0_93] : memref<256x256xbf16, #tpu.memory_space<vmem>>, vector<256x256xbf16>
      %195 = arith.truncf %193 : vector<256x4xf32> to vector<256x4xbf16>
      %cst_94 = arith.constant dense<0.000000e+00> : vector<256x4xf32>
      %196 = tpu.matmul %194, %195, %cst_94 {dimension_numbers = #tpu.dot_dimension_numbers<[1], [0], [0], [1], [0, 0, 1, 1], [], []>} : vector<256x256xbf16>, vector<256x4xbf16>, vector<256x4xf32> -> vector<256x4xf32>
      %cst_95 = arith.constant 0.000000e+00 : f32
      %197 = vector.broadcast %cst_95 : f32 to vector<256x4xf32>
      %198 = arith.maximumf %196, %197 : vector<256x4xf32>
      %c0_96 = arith.constant 0 : index
      %c0_97 = arith.constant 0 : index
      %199 = vector.load %arg14[%c0_96, %c0_97] : memref<2x256xbf16, #tpu.memory_space<vmem>>, vector<2x256xbf16>
      %200 = arith.truncf %198 : vector<256x4xf32> to vector<256x4xbf16>
      %cst_98 = arith.constant dense<0.000000e+00> : vector<2x4xf32>
      %201 = tpu.matmul %199, %200, %cst_98 {dimension_numbers = #tpu.dot_dimension_numbers<[1], [0], [0], [1], [0, 0, 1, 1], [], []>} : vector<2x256xbf16>, vector<256x4xbf16>, vector<2x4xf32> -> vector<2x4xf32>
      %c0_99 = arith.constant 0 : index
      %c0_100 = arith.constant 0 : index
      %202 = vector.load %arg15[%c0_99, %c0_100] : memref<2x1xf32, #tpu.memory_space<vmem>>, vector<2x1xf32>
      %203 = vector.broadcast %202 : vector<2x1xf32> to vector<2x4xf32>
      %204 = arith.addf %201, %203 : vector<2x4xf32>
      %c0_101 = arith.constant 0 : index
      %c0_102 = arith.constant 0 : index
      %205 = vector.load %arg16[%c0_101, %c0_102] : memref<2x4xf32, #tpu.memory_space<vmem>>, vector<2x4xf32>
      tpu.vector_store %arg16[%c0_101, %c0_102], %204 {strides = array<i32>} : memref<2x4xf32, #tpu.memory_space<vmem>>, vector<2x4xf32>,
    } else {
    }
    return
  }
  func.func @transform_0(%arg0: i32) -> (i32, i32) {
    %c0_i32 = arith.constant 0 : i32
    %c0_i32_0 = arith.constant 0 : i32
    return %arg0, %c0_i32 : i32, i32
  }
  func.func @transform_1(%arg0: i32) -> (i32, i32) {
    %c0_i32 = arith.constant 0 : i32
    %c0_i32_0 = arith.constant 0 : i32
    return %c0_i32, %arg0 : i32, i32
  }
  func.func @transform_2(%arg0: i32) -> (i32, i32) {
    %c0_i32 = arith.constant 0 : i32
    %c0_i32_0 = arith.constant 0 : i32
    %c0_i32_1 = arith.constant 0 : i32
    return %c0_i32, %c0_i32_0 : i32, i32
  }
  func.func @transform_3(%arg0: i32) -> (i32, i32) {
    %c0_i32 = arith.constant 0 : i32
    %c0_i32_0 = arith.constant 0 : i32
    %c0_i32_1 = arith.constant 0 : i32
    return %c0_i32, %c0_i32_0 : i32, i32
  }
  func.func @transform_4(%arg0: i32) -> (i32, i32) {
    %c0_i32 = arith.constant 0 : i32
    %c0_i32_0 = arith.constant 0 : i32
    %c0_i32_1 = arith.constant 0 : i32
    return %c0_i32, %c0_i32_0 : i32, i32
  }
  func.func @transform_5(%arg0: i32) -> (i32, i32) {
    %c0_i32 = arith.constant 0 : i32
    %c0_i32_0 = arith.constant 0 : i32
    %c0_i32_1 = arith.constant 0 : i32
    return %c0_i32, %c0_i32_0 : i32, i32
  }
  func.func @transform_6(%arg0: i32) -> (i32, i32) {
    %c0_i32 = arith.constant 0 : i32
    %c0_i32_0 = arith.constant 0 : i32
    %c0_i32_1 = arith.constant 0 : i32
    return %c0_i32, %c0_i32_0 : i32, i32
  }
  func.func @transform_7(%arg0: i32) -> (i32, i32) {
    %c0_i32 = arith.constant 0 : i32
    %c0_i32_0 = arith.constant 0 : i32
    %c0_i32_1 = arith.constant 0 : i32
    return %c0_i32, %c0_i32_0 : i32, i32
  }
  func.func @transform_8(%arg0: i32) -> (i32, i32) {
    %c0_i32 = arith.constant 0 : i32
    %c0_i32_0 = arith.constant 0 : i32
    %c0_i32_1 = arith.constant 0 : i32
    return %c0_i32, %c0_i32_0 : i32, i32
  }
  func.func @transform_9(%arg0: i32) -> (i32, i32) {
    %c0_i32 = arith.constant 0 : i32
    %c0_i32_0 = arith.constant 0 : i32
    %c0_i32_1 = arith.constant 0 : i32
    return %c0_i32, %c0_i32_0 : i32, i32
  }
  func.func @transform_10(%arg0: i32) -> (i32, i32) {
    %c0_i32 = arith.constant 0 : i32
    %c0_i32_0 = arith.constant 0 : i32
    %c0_i32_1 = arith.constant 0 : i32
    return %c0_i32, %c0_i32_0 : i32, i32
  }
  func.func @transform_11(%arg0: i32) -> (i32, i32) {
    %c0_i32 = arith.constant 0 : i32
    %c0_i32_0 = arith.constant 0 : i32
    %c0_i32_1 = arith.constant 0 : i32
    return %c0_i32, %c0_i32_0 : i32, i32
  }
  func.func @transform_12(%arg0: i32) -> (i32, i32) {
    %c0_i32 = arith.constant 0 : i32
    %c0_i32_0 = arith.constant 0 : i32
    %c0_i32_1 = arith.constant 0 : i32
    return %c0_i32, %c0_i32_0 : i32, i32
  }
  func.func @transform_13(%arg0: i32) -> (i32, i32) {
    %c0_i32 = arith.constant 0 : i32
    %c0_i32_0 = arith.constant 0 : i32
    %c0_i32_1 = arith.constant 0 : i32
    return %c0_i32, %c0_i32_0 : i32, i32
  }
  func.func @transform_14(%arg0: i32) -> (i32, i32) {
    %c0_i32 = arith.constant 0 : i32
    %c0_i32_0 = arith.constant 0 : i32
    %c0_i32_1 = arith.constant 0 : i32
    return %c0_i32, %c0_i32_0 : i32, i32
  }
  func.func @transform_15(%arg0: i32) -> (i32, i32) {
    %c0_i32 = arith.constant 0 : i32
    %c0_i32_0 = arith.constant 0 : i32
    %c0_i32_1 = arith.constant 0 : i32
    return %c0_i32, %c0_i32_0 : i32, i32
  }
}

</mosaic_0001>

<llo_original>
// kernel: jet_cls_forward.1
$region0: #{jet_cls_forward.1}
  #allocation0 [shape = 'u32[]', space=smem, size = 0x4, offset = 0x4, fixed_abs, tag = 'smem constant byte address 0x4 - core index']
  #allocation1 [shape = 'u32[144,128]{1,0:T(1,128)}', space=vmem, size = 0x12000, scoped, tag = 'internal scratch']
  #allocation2 [shape = 'f32[16,128]{1,0:T(8,128)}', space=vmem, size = 0x2000, scoped, tag = 'scratch operand']
  %s0 = inlined_call_operand.vmem [shape: s32[384,1], index: 0, kind: input, shape index: {}]
  %s1 = inlined_call_operand.vmem [shape: f32[2,384], index: 1, kind: input, shape index: {}]
  %s2 = inlined_call_operand.vmem [shape: f32[1,128], index: 2, kind: input, shape index: {}]
  %s3 = inlined_call_operand.vmem [shape: s32[128,1], index: 3, kind: input, shape index: {}]
  %s4 = inlined_call_operand.vmem [shape: f32[16,1], index: 4, kind: input, shape index: {}]
  %s5 = inlined_call_operand.vmem [shape: f32[16,1], index: 5, kind: input, shape index: {}]
  %s6 = inlined_call_operand.vmem [shape: bf16[256,16], index: 6, kind: input, shape index: {}]
  %s7 = inlined_call_operand.vmem [shape: f32[256,1], index: 7, kind: input, shape index: {}]
  %s8 = inlined_call_operand.vmem [shape: bf16[256,256], index: 8, kind: input, shape index: {}]
  %s9 = inlined_call_operand.vmem [shape: f32[256,1], index: 9, kind: input, shape index: {}]
  %s10 = inlined_call_operand.vmem [shape: bf16[256,256], index: 10, kind: input, shape index: {}]
  %s11 = inlined_call_operand.vmem [shape: bf16[256,256], index: 11, kind: input, shape index: {}]
  %s12 = inlined_call_operand.vmem [shape: bf16[256,256], index: 12, kind: input, shape index: {}]
  %s13 = inlined_call_operand.vmem [shape: bf16[2,256], index: 13, kind: input, shape index: {}]
  %s14 = inlined_call_operand.vmem [shape: f32[2,1], index: 14, kind: input, shape index: {}]
  %s15 = inlined_call_operand.hbm [shape: f32[2,4], index: 15, kind: output, shape index: {}]
  %s16 = sld [smem:[#allocation0]]
  $region78: #{jet_cls_forward.1} parent=0
    _
  %s18 = ssub.s32 1, %s16
  %s19 = scalar_select 0, %s18, %s16
  $region1: #{jet_cls_forward.1} parent=0
    #allocation3 [shape = 'u8[1024]{0}', space=vmem, size = 0x400, scoped, tag = 'output window, operand 0, single buffered']
    #allocation4 [shape = 's32[1]{0}', space=sflag, size = 0x4, scoped, tag = 'scoped memory for jet_cls_forward.1']
    %20 = vsyncpa [#allocation4], 0
    // Predicated region
    $region2: #{jet_cls_forward.1} parent=1 // pred_check
      _
    $region3: #{jet_cls_forward.1} parent=1 // pred_check_branch
      %22 = sbr.rel (0) target = $region5
    $region4: #{jet_cls_forward.1} parent=1 // pred_region
      _
    $region5: #{jet_cls_forward.1} parent=1 // pred_fallthru
      _
    // Predicated region
    $region6: #{jet_cls_forward.1} parent=1 // pred_check
      _
    $region7: #{jet_cls_forward.1} parent=1 // pred_check_branch
      %24 = sbr.rel (0) target = $region9
    $region8: #{jet_cls_forward.1} parent=1 // pred_region
      _
    $region9: #{jet_cls_forward.1} parent=1 // pred_fallthru
      _
    // Predicated region
    $region10: #{jet_cls_forward.1} parent=1 // pred_check
      _
    $region11: #{jet_cls_forward.1} parent=1 // pred_check_branch
      %26 = sbr.rel (0) target = $region13
    $region12: #{jet_cls_forward.1} parent=1 // pred_region
      _
    $region13: #{jet_cls_forward.1} parent=1 // pred_fallthru
      _
    // Predicated region
    $region14: #{jet_cls_forward.1} parent=1 // pred_check
      _
    $region15: #{jet_cls_forward.1} parent=1 // pred_check_branch
      %28 = sbr.rel (0) target = $region17
    $region16: #{jet_cls_forward.1} parent=1 // pred_region
      _
    $region17: #{jet_cls_forward.1} parent=1 // pred_fallthru
      _
    // Predicated region
    $region18: #{jet_cls_forward.1} parent=1 // pred_check
      _
    $region19: #{jet_cls_forward.1} parent=1 // pred_check_branch
      %30 = sbr.rel (0) target = $region21
    $region20: #{jet_cls_forward.1} parent=1 // pred_region
      _
    $region21: #{jet_cls_forward.1} parent=1 // pred_fallthru
      _
    // Predicated region
    $region22: #{jet_cls_forward.1} parent=1 // pred_check
      _
    $region23: #{jet_cls_forward.1} parent=1 // pred_check_branch
      %32 = sbr.rel (0) target = $region25
    $region24: #{jet_cls_forward.1} parent=1 // pred_region
      _
    $region25: #{jet_cls_forward.1} parent=1 // pred_fallthru
      _
    // Predicated region
    $region26: #{jet_cls_forward.1} parent=1 // pred_check
      _
    $region27: #{jet_cls_forward.1} parent=1 // pred_check_branch
      %34 = sbr.rel (0) target = $region29
    $region28: #{jet_cls_forward.1} parent=1 // pred_region
      _
    $region29: #{jet_cls_forward.1} parent=1 // pred_fallthru
      _
    // Predicated region
    $region30: #{jet_cls_forward.1} parent=1 // pred_check
      _
    $region31: #{jet_cls_forward.1} parent=1 // pred_check_branch
      %36 = sbr.rel (0) target = $region33
    $region32: #{jet_cls_forward.1} parent=1 // pred_region
      _
    $region33: #{jet_cls_forward.1} parent=1 // pred_fallthru
      _
    // Predicated region
    $region34: #{jet_cls_forward.1} parent=1 // pred_check
      _
    $region35: #{jet_cls_forward.1} parent=1 // pred_check_branch
      %38 = sbr.rel (0) target = $region37
    $region36: #{jet_cls_forward.1} parent=1 // pred_region
      _
    $region37: #{jet_cls_forward.1} parent=1 // pred_fallthru
      _
    // Predicated region
    $region38: #{jet_cls_forward.1} parent=1 // pred_check
      _
    $region39: #{jet_cls_forward.1} parent=1 // pred_check_branch
      %40 = sbr.rel (0) target = $region41
    $region40: #{jet_cls_forward.1} parent=1 // pred_region
      _
    $region41: #{jet_cls_forward.1} parent=1 // pred_fallthru
      _
    // Predicated region
    $region42: #{jet_cls_forward.1} parent=1 // pred_check
      _
    $region43: #{jet_cls_forward.1} parent=1 // pred_check_branch
      %42 = sbr.rel (0) target = $region45
    $region44: #{jet_cls_forward.1} parent=1 // pred_region
      _
    $region45: #{jet_cls_forward.1} parent=1 // pred_fallthru
      _
    // Predicated region
    $region46: #{jet_cls_forward.1} parent=1 // pred_check
      _
    $region47: #{jet_cls_forward.1} parent=1 // pred_check_branch
      %44 = sbr.rel (0) target = $region49
    $region48: #{jet_cls_forward.1} parent=1 // pred_region
      _
    $region49: #{jet_cls_forward.1} parent=1 // pred_fallthru
      _
    // Predicated region
    $region50: #{jet_cls_forward.1} parent=1 // pred_check
      _
    $region51: #{jet_cls_forward.1} parent=1 // pred_check_branch
      %46 = sbr.rel (0) target = $region53
    $region52: #{jet_cls_forward.1} parent=1 // pred_region
      _
    $region53: #{jet_cls_forward.1} parent=1 // pred_fallthru
      _
    // Predicated region
    $region54: #{jet_cls_forward.1} parent=1 // pred_check
      _
    $region55: #{jet_cls_forward.1} parent=1 // pred_check_branch
      %48 = sbr.rel (0) target = $region57
    $region56: #{jet_cls_forward.1} parent=1 // pred_region
      _
    $region57: #{jet_cls_forward.1} parent=1 // pred_fallthru
      _
    // Predicated region
    $region58: #{jet_cls_forward.1} parent=1 // pred_check
      _
    $region59: #{jet_cls_forward.1} parent=1 // pred_check_branch
      %50 = sbr.rel (0) target = $region61
    $region60: #{jet_cls_forward.1} parent=1 // pred_region
      _
    $region61: #{jet_cls_forward.1} parent=1 // pred_fallthru
      _
    %p52 = scmp.eq.s32.totalorder 0, 0
    // Predicated region
    $region62: #{jet_cls_forward.1} parent=1 // pred_check
      %p53 = pneg %p52
    $region63: #{jet_cls_forward.1} parent=1 // pred_check_branch
      %55 = sbr.rel (%p53) target = $region65
    $region64: #{jet_cls_forward.1} parent=1 // pred_region
      %56 = vst [vmem:[#allocation2] sm:$0xff] 0.0
      %57 = vst [vmem:[#allocation2 + $0x8] sm:$0xff] 0.0
    $region65: #{jet_cls_forward.1} parent=1 // pred_fallthru
      _
    %v58 = vld [vmem:[%s1] ss:$2 sm:$0x7]
    %s59 = scalar_lea.vmem %s1, 1
    %v60 = vld [vmem:[%s59] ss:$2 sm:$0x7]
    %v61 = vmul.f32 %v58, 3.0
    %v62 = vmul.f32 %v61, %v58
    %v63 = vsub.f32 %v62, 1.0
    %v64 = vmul.f32 %v63, 0.5
    %v65 = vmul.f32 %v58, 5.0
    %v66 = vmul.f32 %v65, %v64
    %v67 = vmul.f32 %v58, 2.0
    %v68 = vsub.f32 %v66, %v67
    %v69 = vmul.f32 %v68, 0.33333334
    %v70 = vmul.f32 %v58, 7.0
    %v71 = vmul.f32 %v70, %v69
    %v72 = vmul.f32 %v64, 3.0
    %v73 = vsub.f32 %v71, %v72
    %v74 = vmul.f32 %v73, 0.25
    %v75 = vmul.f32 %v58, 9.0
    %v76 = vmul.f32 %v75, %v74
    %v77 = vmul.f32 %v69, 4.0
    %v78 = vsub.f32 %v76, %v77
    %v79 = vmul.f32 %v78, 0.2
    %v80 = vmul.f32 %v58, 11.0
    %v81 = vmul.f32 %v80, %v79
    %v82 = vmul.f32 %v74, 5.0
    %v83 = vsub.f32 %v81, %v82
    %v84 = vmul.f32 %v83, 0.16666667
    %v85 = vmul.f32 %v58, 13.0
    %v86 = vmul.f32 %v85, %v84
    %v87 = vmul.f32 %v79, 6.0
    %v88 = vsub.f32 %v86, %v87
    %v89 = vmul.f32 %v88, 0.14285715
    %v90 = vmul.f32 %v58, 15.0
    %v91 = vmul.f32 %v90, %v89
    %v92 = vmul.f32 %v84, 7.0
    %v93 = vsub.f32 %v91, %v92
    %v94 = vmul.f32 %v93, 0.125
    %v95 = vmul.f32 %v58, 17.0
    %v96 = vmul.f32 %v95, %v94
    %v97 = vmul.f32 %v89, 8.0
    %v98 = vsub.f32 %v96, %v97
    %v99 = vmul.f32 %v98, 0.11111111
    %v100 = vmul.f32 %v58, 19.0
    %v101 = vmul.f32 %v100, %v99
    %v102 = vmul.f32 %v94, 9.0
    %v103 = vsub.f32 %v101, %v102
    %v104 = vmul.f32 %v103, 0.1
    %v105 = vmul.f32 %v58, 21.0
    %v106 = vmul.f32 %v105, %v104
    %v107 = vmul.f32 %v99, 10.0
    %v108 = vsub.f32 %v106, %v107
    %v109 = vmul.f32 %v108, 0.09090909
    %v110 = vmul.f32 %v58, 23.0
    %v111 = vmul.f32 %v110, %v109
    %v112 = vmul.f32 %v104, 11.0
    %v113 = vsub.f32 %v111, %v112
    %v114 = vmul.f32 %v113, 0.083333336
    %v115 = vmul.f32 %v58, 25.0
    %v116 = vmul.f32 %v115, %v114
    %v117 = vmul.f32 %v109, 12.0
    %v118 = vsub.f32 %v116, %v117
    %v119 = vmul.f32 %v118, 0.07692308
    %v120 = vmul.f32 %v58, 27.0
    %v121 = vmul.f32 %v120, %v119
    %v122 = vmul.f32 %v114, 13.0
    %v123 = vsub.f32 %v121, %v122
    %v124 = vmul.f32 %v123, 0.071428575
    %v125 = vmul.f32 %v58, 29.0
    %v126 = vmul.f32 %v125, %v124
    %v127 = vmul.f32 %v119, 14.0
    %v128 = vsub.f32 %v126, %v127
    %v129 = vmul.f32 %v128, 0.06666667
    %v131 = vlaneseq
    %v132 = vshrl.u32 %v131, 7
    %v133 = vsub.s32 0, %v132
    %v134 = vrot.slane %v58, %v133
    %v135 = vlaneseq
    %v136 = vshrl.u32 %v135, 7
    %v137 = vsub.s32 1, %v136
    %v138 = vrot.slane %v58, %v137
    %v139 = vlaneseq
    %v140 = vshrl.u32 %v139, 7
    %v141 = vsub.s32 2, %v140
    %v142 = vrot.slane %v58, %v141
    %v147 = vlaneseq
    %v148 = vshrl.u32 %v147, 7
    %v149 = vsub.s32 0, %v148
    %v150 = vrot.slane %v64, %v149
    %v151 = vlaneseq
    %v152 = vshrl.u32 %v151, 7
    %v153 = vsub.s32 1, %v152
    %v154 = vrot.slane %v64, %v153
    %v155 = vlaneseq
    %v156 = vshrl.u32 %v155, 7
    %v157 = vsub.s32 2, %v156
    %v158 = vrot.slane %v64, %v157
    %v163 = vlaneseq
    %v164 = vshrl.u32 %v163, 7
    %v165 = vsub.s32 0, %v164
    %v166 = vrot.slane %v69, %v165
    %v167 = vlaneseq
    %v168 = vshrl.u32 %v167, 7
    %v169 = vsub.s32 1, %v168
    %v170 = vrot.slane %v69, %v169
    %v171 = vlaneseq
    %v172 = vshrl.u32 %v171, 7
    %v173 = vsub.s32 2, %v172
    %v174 = vrot.slane %v69, %v173
    %v179 = vlaneseq
    %v180 = vshrl.u32 %v179, 7
    %v181 = vsub.s32 0, %v180
    %v182 = vrot.slane %v74, %v181
    %v183 = vlaneseq
    %v184 = vshrl.u32 %v183, 7
    %v185 = vsub.s32 1, %v184
    %v186 = vrot.slane %v74, %v185
    %v187 = vlaneseq
    %v188 = vshrl.u32 %v187, 7
    %v189 = vsub.s32 2, %v188
    %v190 = vrot.slane %v74, %v189
    %v195 = vlaneseq
    %v196 = vshrl.u32 %v195, 7
    %v197 = vsub.s32 0, %v196
    %v198 = vrot.slane %v79, %v197
    %v199 = vlaneseq
    %v200 = vshrl.u32 %v199, 7
    %v201 = vsub.s32 1, %v200
    %v202 = vrot.slane %v79, %v201
    %v203 = vlaneseq
    %v204 = vshrl.u32 %v203, 7
    %v205 = vsub.s32 2, %v204
    %v206 = vrot.slane %v79, %v205
    %v211 = vlaneseq
    %v212 = vshrl.u32 %v211, 7
    %v213 = vsub.s32 0, %v212
    %v214 = vrot.slane %v84, %v213
    %v215 = vlaneseq
    %v216 = vshrl.u32 %v215, 7
    %v217 = vsub.s32 1, %v216
    %v218 = vrot.slane %v84, %v217
    %v219 = vlaneseq
    %v220 = vshrl.u32 %v219, 7
    %v221 = vsub.s32 2, %v220
    %v222 = vrot.slane %v84, %v221
    %v227 = vlaneseq
    %v228 = vshrl.u32 %v227, 7
    %v229 = vsub.s32 0, %v228
    %v230 = vrot.slane %v89, %v229
    %v231 = vlaneseq
    %v232 = vshrl.u32 %v231, 7
    %v233 = vsub.s32 1, %v232
    %v234 = vrot.slane %v89, %v233
    %v235 = vlaneseq
    %v236 = vshrl.u32 %v235, 7
    %v237 = vsub.s32 2, %v236
    %v238 = vrot.slane %v89, %v237
    %v243 = vlaneseq
    %v244 = vshrl.u32 %v243, 7
    %v245 = vsub.s32 0, %v244
    %v246 = vrot.slane %v94, %v245
    %v247 = vlaneseq
    %v248 = vshrl.u32 %v247, 7
    %v249 = vsub.s32 1, %v248
    %v250 = vrot.slane %v94, %v249
    %v251 = vlaneseq
    %v252 = vshrl.u32 %v251, 7
    %v253 = vsub.s32 2, %v252
    %v254 = vrot.slane %v94, %v253
    %v259 = vlaneseq
    %v260 = vshrl.u32 %v259, 7
    %v261 = vsub.s32 0, %v260
    %v262 = vrot.slane %v99, %v261
    %v263 = vlaneseq
    %v264 = vshrl.u32 %v263, 7
    %v265 = vsub.s32 1, %v264
    %v266 = vrot.slane %v99, %v265
    %v267 = vlaneseq
    %v268 = vshrl.u32 %v267, 7
    %v269 = vsub.s32 2, %v268
    %v270 = vrot.slane %v99, %v269
    %v275 = vlaneseq
    %v276 = vshrl.u32 %v275, 7
    %v277 = vsub.s32 0, %v276
    %v278 = vrot.slane %v104, %v277
    %v279 = vlaneseq
    %v280 = vshrl.u32 %v279, 7
    %v281 = vsub.s32 1, %v280
    %v282 = vrot.slane %v104, %v281
    %v283 = vlaneseq
    %v284 = vshrl.u32 %v283, 7
    %v285 = vsub.s32 2, %v284
    %v286 = vrot.slane %v104, %v285
    %v291 = vlaneseq
    %v292 = vshrl.u32 %v291, 7
    %v293 = vsub.s32 0, %v292
    %v294 = vrot.slane %v109, %v293
    %v295 = vlaneseq
    %v296 = vshrl.u32 %v295, 7
    %v297 = vsub.s32 1, %v296
    %v298 = vrot.slane %v109, %v297
    %v299 = vlaneseq
    %v300 = vshrl.u32 %v299, 7
    %v301 = vsub.s32 2, %v300
    %v302 = vrot.slane %v109, %v301
    %v307 = vlaneseq
    %v308 = vshrl.u32 %v307, 7
    %v309 = vsub.s32 0, %v308
    %v310 = vrot.slane %v114, %v309
    %v311 = vlaneseq
    %v312 = vshrl.u32 %v311, 7
    %v313 = vsub.s32 1, %v312
    %v314 = vrot.slane %v114, %v313
    %v315 = vlaneseq
    %v316 = vshrl.u32 %v315, 7
    %v317 = vsub.s32 2, %v316
    %v318 = vrot.slane %v114, %v317
    %v323 = vlaneseq
    %v324 = vshrl.u32 %v323, 7
    %v325 = vsub.s32 0, %v324
    %v326 = vrot.slane %v119, %v325
    %v327 = vlaneseq
    %v328 = vshrl.u32 %v327, 7
    %v329 = vsub.s32 1, %v328
    %v330 = vrot.slane %v119, %v329
    %v331 = vlaneseq
    %v332 = vshrl.u32 %v331, 7
    %v333 = vsub.s32 2, %v332
    %v334 = vrot.slane %v119, %v333
    %v339 = vlaneseq
    %v340 = vshrl.u32 %v339, 7
    %v341 = vsub.s32 0, %v340
    %v342 = vrot.slane %v124, %v341
    %v343 = vlaneseq
    %v344 = vshrl.u32 %v343, 7
    %v345 = vsub.s32 1, %v344
    %v346 = vrot.slane %v124, %v345
    %v347 = vlaneseq
    %v348 = vshrl.u32 %v347, 7
    %v349 = vsub.s32 2, %v348
    %v350 = vrot.slane %v124, %v349
    %v355 = vlaneseq
    %v356 = vshrl.u32 %v355, 7
    %v357 = vsub.s32 0, %v356
    %v358 = vrot.slane %v129, %v357
    %v359 = vlaneseq
    %v360 = vshrl.u32 %v359, 7
    %v361 = vsub.s32 1, %v360
    %v362 = vrot.slane %v129, %v361
    %v363 = vlaneseq
    %v364 = vshrl.u32 %v363, 7
    %v365 = vsub.s32 2, %v364
    %v366 = vrot.slane %v129, %v365
    %vm370 = vcmask 1040384
    %v371 = vsel %vm370, 1.0, %v134
    %v372 = vsel %vm370, 1.0, %v138
    %v373 = vsel %vm370, 1.0, %v142
    %vm374 = vcmask 1041408
    %v375 = vsel %vm374, %v371, %v150
    %v376 = vsel %vm374, %v372, %v154
    %v377 = vsel %vm374, %v373, %v158
    %vm378 = vcmask 1042432
    %v379 = vsel %vm378, %v375, %v166
    %v380 = vsel %vm378, %v376, %v170
    %v381 = vsel %vm378, %v377, %v174
    %vm382 = vcmask 1043456
    %v383 = vsel %vm382, %v379, %v182
    %v384 = vsel %vm382, %v380, %v186
    %v385 = vsel %vm382, %v381, %v190
    %vm386 = vcmask 1044480
    %v387 = vsel %vm386, %v383, %v198
    %v388 = vsel %vm386, %v384, %v202
    %v389 = vsel %vm386, %v385, %v206
    %vm390 = vcmask 1045504
    %v391 = vsel %vm390, %v387, %v214
    %v392 = vsel %vm390, %v388, %v218
    %v393 = vsel %vm390, %v389, %v222
    %vm394 = vcmask 1046528
    %v395 = vsel %vm394, %v391, %v230
    %v396 = vsel %vm394, %v392, %v234
    %v397 = vsel %vm394, %v393, %v238
    %v398 = vsel %vm370, %v246, %v262
    %v399 = vsel %vm370, %v250, %v266
    %v400 = vsel %vm370, %v254, %v270
    %v401 = vsel %vm374, %v398, %v278
    %v402 = vsel %vm374, %v399, %v282
    %v403 = vsel %vm374, %v400, %v286
    %v404 = vsel %vm378, %v401, %v294
    %v405 = vsel %vm378, %v402, %v298
    %v406 = vsel %vm378, %v403, %v302
    %v407 = vsel %vm382, %v404, %v310
    %v408 = vsel %vm382, %v405, %v314
    %v409 = vsel %vm382, %v406, %v318
    %v410 = vsel %vm386, %v407, %v326
    %v411 = vsel %vm386, %v408, %v330
    %v412 = vsel %vm386, %v409, %v334
    %v413 = vsel %vm390, %v410, %v342
    %v414 = vsel %vm390, %v411, %v346
    %v415 = vsel %vm390, %v412, %v350
    %v416 = vsel %vm394, %v413, %v358
    %v417 = vsel %vm394, %v414, %v362
    %v418 = vsel %vm394, %v415, %v366
    %v420 = vlaneseq
    %v421 = vshrl.u32 %v420, 7
    %v422 = vsub.s32 0, %v421
    %v423 = vrot.slane %v60, %v422
    %v424 = vlaneseq
    %v425 = vshrl.u32 %v424, 7
    %v426 = vsub.s32 1, %v425
    %v427 = vrot.slane %v60, %v426
    %v428 = vlaneseq
    %v429 = vshrl.u32 %v428, 7
    %v430 = vsub.s32 2, %v429
    %v431 = vrot.slane %v60, %v430
    %v435 = vmul.f32 %v395, %v423
    %v436 = vmul.f32 %v396, %v427
    %v437 = vmul.f32 %v397, %v431
    %v438 = vmul.f32 %v416, %v423
    %v439 = vmul.f32 %v417, %v427
    %v440 = vmul.f32 %v418, %v431
    %v441 = vlaneseq
    %v442 = vand.u32 %v441, 127
    %v443 = vld [vmem:[%s0] sm:$0xff]
    %v444 = vld [vmem:[%s0 + $0x8] sm:$0xff]
    %v445 = vld [vmem:[%s0 + $0x10] sm:$0xff]
    %v446 = vld [vmem:[%s0 + $0x18] sm:$0xff]
    %v447 = vld [vmem:[%s0 + $0x20] sm:$0xff]
    %v448 = vld [vmem:[%s0 + $0x28] sm:$0xff]
    %v449 = vld [vmem:[%s0 + $0x30] sm:$0xff]
    %v450 = vld [vmem:[%s0 + $0x38] sm:$0xff]
    %v451 = vld [vmem:[%s0 + $0x40] sm:$0xff]
    %v452 = vld [vmem:[%s0 + $0x48] sm:$0xff]
    %v453 = vld [vmem:[%s0 + $0x50] sm:$0xff]
    %v454 = vld [vmem:[%s0 + $0x58] sm:$0xff]
    %v455 = vld [vmem:[%s0 + $0x60] sm:$0xff]
    %v456 = vld [vmem:[%s0 + $0x68] sm:$0xff]
    %v457 = vld [vmem:[%s0 + $0x70] sm:$0xff]
    %v458 = vld [vmem:[%s0 + $0x78] sm:$0xff]
    %v459 = vld [vmem:[%s0 + $0x80] sm:$0xff]
    %v460 = vld [vmem:[%s0 + $0x88] sm:$0xff]
    %v461 = vld [vmem:[%s0 + $0x90] sm:$0xff]
    %v462 = vld [vmem:[%s0 + $0x98] sm:$0xff]
    %v463 = vld [vmem:[%s0 + $0xa0] sm:$0xff]
    %v464 = vld [vmem:[%s0 + $0xa8] sm:$0xff]
    %v465 = vld [vmem:[%s0 + $0xb0] sm:$0xff]
    %v466 = vld [vmem:[%s0 + $0xb8] sm:$0xff]
    %v467 = vld [vmem:[%s0 + $0xc0] sm:$0xff]
    %v468 = vld [vmem:[%s0 + $0xc8] sm:$0xff]
    %v469 = vld [vmem:[%s0 + $0xd0] sm:$0xff]
    %v470 = vld [vmem:[%s0 + $0xd8] sm:$0xff]
    %v471 = vld [vmem:[%s0 + $0xe0] sm:$0xff]
    %v472 = vld [vmem:[%s0 + $0xe8] sm:$0xff]
    %v473 = vld [vmem:[%s0 + $0xf0] sm:$0xff]
    %v474 = vld [vmem:[%s0 + $0xf8] sm:$0xff]
    %v475 = vld [vmem:[%s0 + $0x100] sm:$0xff]
    %v476 = vld [vmem:[%s0 + $0x108] sm:$0xff]
    %v477 = vld [vmem:[%s0 + $0x110] sm:$0xff]
    %v478 = vld [vmem:[%s0 + $0x118] sm:$0xff]
    %v479 = vld [vmem:[%s0 + $0x120] sm:$0xff]
    %v480 = vld [vmem:[%s0 + $0x128] sm:$0xff]
    %v481 = vld [vmem:[%s0 + $0x130] sm:$0xff]
    %v482 = vld [vmem:[%s0 + $0x138] sm:$0xff]
    %v483 = vld [vmem:[%s0 + $0x140] sm:$0xff]
    %v484 = vld [vmem:[%s0 + $0x148] sm:$0xff]
    %v485 = vld [vmem:[%s0 + $0x150] sm:$0xff]
    %v486 = vld [vmem:[%s0 + $0x158] sm:$0xff]
    %v487 = vld [vmem:[%s0 + $0x160] sm:$0xff]
    %v488 = vld [vmem:[%s0 + $0x168] sm:$0xff]
    %v489 = vld [vmem:[%s0 + $0x170] sm:$0xff]
    %v490 = vld [vmem:[%s0 + $0x178] sm:$0xff]
    %491 = vset.pattern.permute.xlu0 0
    %492 = vperm.xlu0 %491, %v443
    %v493 = vpop.permute.xlu0 %492
    %494 = vset.pattern.permute.xlu0 0
    %495 = vperm.xlu0 %494, %v444
    %v496 = vpop.permute.xlu0 %495
    %497 = vset.pattern.permute.xlu0 0
    %498 = vperm.xlu0 %497, %v445
    %v499 = vpop.permute.xlu0 %498
    %500 = vset.pattern.permute.xlu0 0
    %501 = vperm.xlu0 %500, %v446
    %v502 = vpop.permute.xlu0 %501
    %503 = vset.pattern.permute.xlu0 0
    %504 = vperm.xlu0 %503, %v447
    %v505 = vpop.permute.xlu0 %504
    %506 = vset.pattern.permute.xlu0 0
    %507 = vperm.xlu0 %506, %v448
    %v508 = vpop.permute.xlu0 %507
    %509 = vset.pattern.permute.xlu0 0
    %510 = vperm.xlu0 %509, %v449
    %v511 = vpop.permute.xlu0 %510
    %512 = vset.pattern.permute.xlu0 0
    %513 = vperm.xlu0 %512, %v450
    %v514 = vpop.permute.xlu0 %513
    %515 = vset.pattern.permute.xlu0 0
    %516 = vperm.xlu0 %515, %v451
    %v517 = vpop.permute.xlu0 %516
    %518 = vset.pattern.permute.xlu0 0
    %519 = vperm.xlu0 %518, %v452
    %v520 = vpop.permute.xlu0 %519
    %521 = vset.pattern.permute.xlu0 0
    %522 = vperm.xlu0 %521, %v453
    %v523 = vpop.permute.xlu0 %522
    %524 = vset.pattern.permute.xlu0 0
    %525 = vperm.xlu0 %524, %v454
    %v526 = vpop.permute.xlu0 %525
    %527 = vset.pattern.permute.xlu0 0
    %528 = vperm.xlu0 %527, %v455
    %v529 = vpop.permute.xlu0 %528
    %530 = vset.pattern.permute.xlu0 0
    %531 = vperm.xlu0 %530, %v456
    %v532 = vpop.permute.xlu0 %531
    %533 = vset.pattern.permute.xlu0 0
    %534 = vperm.xlu0 %533, %v457
    %v535 = vpop.permute.xlu0 %534
    %536 = vset.pattern.permute.xlu0 0
    %537 = vperm.xlu0 %536, %v458
    %v538 = vpop.permute.xlu0 %537
    %539 = vset.pattern.permute.xlu0 0
    %540 = vperm.xlu0 %539, %v459
    %v541 = vpop.permute.xlu0 %540
    %542 = vset.pattern.permute.xlu0 0
    %543 = vperm.xlu0 %542, %v460
    %v544 = vpop.permute.xlu0 %543
    %545 = vset.pattern.permute.xlu0 0
    %546 = vperm.xlu0 %545, %v461
    %v547 = vpop.permute.xlu0 %546
    %548 = vset.pattern.permute.xlu0 0
    %549 = vperm.xlu0 %548, %v462
    %v550 = vpop.permute.xlu0 %549
    %551 = vset.pattern.permute.xlu0 0
    %552 = vperm.xlu0 %551, %v463
    %v553 = vpop.permute.xlu0 %552
    %554 = vset.pattern.permute.xlu0 0
    %555 = vperm.xlu0 %554, %v464
    %v556 = vpop.permute.xlu0 %555
    %557 = vset.pattern.permute.xlu0 0
    %558 = vperm.xlu0 %557, %v465
    %v559 = vpop.permute.xlu0 %558
    %560 = vset.pattern.permute.xlu0 0
    %561 = vperm.xlu0 %560, %v466
    %v562 = vpop.permute.xlu0 %561
    %563 = vset.pattern.permute.xlu0 0
    %564 = vperm.xlu0 %563, %v467
    %v565 = vpop.permute.xlu0 %564
    %566 = vset.pattern.permute.xlu0 0
    %567 = vperm.xlu0 %566, %v468
    %v568 = vpop.permute.xlu0 %567
    %569 = vset.pattern.permute.xlu0 0
    %570 = vperm.xlu0 %569, %v469
    %v571 = vpop.permute.xlu0 %570
    %572 = vset.pattern.permute.xlu0 0
    %573 = vperm.xlu0 %572, %v470
    %v574 = vpop.permute.xlu0 %573
    %575 = vset.pattern.permute.xlu0 0
    %576 = vperm.xlu0 %575, %v471
    %v577 = vpop.permute.xlu0 %576
    %578 = vset.pattern.permute.xlu0 0
    %579 = vperm.xlu0 %578, %v472
    %v580 = vpop.permute.xlu0 %579
    %581 = vset.pattern.permute.xlu0 0
    %582 = vperm.xlu0 %581, %v473
    %v583 = vpop.permute.xlu0 %582
    %584 = vset.pattern.permute.xlu0 0
    %585 = vperm.xlu0 %584, %v474
    %v586 = vpop.permute.xlu0 %585
    %587 = vset.pattern.permute.xlu0 0
    %588 = vperm.xlu0 %587, %v475
    %v589 = vpop.permute.xlu0 %588
    %590 = vset.pattern.permute.xlu0 0
    %591 = vperm.xlu0 %590, %v476
    %v592 = vpop.permute.xlu0 %591
    %593 = vset.pattern.permute.xlu0 0
    %594 = vperm.xlu0 %593, %v477
    %v595 = vpop.permute.xlu0 %594
    %596 = vset.pattern.permute.xlu0 0
    %597 = vperm.xlu0 %596, %v478
    %v598 = vpop.permute.xlu0 %597
    %599 = vset.pattern.permute.xlu0 0
    %600 = vperm.xlu0 %599, %v479
    %v601 = vpop.permute.xlu0 %600
    %602 = vset.pattern.permute.xlu0 0
    %603 = vperm.xlu0 %602, %v480
    %v604 = vpop.permute.xlu0 %603
    %605 = vset.pattern.permute.xlu0 0
    %606 = vperm.xlu0 %605, %v481
    %v607 = vpop.permute.xlu0 %606
    %608 = vset.pattern.permute.xlu0 0
    %609 = vperm.xlu0 %608, %v482
    %v610 = vpop.permute.xlu0 %609
    %611 = vset.pattern.permute.xlu0 0
    %612 = vperm.xlu0 %611, %v483
    %v613 = vpop.permute.xlu0 %612
    %614 = vset.pattern.permute.xlu0 0
    %615 = vperm.xlu0 %614, %v484
    %v616 = vpop.permute.xlu0 %615
    %617 = vset.pattern.permute.xlu0 0
    %618 = vperm.xlu0 %617, %v485
    %v619 = vpop.permute.xlu0 %618
    %620 = vset.pattern.permute.xlu0 0
    %621 = vperm.xlu0 %620, %v486
    %v622 = vpop.permute.xlu0 %621
    %623 = vset.pattern.permute.xlu0 0
    %624 = vperm.xlu0 %623, %v487
    %v625 = vpop.permute.xlu0 %624
    %626 = vset.pattern.permute.xlu0 0
    %627 = vperm.xlu0 %626, %v488
    %v628 = vpop.permute.xlu0 %627
    %629 = vset.pattern.permute.xlu0 0
    %630 = vperm.xlu0 %629, %v489
    %v631 = vpop.permute.xlu0 %630
    %632 = vset.pattern.permute.xlu0 0
    %633 = vperm.xlu0 %632, %v490
    %v634 = vpop.permute.xlu0 %633
    %vm635 = vcmp.eq.s32.totalorder %v442, %v493
    %vm636 = vcmp.eq.s32.totalorder %v442, %v496
    %vm637 = vcmp.eq.s32.totalorder %v442, %v499
    %vm638 = vcmp.eq.s32.totalorder %v442, %v502
    %vm639 = vcmp.eq.s32.totalorder %v442, %v505
    %vm640 = vcmp.eq.s32.totalorder %v442, %v508
    %vm641 = vcmp.eq.s32.totalorder %v442, %v511
    %vm642 = vcmp.eq.s32.totalorder %v442, %v514
    %vm643 = vcmp.eq.s32.totalorder %v442, %v517
    %vm644 = vcmp.eq.s32.totalorder %v442, %v520
    %vm645 = vcmp.eq.s32.totalorder %v442, %v523
    %vm646 = vcmp.eq.s32.totalorder %v442, %v526
    %vm647 = vcmp.eq.s32.totalorder %v442, %v529
    %vm648 = vcmp.eq.s32.totalorder %v442, %v532
    %vm649 = vcmp.eq.s32.totalorder %v442, %v535
    %vm650 = vcmp.eq.s32.totalorder %v442, %v538
    %vm651 = vcmp.eq.s32.totalorder %v442, %v541
    %vm652 = vcmp.eq.s32.totalorder %v442, %v544
    %vm653 = vcmp.eq.s32.totalorder %v442, %v547
    %vm654 = vcmp.eq.s32.totalorder %v442, %v550
    %vm655 = vcmp.eq.s32.totalorder %v442, %v553
    %vm656 = vcmp.eq.s32.totalorder %v442, %v556
    %vm657 = vcmp.eq.s32.totalorder %v442, %v559
    %vm658 = vcmp.eq.s32.totalorder %v442, %v562
    %vm659 = vcmp.eq.s32.totalorder %v442, %v565
    %vm660 = vcmp.eq.s32.totalorder %v442, %v568
    %vm661 = vcmp.eq.s32.totalorder %v442, %v571
    %vm662 = vcmp.eq.s32.totalorder %v442, %v574
    %vm663 = vcmp.eq.s32.totalorder %v442, %v577
    %vm664 = vcmp.eq.s32.totalorder %v442, %v580
    %vm665 = vcmp.eq.s32.totalorder %v442, %v583
    %vm666 = vcmp.eq.s32.totalorder %v442, %v586
    %vm667 = vcmp.eq.s32.totalorder %v442, %v589
    %vm668 = vcmp.eq.s32.totalorder %v442, %v592
    %vm669 = vcmp.eq.s32.totalorder %v442, %v595
    %vm670 = vcmp.eq.s32.totalorder %v442, %v598
    %vm671 = vcmp.eq.s32.totalorder %v442, %v601
    %vm672 = vcmp.eq.s32.totalorder %v442, %v604
    %vm673 = vcmp.eq.s32.totalorder %v442, %v607
    %vm674 = vcmp.eq.s32.totalorder %v442, %v610
    %vm675 = vcmp.eq.s32.totalorder %v442, %v613
    %vm676 = vcmp.eq.s32.totalorder %v442, %v616
    %vm677 = vcmp.eq.s32.totalorder %v442, %v619
    %vm678 = vcmp.eq.s32.totalorder %v442, %v622
    %vm679 = vcmp.eq.s32.totalorder %v442, %v625
    %vm680 = vcmp.eq.s32.totalorder %v442, %v628
    %vm681 = vcmp.eq.s32.totalorder %v442, %v631
    %vm682 = vcmp.eq.s32.totalorder %v442, %v634
    %v683 = vsel %vm635, 1, 0
    %v684 = vsel %vm636, 1, 0
    %v685 = vsel %vm637, 1, 0
    %v686 = vsel %vm638, 1, 0
    %v687 = vsel %vm639, 1, 0
    %v688 = vsel %vm640, 1, 0
    %v689 = vsel %vm641, 1, 0
    %v690 = vsel %vm642, 1, 0
    %v691 = vsel %vm643, 1, 0
    %v692 = vsel %vm644, 1, 0
    %v693 = vsel %vm645, 1, 0
    %v694 = vsel %vm646, 1, 0
    %v695 = vsel %vm647, 1, 0
    %v696 = vsel %vm648, 1, 0
    %v697 = vsel %vm649, 1, 0
    %v698 = vsel %vm650, 1, 0
    %v699 = vsel %vm651, 1, 0
    %v700 = vsel %vm652, 1, 0
    %v701 = vsel %vm653, 1, 0
    %v702 = vsel %vm654, 1, 0
    %v703 = vsel %vm655, 1, 0
    %v704 = vsel %vm656, 1, 0
    %v705 = vsel %vm657, 1, 0
    %v706 = vsel %vm658, 1, 0
    %v707 = vsel %vm659, 1, 0
    %v708 = vsel %vm660, 1, 0
    %v709 = vsel %vm661, 1, 0
    %v710 = vsel %vm662, 1, 0
    %v711 = vsel %vm663, 1, 0
    %v712 = vsel %vm664, 1, 0
    %v713 = vsel %vm665, 1, 0
    %v714 = vsel %vm666, 1, 0
    %v715 = vsel %vm667, 1, 0
    %v716 = vsel %vm668, 1, 0
    %v717 = vsel %vm669, 1, 0
    %v718 = vsel %vm670, 1, 0
    %v719 = vsel %vm671, 1, 0
    %v720 = vsel %vm672, 1, 0
    %v721 = vsel %vm673, 1, 0
    %v722 = vsel %vm674, 1, 0
    %v723 = vsel %vm675, 1, 0
    %v724 = vsel %vm676, 1, 0
    %v725 = vsel %vm677, 1, 0
    %v726 = vsel %vm678, 1, 0
    %v727 = vsel %vm679, 1, 0
    %v728 = vsel %vm680, 1, 0
    %v729 = vsel %vm681, 1, 0
    %v730 = vsel %vm682, 1, 0
    %v731 = vcvt.s32.f32 %v683
    %v732 = vcvt.s32.f32 %v684
    %v733 = vcvt.s32.f32 %v685
    %v734 = vcvt.s32.f32 %v686
    %v735 = vcvt.s32.f32 %v687
    %v736 = vcvt.s32.f32 %v688
    %v737 = vcvt.s32.f32 %v689
    %v738 = vcvt.s32.f32 %v690
    %v739 = vcvt.s32.f32 %v691
    %v740 = vcvt.s32.f32 %v692
    %v741 = vcvt.s32.f32 %v693
    %v742 = vcvt.s32.f32 %v694
    %v743 = vcvt.s32.f32 %v695
    %v744 = vcvt.s32.f32 %v696
    %v745 = vcvt.s32.f32 %v697
    %v746 = vcvt.s32.f32 %v698
    %v747 = vcvt.s32.f32 %v699
    %v748 = vcvt.s32.f32 %v700
    %v749 = vcvt.s32.f32 %v701
    %v750 = vcvt.s32.f32 %v702
    %v751 = vcvt.s32.f32 %v703
    %v752 = vcvt.s32.f32 %v704
    %v753 = vcvt.s32.f32 %v705
    %v754 = vcvt.s32.f32 %v706
    %v755 = vcvt.s32.f32 %v707
    %v756 = vcvt.s32.f32 %v708
    %v757 = vcvt.s32.f32 %v709
    %v758 = vcvt.s32.f32 %v710
    %v759 = vcvt.s32.f32 %v711
    %v760 = vcvt.s32.f32 %v712
    %v761 = vcvt.s32.f32 %v713
    %v762 = vcvt.s32.f32 %v714
    %v763 = vcvt.s32.f32 %v715
    %v764 = vcvt.s32.f32 %v716
    %v765 = vcvt.s32.f32 %v717
    %v766 = vcvt.s32.f32 %v718
    %v767 = vcvt.s32.f32 %v719
    %v768 = vcvt.s32.f32 %v720
    %v769 = vcvt.s32.f32 %v721
    %v770 = vcvt.s32.f32 %v722
    %v771 = vcvt.s32.f32 %v723
    %v772 = vcvt.s32.f32 %v724
    %v773 = vcvt.s32.f32 %v725
    %v774 = vcvt.s32.f32 %v726
    %v775 = vcvt.s32.f32 %v727
    %v776 = vcvt.s32.f32 %v728
    %v777 = vcvt.s32.f32 %v729
    %v778 = vcvt.s32.f32 %v730
    %v779 = vld [vmem:[#allocation2] sm:$0xff]
    %v780 = vld [vmem:[#allocation2 + $0x8] sm:$0xff]
    %781 = vmatprep.subr.mxu0 0.0
    %782 = vmatpush1.msra.mxu0 %v746
    %783 = vmatprep.subr.mxu0 0.0
    %784 = vmatpush1.msra.mxu0 %v745
    %785 = vmatprep.subr.mxu0 0.0
    %786 = vmatpush1.msra.mxu0 %v744
    %787 = vmatprep.subr.mxu0 0.0
    %788 = vmatpush1.msra.mxu0 %v743
    %789 = vmatprep.subr.mxu0 0.0
    %790 = vmatpush1.msra.mxu0 %v742
    %791 = vmatprep.subr.mxu0 0.0
    %792 = vmatpush1.msra.mxu0 %v741
    %793 = vmatprep.subr.mxu0 0.0
    %794 = vmatpush1.msra.mxu0 %v740
    %795 = vmatprep.subr.mxu0 0.0
    %796 = vmatpush1.msra.mxu0 %v739
    %797 = vmatprep.subr.mxu0 0.0
    %798 = vmatpush1.msra.mxu0 %v738
    %799 = vmatprep.subr.mxu0 0.0
    %800 = vmatpush1.msra.mxu0 %v737
    %801 = vmatprep.subr.mxu0 0.0
    %802 = vmatpush1.msra.mxu0 %v736
    %803 = vmatprep.subr.mxu0 0.0
    %804 = vmatpush1.msra.mxu0 %v735
    %805 = vmatprep.subr.mxu0 0.0
    %806 = vmatpush1.msra.mxu0 %v734
    %807 = vmatprep.subr.mxu0 0.0
    %808 = vmatpush1.msra.mxu0 %v733
    %809 = vmatprep.subr.mxu0 0.0
    %810 = vmatpush1.msra.mxu0 %v732
    %811 = vmatprep.subr.mxu0 0.0
    %812 = vmatpush1.msra.mxu0 %v731
    %813 = vmatprep.subr.mxu0 0.0
    %814 = vmatpush2.msra.mxu0 %v762
    %815 = vmatprep.subr.mxu0 0.0
    %816 = vmatpush2.msra.mxu0 %v761
    %817 = vmatprep.subr.mxu0 0.0
    %818 = vmatpush2.msra.mxu0 %v760
    %819 = vmatprep.subr.mxu0 0.0
    %820 = vmatpush2.msra.mxu0 %v759
    %821 = vmatprep.subr.mxu0 0.0
    %822 = vmatpush2.msra.mxu0 %v758
    %823 = vmatprep.subr.mxu0 0.0
    %824 = vmatpush2.msra.mxu0 %v757
    %825 = vmatprep.subr.mxu0 0.0
    %826 = vmatpush2.msra.mxu0 %v756
    %827 = vmatprep.subr.mxu0 0.0
    %828 = vmatpush2.msra.mxu0 %v755
    %829 = vmatprep.subr.mxu0 0.0
    %830 = vmatpush2.msra.mxu0 %v754
    %831 = vmatprep.subr.mxu0 0.0
    %832 = vmatpush2.msra.mxu0 %v753
    %833 = vmatprep.subr.mxu0 0.0
    %834 = vmatpush2.msra.mxu0 %v752
    %835 = vmatprep.subr.mxu0 0.0
    %836 = vmatpush2.msra.mxu0 %v751
    %837 = vmatprep.subr.mxu0 0.0
    %838 = vmatpush2.msra.mxu0 %v750
    %839 = vmatprep.subr.mxu0 0.0
    %840 = vmatpush2.msra.mxu0 %v749
    %841 = vmatprep.subr.mxu0 0.0
    %842 = vmatpush2.msra.mxu0 %v748
    %843 = vmatprep.subr.mxu0 0.0
    %844 = vmatpush2.msra.mxu0 %v747
    %845 = vmatprep.mubr.f32.mxu0 %v436
    %846 = vmatmul.mubr.f32.gmra.mxu0 %v435
    %v847 = vpop.f32.mrf.mxu0
    %v848 = vadd.f32 0.0, %v847
    %v849 = vpop.f32.mrf.mxu0
    %850 = vmatprep.mubr.f32.mxu0 %v439
    %851 = vmatmul.mubr.f32.gmra.mxu0 %v438
    %v852 = vpop.f32.mrf.mxu0
    %v853 = vadd.f32 0.0, %v852
    %v854 = vpop.f32.mrf.mxu0
    %855 = vdwg.mxu0
    %856 = vmatprep.subr.mxu0 0.0
    %857 = vmatpush1.msra.mxu0 %v778
    %858 = vmatprep.subr.mxu0 0.0
    %859 = vmatpush1.msra.mxu0 %v777
    %860 = vmatprep.subr.mxu0 0.0
    %861 = vmatpush1.msra.mxu0 %v776
    %862 = vmatprep.subr.mxu0 0.0
    %863 = vmatpush1.msra.mxu0 %v775
    %864 = vmatprep.subr.mxu0 0.0
    %865 = vmatpush1.msra.mxu0 %v774
    %866 = vmatprep.subr.mxu0 0.0
    %867 = vmatpush1.msra.mxu0 %v773
    %868 = vmatprep.subr.mxu0 0.0
    %869 = vmatpush1.msra.mxu0 %v772
    %870 = vmatprep.subr.mxu0 0.0
    %871 = vmatpush1.msra.mxu0 %v771
    %872 = vmatprep.subr.mxu0 0.0
    %873 = vmatpush1.msra.mxu0 %v770
    %874 = vmatprep.subr.mxu0 0.0
    %875 = vmatpush1.msra.mxu0 %v769
    %876 = vmatprep.subr.mxu0 0.0
    %877 = vmatpush1.msra.mxu0 %v768
    %878 = vmatprep.subr.mxu0 0.0
    %879 = vmatpush1.msra.mxu0 %v767
    %880 = vmatprep.subr.mxu0 0.0
    %881 = vmatpush1.msra.mxu0 %v766
    %882 = vmatprep.subr.mxu0 0.0
    %883 = vmatpush1.msra.mxu0 %v765
    %884 = vmatprep.subr.mxu0 0.0
    %885 = vmatpush1.msra.mxu0 %v764
    %886 = vmatprep.subr.mxu0 0.0
    %887 = vmatpush1.msra.mxu0 %v763
    %888 = vmatprep.subr.mxu0 0.0
    %889 = vmatpush2.msra.mxu0 0.0
    %890 = vmatprep.subr.mxu0 0.0
    %891 = vmatpush2.msra.mxu0 0.0
    %892 = vmatprep.subr.mxu0 0.0
    %893 = vmatpush2.msra.mxu0 0.0
    %894 = vmatprep.subr.mxu0 0.0
    %895 = vmatpush2.msra.mxu0 0.0
    %896 = vmatprep.subr.mxu0 0.0
    %897 = vmatpush2.msra.mxu0 0.0
    %898 = vmatprep.subr.mxu0 0.0
    %899 = vmatpush2.msra.mxu0 0.0
    %900 = vmatprep.subr.mxu0 0.0
    %901 = vmatpush2.msra.mxu0 0.0
    %902 = vmatprep.subr.mxu0 0.0
    %903 = vmatpush2.msra.mxu0 0.0
    %904 = vmatprep.subr.mxu0 0.0
    %905 = vmatpush2.msra.mxu0 0.0
    %906 = vmatprep.subr.mxu0 0.0
    %907 = vmatpush2.msra.mxu0 0.0
    %908 = vmatprep.subr.mxu0 0.0
    %909 = vmatpush2.msra.mxu0 0.0
    %910 = vmatprep.subr.mxu0 0.0
    %911 = vmatpush2.msra.mxu0 0.0
    %912 = vmatprep.subr.mxu0 0.0
    %913 = vmatpush2.msra.mxu0 0.0
    %914 = vmatprep.subr.mxu0 0.0
    %915 = vmatpush2.msra.mxu0 0.0
    %916 = vmatprep.subr.mxu0 0.0
    %917 = vmatpush2.msra.mxu0 0.0
    %918 = vmatprep.subr.mxu0 0.0
    %919 = vmatpush2.msra.mxu0 0.0
    %920 = vmatprep.mubr.f32.mxu0 0.0
    %921 = vmatmul.mubr.f32.gmra.mxu0 %v437
    %v922 = vpop.f32.mrf.mxu0
    %v923 = vadd.f32 %v848, %v922
    %v924 = vpop.f32.mrf.mxu0
    %925 = vmatprep.mubr.f32.mxu0 0.0
    %926 = vmatmul.mubr.f32.gmra.mxu0 %v440
    %v927 = vpop.f32.mrf.mxu0
    %v928 = vadd.f32 %v853, %v927
    %v929 = vpop.f32.mrf.mxu0
    %930 = vdwg.mxu0
    %v931 = vadd.f32 %v779, %v923
    %v932 = vadd.f32 %v780, %v928
    %933 = vst [vmem:[#allocation2] sm:$0xff] %v931
    %934 = vst [vmem:[#allocation2 + $0x8] sm:$0xff] %v932
    // Predicated region
    $region66: #{jet_cls_forward.1} parent=1 // pred_check
      %p935 = pneg %p52
    $region67: #{jet_cls_forward.1} parent=1 // pred_check_branch
      %937 = sbr.rel (%p935) target = $region69
    $region68: #{jet_cls_forward.1} parent=1 // pred_region
      %v938 = vld [vmem:[#allocation2] sm:$0xff]
      %v939 = vld [vmem:[#allocation2 + $0x8] sm:$0xff]
      %v940 = vld [vmem:[%s4] sm:$0xff]
      %v941 = vld [vmem:[%s4 + $0x8] sm:$0xff]
      %943 = vset.pattern.permute.xlu0 0
      %944 = vperm.xlu0 %943, %v940
      %v945 = vpop.permute.xlu0 %944
      %948 = vset.pattern.permute.xlu0 0
      %949 = vperm.xlu0 %948, %v941
      %v950 = vpop.permute.xlu0 %949
      %v952 = vmul.f32 %v938, %v945
      %v953 = vmul.f32 %v939, %v950
      %v954 = vld [vmem:[%s5] sm:$0xff]
      %v955 = vld [vmem:[%s5 + $0x8] sm:$0xff]
      %957 = vset.pattern.permute.xlu0 0
      %958 = vperm.xlu0 %957, %v954
      %v959 = vpop.permute.xlu0 %958
      %962 = vset.pattern.permute.xlu0 0
      %963 = vperm.xlu0 %962, %v955
      %v964 = vpop.permute.xlu0 %963
      %v966 = vadd.f32 %v952, %v959
      %v967 = vadd.f32 %v953, %v964
      %v968 = vmax.f32 %v966, 0.0
      %v969 = vmax.f32 %v967, 0.0
      %v970 = vld [vmem:[%s6] sm:$0xf]
      %v971 = vld [vmem:[%s6 + $0x4] sm:$0xf]
      %v972 = vld [vmem:[%s6 + $0x8] sm:$0xf]
      %v973 = vld [vmem:[%s6 + $0xc] sm:$0xf]
      %v974 = vld [vmem:[%s6 + $0x10] sm:$0xf]
      %v975 = vld [vmem:[%s6 + $0x14] sm:$0xf]
      %v976 = vld [vmem:[%s6 + $0x18] sm:$0xf]
      %v977 = vld [vmem:[%s6 + $0x1c] sm:$0xf]
      %v978 = vld [vmem:[%s6 + $0x20] sm:$0xf]
      %v979 = vld [vmem:[%s6 + $0x24] sm:$0xf]
      %v980 = vld [vmem:[%s6 + $0x28] sm:$0xf]
      %v981 = vld [vmem:[%s6 + $0x2c] sm:$0xf]
      %v982 = vld [vmem:[%s6 + $0x30] sm:$0xf]
      %v983 = vld [vmem:[%s6 + $0x34] sm:$0xf]
      %v984 = vld [vmem:[%s6 + $0x38] sm:$0xf]
      %v985 = vld [vmem:[%s6 + $0x3c] sm:$0xf]
      %v986 = vld [vmem:[%s6 + $0x40] sm:$0xf]
      %v987 = vld [vmem:[%s6 + $0x44] sm:$0xf]
      %v988 = vld [vmem:[%s6 + $0x48] sm:$0xf]
      %v989 = vld [vmem:[%s6 + $0x4c] sm:$0xf]
      %v990 = vld [vmem:[%s6 + $0x50] sm:$0xf]
      %v991 = vld [vmem:[%s6 + $0x54] sm:$0xf]
      %v992 = vld [vmem:[%s6 + $0x58] sm:$0xf]
      %v993 = vld [vmem:[%s6 + $0x5c] sm:$0xf]
      %v994 = vld [vmem:[%s6 + $0x60] sm:$0xf]
      %v995 = vld [vmem:[%s6 + $0x64] sm:$0xf]
      %v996 = vld [vmem:[%s6 + $0x68] sm:$0xf]
      %v997 = vld [vmem:[%s6 + $0x6c] sm:$0xf]
      %v998 = vld [vmem:[%s6 + $0x70] sm:$0xf]
      %v999 = vld [vmem:[%s6 + $0x74] sm:$0xf]
      %v1000 = vld [vmem:[%s6 + $0x78] sm:$0xf]
      %v1001 = vld [vmem:[%s6 + $0x7c] sm:$0xf]
      %v1002 = vpack.c.bf16 %v969, %v968
      %v1003 = vld [vmem:[%s7] sm:$0xff]
      %v1004 = vld [vmem:[%s7 + $0x8] sm:$0xff]
      %v1005 = vld [vmem:[%s7 + $0x10] sm:$0xff]
      %v1006 = vld [vmem:[%s7 + $0x18] sm:$0xff]
      %v1007 = vld [vmem:[%s7 + $0x20] sm:$0xff]
      %v1008 = vld [vmem:[%s7 + $0x28] sm:$0xff]
      %v1009 = vld [vmem:[%s7 + $0x30] sm:$0xff]
      %v1010 = vld [vmem:[%s7 + $0x38] sm:$0xff]
      %v1011 = vld [vmem:[%s7 + $0x40] sm:$0xff]
      %v1012 = vld [vmem:[%s7 + $0x48] sm:$0xff]
      %v1013 = vld [vmem:[%s7 + $0x50] sm:$0xff]
      %v1014 = vld [vmem:[%s7 + $0x58] sm:$0xff]
      %v1015 = vld [vmem:[%s7 + $0x60] sm:$0xff]
      %v1016 = vld [vmem:[%s7 + $0x68] sm:$0xff]
      %v1017 = vld [vmem:[%s7 + $0x70] sm:$0xff]
      %v1018 = vld [vmem:[%s7 + $0x78] sm:$0xff]
      %v1019 = vld [vmem:[%s7 + $0x80] sm:$0xff]
      %v1020 = vld [vmem:[%s7 + $0x88] sm:$0xff]
      %v1021 = vld [vmem:[%s7 + $0x90] sm:$0xff]
      %v1022 = vld [vmem:[%s7 + $0x98] sm:$0xff]
      %v1023 = vld [vmem:[%s7 + $0xa0] sm:$0xff]
      %v1024 = vld [vmem:[%s7 + $0xa8] sm:$0xff]
      %v1025 = vld [vmem:[%s7 + $0xb0] sm:$0xff]
      %v1026 = vld [vmem:[%s7 + $0xb8] sm:$0xff]
      %v1027 = vld [vmem:[%s7 + $0xc0] sm:$0xff]
      %v1028 = vld [vmem:[%s7 + $0xc8] sm:$0xff]
      %v1029 = vld [vmem:[%s7 + $0xd0] sm:$0xff]
      %v1030 = vld [vmem:[%s7 + $0xd8] sm:$0xff]
      %v1031 = vld [vmem:[%s7 + $0xe0] sm:$0xff]
      %v1032 = vld [vmem:[%s7 + $0xe8] sm:$0xff]
      %v1033 = vld [vmem:[%s7 + $0xf0] sm:$0xff]
      %v1034 = vld [vmem:[%s7 + $0xf8] sm:$0xff]
      %1036 = vset.pattern.permute.xlu0 0
      %1037 = vperm.xlu0 %1036, %v1003
      %v1038 = vpop.permute.xlu0 %1037
      %1041 = vset.pattern.permute.xlu0 0
      %1042 = vperm.xlu0 %1041, %v1004
      %v1043 = vpop.permute.xlu0 %1042
      %1046 = vset.pattern.permute.xlu0 0
      %1047 = vperm.xlu0 %1046, %v1005
      %v1048 = vpop.permute.xlu0 %1047
      %1051 = vset.pattern.permute.xlu0 0
      %1052 = vperm.xlu0 %1051, %v1006
      %v1053 = vpop.permute.xlu0 %1052
      %1056 = vset.pattern.permute.xlu0 0
      %1057 = vperm.xlu0 %1056, %v1007
      %v1058 = vpop.permute.xlu0 %1057
      %1061 = vset.pattern.permute.xlu0 0
      %1062 = vperm.xlu0 %1061, %v1008
      %v1063 = vpop.permute.xlu0 %1062
      %1066 = vset.pattern.permute.xlu0 0
      %1067 = vperm.xlu0 %1066, %v1009
      %v1068 = vpop.permute.xlu0 %1067
      %1071 = vset.pattern.permute.xlu0 0
      %1072 = vperm.xlu0 %1071, %v1010
      %v1073 = vpop.permute.xlu0 %1072
      %1076 = vset.pattern.permute.xlu0 0
      %1077 = vperm.xlu0 %1076, %v1011
      %v1078 = vpop.permute.xlu0 %1077
      %1081 = vset.pattern.permute.xlu0 0
      %1082 = vperm.xlu0 %1081, %v1012
      %v1083 = vpop.permute.xlu0 %1082
      %1086 = vset.pattern.permute.xlu0 0
      %1087 = vperm.xlu0 %1086, %v1013
      %v1088 = vpop.permute.xlu0 %1087
      %1091 = vset.pattern.permute.xlu0 0
      %1092 = vperm.xlu0 %1091, %v1014
      %v1093 = vpop.permute.xlu0 %1092
      %1096 = vset.pattern.permute.xlu0 0
      %1097 = vperm.xlu0 %1096, %v1015
      %v1098 = vpop.permute.xlu0 %1097
      %1101 = vset.pattern.permute.xlu0 0
      %1102 = vperm.xlu0 %1101, %v1016
      %v1103 = vpop.permute.xlu0 %1102
      %1106 = vset.pattern.permute.xlu0 0
      %1107 = vperm.xlu0 %1106, %v1017
      %v1108 = vpop.permute.xlu0 %1107
      %1111 = vset.pattern.permute.xlu0 0
      %1112 = vperm.xlu0 %1111, %v1018
      %v1113 = vpop.permute.xlu0 %1112
      %1116 = vset.pattern.permute.xlu0 0
      %1117 = vperm.xlu0 %1116, %v1019
      %v1118 = vpop.permute.xlu0 %1117
      %1121 = vset.pattern.permute.xlu0 0
      %1122 = vperm.xlu0 %1121, %v1020
      %v1123 = vpop.permute.xlu0 %1122
      %1126 = vset.pattern.permute.xlu0 0
      %1127 = vperm.xlu0 %1126, %v1021
      %v1128 = vpop.permute.xlu0 %1127
      %1131 = vset.pattern.permute.xlu0 0
      %1132 = vperm.xlu0 %1131, %v1022
      %v1133 = vpop.permute.xlu0 %1132
      %1136 = vset.pattern.permute.xlu0 0
      %1137 = vperm.xlu0 %1136, %v1023
      %v1138 = vpop.permute.xlu0 %1137
      %1141 = vset.pattern.permute.xlu0 0
      %1142 = vperm.xlu0 %1141, %v1024
      %v1143 = vpop.permute.xlu0 %1142
      %1146 = vset.pattern.permute.xlu0 0
      %1147 = vperm.xlu0 %1146, %v1025
      %v1148 = vpop.permute.xlu0 %1147
      %1151 = vset.pattern.permute.xlu0 0
      %1152 = vperm.xlu0 %1151, %v1026
      %v1153 = vpop.permute.xlu0 %1152
      %1156 = vset.pattern.permute.xlu0 0
      %1157 = vperm.xlu0 %1156, %v1027
      %v1158 = vpop.permute.xlu0 %1157
      %1161 = vset.pattern.permute.xlu0 0
      %1162 = vperm.xlu0 %1161, %v1028
      %v1163 = vpop.permute.xlu0 %1162
      %1166 = vset.pattern.permute.xlu0 0
      %1167 = vperm.xlu0 %1166, %v1029
      %v1168 = vpop.permute.xlu0 %1167
      %1171 = vset.pattern.permute.xlu0 0
      %1172 = vperm.xlu0 %1171, %v1030
      %v1173 = vpop.permute.xlu0 %1172
      %1176 = vset.pattern.permute.xlu0 0
      %1177 = vperm.xlu0 %1176, %v1031
      %v1178 = vpop.permute.xlu0 %1177
      %1181 = vset.pattern.permute.xlu0 0
      %1182 = vperm.xlu0 %1181, %v1032
      %v1183 = vpop.permute.xlu0 %1182
      %1186 = vset.pattern.permute.xlu0 0
      %1187 = vperm.xlu0 %1186, %v1033
      %v1188 = vpop.permute.xlu0 %1187
      %1191 = vset.pattern.permute.xlu0 0
      %1192 = vperm.xlu0 %1191, %v1034
      %v1193 = vpop.permute.xlu0 %1192
      %v1227 = vunpack.c.l.b16 %v970
      %v1228 = vunpack.c.l.b16 %v971
      %v1229 = vunpack.c.l.b16 %v972
      %v1230 = vunpack.c.l.b16 %v973
      %v1231 = vunpack.c.l.b16 %v974
      %v1232 = vunpack.c.l.b16 %v975
      %v1233 = vunpack.c.l.b16 %v976
      %v1234 = vunpack.c.l.b16 %v977
      %v1235 = vunpack.c.l.b16 %v978
      %v1236 = vunpack.c.l.b16 %v979
      %v1237 = vunpack.c.l.b16 %v980
      %v1238 = vunpack.c.l.b16 %v981
      %v1239 = vunpack.c.l.b16 %v982
      %v1240 = vunpack.c.l.b16 %v983
      %v1241 = vunpack.c.l.b16 %v984
      %v1242 = vunpack.c.l.b16 %v985
      %v1243 = vunpack.c.l.b16 %v986
      %v1244 = vunpack.c.l.b16 %v987
      %v1245 = vunpack.c.l.b16 %v988
      %v1246 = vunpack.c.l.b16 %v989
      %v1247 = vunpack.c.l.b16 %v990
      %v1248 = vunpack.c.l.b16 %v991
      %v1249 = vunpack.c.l.b16 %v992
      %v1250 = vunpack.c.l.b16 %v993
      %v1251 = vunpack.c.l.b16 %v994
      %v1252 = vunpack.c.l.b16 %v995
      %v1253 = vunpack.c.l.b16 %v996
      %v1254 = vunpack.c.l.b16 %v997
      %v1255 = vunpack.c.l.b16 %v998
      %v1256 = vunpack.c.l.b16 %v999
      %v1257 = vunpack.c.l.b16 %v1000
      %v1258 = vunpack.c.l.b16 %v1001
      %v1259 = vpack.c.b16 %v1228, %v1227
      %v1260 = vpack.c.b16 %v1230, %v1229
      %v1261 = vpack.c.b16 %v1232, %v1231
      %v1262 = vpack.c.b16 %v1234, %v1233
      %v1263 = vpack.c.b16 %v1236, %v1235
      %v1264 = vpack.c.b16 %v1238, %v1237
      %v1265 = vpack.c.b16 %v1240, %v1239
      %v1266 = vpack.c.b16 %v1242, %v1241
      %v1267 = vpack.c.b16 %v1244, %v1243
      %v1268 = vpack.c.b16 %v1246, %v1245
      %v1269 = vpack.c.b16 %v1248, %v1247
      %v1270 = vpack.c.b16 %v1250, %v1249
      %v1271 = vpack.c.b16 %v1252, %v1251
      %v1272 = vpack.c.b16 %v1254, %v1253
      %v1273 = vpack.c.b16 %v1256, %v1255
      %v1274 = vpack.c.b16 %v1258, %v1257
      %vm1275 = vcmask 130048
      %v1277 = vsel %vm1275, %v1259, 0
      %v1280 = vsel %vm1275, %v1260, 0
      %v1283 = vsel %vm1275, %v1261, 0
      %v1286 = vsel %vm1275, %v1262, 0
      %v1289 = vsel %vm1275, %v1263, 0
      %v1292 = vsel %vm1275, %v1264, 0
      %v1295 = vsel %vm1275, %v1265, 0
      %v1298 = vsel %vm1275, %v1266, 0
      %v1301 = vsel %vm1275, %v1267, 0
      %v1304 = vsel %vm1275, %v1268, 0
      %v1307 = vsel %vm1275, %v1269, 0
      %v1310 = vsel %vm1275, %v1270, 0
      %v1313 = vsel %vm1275, %v1271, 0
      %v1316 = vsel %vm1275, %v1272, 0
      %v1319 = vsel %vm1275, %v1273, 0
      %v1322 = vsel %vm1275, %v1274, 0
      %1324 = vmatprep.subr.bf16.mxu0 0
      %1325 = vmatpush1.bf16.msra.mxu0 0
      %1326 = vmatprep.subr.bf16.mxu0 0
      %1327 = vmatpush1.bf16.msra.mxu0 0
      %1328 = vmatprep.subr.bf16.mxu0 0
      %1329 = vmatpush1.bf16.msra.mxu0 0
      %1330 = vmatprep.subr.bf16.mxu0 0
      %1331 = vmatpush1.bf16.msra.mxu0 0
      %1332 = vmatprep.subr.bf16.mxu0 0
      %1333 = vmatpush1.bf16.msra.mxu0 0
      %1334 = vmatprep.subr.bf16.mxu0 0
      %1335 = vmatpush1.bf16.msra.mxu0 0
      %1336 = vmatprep.subr.bf16.mxu0 0
      %1337 = vmatpush1.bf16.msra.mxu0 0
      %1338 = vmatprep.subr.bf16.mxu0 0
      %1339 = vmatpush1.bf16.msra.mxu0 %v1002
      %1340 = vmatprep.subr.bf16.mxu0 0
      %1341 = vmatpush2.bf16.msra.mxu0 0
      %1342 = vmatprep.subr.bf16.mxu0 0
      %1343 = vmatpush2.bf16.msra.mxu0 0
      %1344 = vmatprep.subr.bf16.mxu0 0
      %1345 = vmatpush2.bf16.msra.mxu0 0
      %1346 = vmatprep.subr.bf16.mxu0 0
      %1347 = vmatpush2.bf16.msra.mxu0 0
      %1348 = vmatprep.subr.bf16.mxu0 0
      %1349 = vmatpush2.bf16.msra.mxu0 0
      %1350 = vmatprep.subr.bf16.mxu0 0
      %1351 = vmatpush2.bf16.msra.mxu0 0
      %1352 = vmatprep.subr.bf16.mxu0 0
      %1353 = vmatpush2.bf16.msra.mxu0 0
      %1354 = vmatprep.subr.bf16.mxu0 0
      %1355 = vmatpush2.bf16.msra.mxu0 0
      %1356 = vmatprep.mubr.bf16.mxu0 0
      %1357 = vmatmul.mubr.bf16.gmra.mxu0 %v1277
      %v1358 = vpop.f32.mrf.mxu0
      %v1359 = vadd.f32 %v1038, %v1358
      %v1360 = vpop.f32.mrf.mxu0
      %v1361 = vpop.f32.mrf.mxu0
      %v1362 = vadd.f32 %v1043, %v1361
      %v1363 = vpop.f32.mrf.mxu0
      %1364 = vmatprep.mubr.bf16.mxu0 0
      %1365 = vmatmul.mubr.bf16.gmra.mxu0 %v1280
      %v1366 = vpop.f32.mrf.mxu0
      %v1367 = vadd.f32 %v1048, %v1366
      %v1368 = vpop.f32.mrf.mxu0
      %v1369 = vpop.f32.mrf.mxu0
      %v1370 = vadd.f32 %v1053, %v1369
      %v1371 = vpop.f32.mrf.mxu0
      %1372 = vmatprep.mubr.bf16.mxu0 0
      %1373 = vmatmul.mubr.bf16.gmra.mxu0 %v1283
      %v1374 = vpop.f32.mrf.mxu0
      %v1375 = vadd.f32 %v1058, %v1374
      %v1376 = vpop.f32.mrf.mxu0
      %v1377 = vpop.f32.mrf.mxu0
      %v1378 = vadd.f32 %v1063, %v1377
      %v1379 = vpop.f32.mrf.mxu0
      %1380 = vmatprep.mubr.bf16.mxu0 0
      %1381 = vmatmul.mubr.bf16.gmra.mxu0 %v1286
      %v1382 = vpop.f32.mrf.mxu0
      %v1383 = vadd.f32 %v1068, %v1382
      %v1384 = vpop.f32.mrf.mxu0
      %v1385 = vpop.f32.mrf.mxu0
      %v1386 = vadd.f32 %v1073, %v1385
      %v1387 = vpop.f32.mrf.mxu0
      %1388 = vmatprep.mubr.bf16.mxu0 0
      %1389 = vmatmul.mubr.bf16.gmra.mxu0 %v1289
      %v1390 = vpop.f32.mrf.mxu0
      %v1391 = vadd.f32 %v1078, %v1390
      %v1392 = vpop.f32.mrf.mxu0
      %v1393 = vpop.f32.mrf.mxu0
      %v1394 = vadd.f32 %v1083, %v1393
      %v1395 = vpop.f32.mrf.mxu0
      %1396 = vmatprep.mubr.bf16.mxu0 0
      %1397 = vmatmul.mubr.bf16.gmra.mxu0 %v1292
      %v1398 = vpop.f32.mrf.mxu0
      %v1399 = vadd.f32 %v1088, %v1398
      %v1400 = vpop.f32.mrf.mxu0
      %v1401 = vpop.f32.mrf.mxu0
      %v1402 = vadd.f32 %v1093, %v1401
      %v1403 = vpop.f32.mrf.mxu0
      %1404 = vmatprep.mubr.bf16.mxu0 0
      %1405 = vmatmul.mubr.bf16.gmra.mxu0 %v1295
      %v1406 = vpop.f32.mrf.mxu0
      %v1407 = vadd.f32 %v1098, %v1406
      %v1408 = vpop.f32.mrf.mxu0
      %v1409 = vpop.f32.mrf.mxu0
      %v1410 = vadd.f32 %v1103, %v1409
      %v1411 = vpop.f32.mrf.mxu0
      %1412 = vmatprep.mubr.bf16.mxu0 0
      %1413 = vmatmul.mubr.bf16.gmra.mxu0 %v1298
      %v1414 = vpop.f32.mrf.mxu0
      %v1415 = vadd.f32 %v1108, %v1414
      %v1416 = vpop.f32.mrf.mxu0
      %v1417 = vpop.f32.mrf.mxu0
      %v1418 = vadd.f32 %v1113, %v1417
      %v1419 = vpop.f32.mrf.mxu0
      %1420 = vmatprep.mubr.bf16.mxu0 0
      %1421 = vmatmul.mubr.bf16.gmra.mxu0 %v1301
      %v1422 = vpop.f32.mrf.mxu0
      %v1423 = vadd.f32 %v1118, %v1422
      %v1424 = vpop.f32.mrf.mxu0
      %v1425 = vpop.f32.mrf.mxu0
      %v1426 = vadd.f32 %v1123, %v1425
      %v1427 = vpop.f32.mrf.mxu0
      %1428 = vmatprep.mubr.bf16.mxu0 0
      %1429 = vmatmul.mubr.bf16.gmra.mxu0 %v1304
      %v1430 = vpop.f32.mrf.mxu0
      %v1431 = vadd.f32 %v1128, %v1430
      %v1432 = vpop.f32.mrf.mxu0
      %v1433 = vpop.f32.mrf.mxu0
      %v1434 = vadd.f32 %v1133, %v1433
      %v1435 = vpop.f32.mrf.mxu0
      %1436 = vmatprep.mubr.bf16.mxu0 0
      %1437 = vmatmul.mubr.bf16.gmra.mxu0 %v1307
      %v1438 = vpop.f32.mrf.mxu0
      %v1439 = vadd.f32 %v1138, %v1438
      %v1440 = vpop.f32.mrf.mxu0
      %v1441 = vpop.f32.mrf.mxu0
      %v1442 = vadd.f32 %v1143, %v1441
      %v1443 = vpop.f32.mrf.mxu0
      %1444 = vmatprep.mubr.bf16.mxu0 0
      %1445 = vmatmul.mubr.bf16.gmra.mxu0 %v1310
      %v1446 = vpop.f32.mrf.mxu0
      %v1447 = vadd.f32 %v1148, %v1446
      %v1448 = vpop.f32.mrf.mxu0
      %v1449 = vpop.f32.mrf.mxu0
      %v1450 = vadd.f32 %v1153, %v1449
      %v1451 = vpop.f32.mrf.mxu0
      %1452 = vmatprep.mubr.bf16.mxu0 0
      %1453 = vmatmul.mubr.bf16.gmra.mxu0 %v1313
      %v1454 = vpop.f32.mrf.mxu0
      %v1455 = vadd.f32 %v1158, %v1454
      %v1456 = vpop.f32.mrf.mxu0
      %v1457 = vpop.f32.mrf.mxu0
      %v1458 = vadd.f32 %v1163, %v1457
      %v1459 = vpop.f32.mrf.mxu0
      %1460 = vmatprep.mubr.bf16.mxu0 0
      %1461 = vmatmul.mubr.bf16.gmra.mxu0 %v1316
      %v1462 = vpop.f32.mrf.mxu0
      %v1463 = vadd.f32 %v1168, %v1462
      %v1464 = vpop.f32.mrf.mxu0
      %v1465 = vpop.f32.mrf.mxu0
      %v1466 = vadd.f32 %v1173, %v1465
      %v1467 = vpop.f32.mrf.mxu0
      %1468 = vmatprep.mubr.bf16.mxu0 0
      %1469 = vmatmul.mubr.bf16.gmra.mxu0 %v1319
      %v1470 = vpop.f32.mrf.mxu0
      %v1471 = vadd.f32 %v1178, %v1470
      %v1472 = vpop.f32.mrf.mxu0
      %v1473 = vpop.f32.mrf.mxu0
      %v1474 = vadd.f32 %v1183, %v1473
      %v1475 = vpop.f32.mrf.mxu0
      %1476 = vmatprep.mubr.bf16.mxu0 0
      %1477 = vmatmul.mubr.bf16.gmra.mxu0 %v1322
      %v1478 = vpop.f32.mrf.mxu0
      %v1479 = vadd.f32 %v1188, %v1478
      %v1480 = vpop.f32.mrf.mxu0
      %v1481 = vpop.f32.mrf.mxu0
      %v1482 = vadd.f32 %v1193, %v1481
      %v1483 = vpop.f32.mrf.mxu0
      %1484 = vdwg.mxu0
      %v1485 = vmax.f32 %v1359, 0.0
      %v1486 = vmax.f32 %v1362, 0.0
      %v1487 = vmax.f32 %v1367, 0.0
      %v1488 = vmax.f32 %v1370, 0.0
      %v1489 = vmax.f32 %v1375, 0.0
      %v1490 = vmax.f32 %v1378, 0.0
      %v1491 = vmax.f32 %v1383, 0.0
      %v1492 = vmax.f32 %v1386, 0.0
      %v1493 = vmax.f32 %v1391, 0.0
      %v1494 = vmax.f32 %v1394, 0.0
      %v1495 = vmax.f32 %v1399, 0.0
      %v1496 = vmax.f32 %v1402, 0.0
      %v1497 = vmax.f32 %v1407, 0.0
      %v1498 = vmax.f32 %v1410, 0.0
      %v1499 = vmax.f32 %v1415, 0.0
      %v1500 = vmax.f32 %v1418, 0.0
      %v1501 = vmax.f32 %v1423, 0.0
      %v1502 = vmax.f32 %v1426, 0.0
      %v1503 = vmax.f32 %v1431, 0.0
      %v1504 = vmax.f32 %v1434, 0.0
      %v1505 = vmax.f32 %v1439, 0.0
      %v1506 = vmax.f32 %v1442, 0.0
      %v1507 = vmax.f32 %v1447, 0.0
      %v1508 = vmax.f32 %v1450, 0.0
      %v1509 = vmax.f32 %v1455, 0.0
      %v1510 = vmax.f32 %v1458, 0.0
      %v1511 = vmax.f32 %v1463, 0.0
      %v1512 = vmax.f32 %v1466, 0.0
      %v1513 = vmax.f32 %v1471, 0.0
      %v1514 = vmax.f32 %v1474, 0.0
      %v1515 = vmax.f32 %v1479, 0.0
      %v1516 = vmax.f32 %v1482, 0.0
      %v1517 = vld [vmem:[%s8] sm:$0xff]
      %v1518 = vld [vmem:[%s8 + $0x8] sm:$0xff]
      %v1519 = vld [vmem:[%s8 + $0x10] sm:$0xff]
      %v1520 = vld [vmem:[%s8 + $0x18] sm:$0xff]
      %v1521 = vld [vmem:[%s8 + $0x20] sm:$0xff]
      %v1522 = vld [vmem:[%s8 + $0x28] sm:$0xff]
      %v1523 = vld [vmem:[%s8 + $0x30] sm:$0xff]
      %v1524 = vld [vmem:[%s8 + $0x38] sm:$0xff]
      %v1525 = vld [vmem:[%s8 + $0x40] sm:$0xff]
      %v1526 = vld [vmem:[%s8 + $0x48] sm:$0xff]
      %v1527 = vld [vmem:[%s8 + $0x50] sm:$0xff]
      %v1528 = vld [vmem:[%s8 + $0x58] sm:$0xff]
      %v1529 = vld [vmem:[%s8 + $0x60] sm:$0xff]
      %v1530 = vld [vmem:[%s8 + $0x68] sm:$0xff]
      %v1531 = vld [vmem:[%s8 + $0x70] sm:$0xff]
      %v1532 = vld [vmem:[%s8 + $0x78] sm:$0xff]
      %v1533 = vld [vmem:[%s8 + $0x80] sm:$0xff]
      %v1534 = vld [vmem:[%s8 + $0x88] sm:$0xff]
      %v1535 = vld [vmem:[%s8 + $0x90] sm:$0xff]
      %v1536 = vld [vmem:[%s8 + $0x98] sm:$0xff]
      %v1537 = vld [vmem:[%s8 + $0xa0] sm:$0xff]
      %v1538 = vld [vmem:[%s8 + $0xa8] sm:$0xff]
      %v1539 = vld [vmem:[%s8 + $0xb0] sm:$0xff]
      %v1540 = vld [vmem:[%s8 + $0xb8] sm:$0xff]
      %v1541 = vld [vmem:[%s8 + $0xc0] sm:$0xff]
      %v1542 = vld [vmem:[%s8 + $0xc8] sm:$0xff]
      %v1543 = vld [vmem:[%s8 + $0xd0] sm:$0xff]
      %v1544 = vld [vmem:[%s8 + $0xd8] sm:$0xff]
      %v1545 = vld [vmem:[%s8 + $0xe0] sm:$0xff]
      %v1546 = vld [vmem:[%s8 + $0xe8] sm:$0xff]
      %v1547 = vld [vmem:[%s8 + $0xf0] sm:$0xff]
      %v1548 = vld [vmem:[%s8 + $0xf8] sm:$0xff]
      %v1549 = vpack.c.bf16 %v1486, %v1485
      %v1550 = vpack.c.bf16 %v1488, %v1487
      %v1551 = vpack.c.bf16 %v1490, %v1489
      %v1552 = vpack.c.bf16 %v1492, %v1491
      %v1553 = vpack.c.bf16 %v1494, %v1493
      %v1554 = vpack.c.bf16 %v1496, %v1495
      %v1555 = vpack.c.bf16 %v1498, %v1497
      %v1556 = vpack.c.bf16 %v1500, %v1499
      %v1557 = vpack.c.bf16 %v1502, %v1501
      %v1558 = vpack.c.bf16 %v1504, %v1503
      %v1559 = vpack.c.bf16 %v1506, %v1505
      %v1560 = vpack.c.bf16 %v1508, %v1507
      %v1561 = vpack.c.bf16 %v1510, %v1509
      %v1562 = vpack.c.bf16 %v1512, %v1511
      %v1563 = vpack.c.bf16 %v1514, %v1513
      %v1564 = vpack.c.bf16 %v1516, %v1515
      %v1565 = vld [vmem:[%s9] sm:$0xff]
      %v1566 = vld [vmem:[%s9 + $0x8] sm:$0xff]
      %v1567 = vld [vmem:[%s9 + $0x10] sm:$0xff]
      %v1568 = vld [vmem:[%s9 + $0x18] sm:$0xff]
      %v1569 = vld [vmem:[%s9 + $0x20] sm:$0xff]
      %v1570 = vld [vmem:[%s9 + $0x28] sm:$0xff]
      %v1571 = vld [vmem:[%s9 + $0x30] sm:$0xff]
      %v1572 = vld [vmem:[%s9 + $0x38] sm:$0xff]
      %v1573 = vld [vmem:[%s9 + $0x40] sm:$0xff]
      %v1574 = vld [vmem:[%s9 + $0x48] sm:$0xff]
      %v1575 = vld [vmem:[%s9 + $0x50] sm:$0xff]
      %v1576 = vld [vmem:[%s9 + $0x58] sm:$0xff]
      %v1577 = vld [vmem:[%s9 + $0x60] sm:$0xff]
      %v1578 = vld [vmem:[%s9 + $0x68] sm:$0xff]
      %v1579 = vld [vmem:[%s9 + $0x70] sm:$0xff]
      %v1580 = vld [vmem:[%s9 + $0x78] sm:$0xff]
      %v1581 = vld [vmem:[%s9 + $0x80] sm:$0xff]
      %v1582 = vld [vmem:[%s9 + $0x88] sm:$0xff]
      %v1583 = vld [vmem:[%s9 + $0x90] sm:$0xff]
      %v1584 = vld [vmem:[%s9 + $0x98] sm:$0xff]
      %v1585 = vld [vmem:[%s9 + $0xa0] sm:$0xff]
      %v1586 = vld [vmem:[%s9 + $0xa8] sm:$0xff]
      %v1587 = vld [vmem:[%s9 + $0xb0] sm:$0xff]
      %v1588 = vld [vmem:[%s9 + $0xb8] sm:$0xff]
      %v1589 = vld [vmem:[%s9 + $0xc0] sm:$0xff]
      %v1590 = vld [vmem:[%s9 + $0xc8] sm:$0xff]
      %v1591 = vld [vmem:[%s9 + $0xd0] sm:$0xff]
      %v1592 = vld [vmem:[%s9 + $0xd8] sm:$0xff]
      %v1593 = vld [vmem:[%s9 + $0xe0] sm:$0xff]
      %v1594 = vld [vmem:[%s9 + $0xe8] sm:$0xff]
      %v1595 = vld [vmem:[%s9 + $0xf0] sm:$0xff]
      %v1596 = vld [vmem:[%s9 + $0xf8] sm:$0xff]
      %1598 = vset.pattern.permute.xlu0 0
      %1599 = vperm.xlu0 %1598, %v1565
      %v1600 = vpop.permute.xlu0 %1599
      %1603 = vset.pattern.permute.xlu0 0
      %1604 = vperm.xlu0 %1603, %v1566
      %v1605 = vpop.permute.xlu0 %1604
      %1608 = vset.pattern.permute.xlu0 0
      %1609 = vperm.xlu0 %1608, %v1567
      %v1610 = vpop.permute.xlu0 %1609
      %1613 = vset.pattern.permute.xlu0 0
      %1614 = vperm.xlu0 %1613, %v1568
      %v1615 = vpop.permute.xlu0 %1614
      %1618 = vset.pattern.permute.xlu0 0
      %1619 = vperm.xlu0 %1618, %v1569
      %v1620 = vpop.permute.xlu0 %1619
      %1623 = vset.pattern.permute.xlu0 0
      %1624 = vperm.xlu0 %1623, %v1570
      %v1625 = vpop.permute.xlu0 %1624
      %1628 = vset.pattern.permute.xlu0 0
      %1629 = vperm.xlu0 %1628, %v1571
      %v1630 = vpop.permute.xlu0 %1629
      %1633 = vset.pattern.permute.xlu0 0
      %1634 = vperm.xlu0 %1633, %v1572
      %v1635 = vpop.permute.xlu0 %1634
      %1638 = vset.pattern.permute.xlu0 0
      %1639 = vperm.xlu0 %1638, %v1573
      %v1640 = vpop.permute.xlu0 %1639
      %1643 = vset.pattern.permute.xlu0 0
      %1644 = vperm.xlu0 %1643, %v1574
      %v1645 = vpop.permute.xlu0 %1644
      %1648 = vset.pattern.permute.xlu0 0
      %1649 = vperm.xlu0 %1648, %v1575
      %v1650 = vpop.permute.xlu0 %1649
      %1653 = vset.pattern.permute.xlu0 0
      %1654 = vperm.xlu0 %1653, %v1576
      %v1655 = vpop.permute.xlu0 %1654
      %1658 = vset.pattern.permute.xlu0 0
      %1659 = vperm.xlu0 %1658, %v1577
      %v1660 = vpop.permute.xlu0 %1659
      %1663 = vset.pattern.permute.xlu0 0
      %1664 = vperm.xlu0 %1663, %v1578
      %v1665 = vpop.permute.xlu0 %1664
      %1668 = vset.pattern.permute.xlu0 0
      %1669 = vperm.xlu0 %1668, %v1579
      %v1670 = vpop.permute.xlu0 %1669
      %1673 = vset.pattern.permute.xlu0 0
      %1674 = vperm.xlu0 %1673, %v1580
      %v1675 = vpop.permute.xlu0 %1674
      %1678 = vset.pattern.permute.xlu0 0
      %1679 = vperm.xlu0 %1678, %v1581
      %v1680 = vpop.permute.xlu0 %1679
      %1683 = vset.pattern.permute.xlu0 0
      %1684 = vperm.xlu0 %1683, %v1582
      %v1685 = vpop.permute.xlu0 %1684
      %1688 = vset.pattern.permute.xlu0 0
      %1689 = vperm.xlu0 %1688, %v1583
      %v1690 = vpop.permute.xlu0 %1689
      %1693 = vset.pattern.permute.xlu0 0
      %1694 = vperm.xlu0 %1693, %v1584
      %v1695 = vpop.permute.xlu0 %1694
      %1698 = vset.pattern.permute.xlu0 0
      %1699 = vperm.xlu0 %1698, %v1585
      %v1700 = vpop.permute.xlu0 %1699
      %1703 = vset.pattern.permute.xlu0 0
      %1704 = vperm.xlu0 %1703, %v1586
      %v1705 = vpop.permute.xlu0 %1704
      %1708 = vset.pattern.permute.xlu0 0
      %1709 = vperm.xlu0 %1708, %v1587
      %v1710 = vpop.permute.xlu0 %1709
      %1713 = vset.pattern.permute.xlu0 0
      %1714 = vperm.xlu0 %1713, %v1588
      %v1715 = vpop.permute.xlu0 %1714
      %1718 = vset.pattern.permute.xlu0 0
      %1719 = vperm.xlu0 %1718, %v1589
      %v1720 = vpop.permute.xlu0 %1719
      %1723 = vset.pattern.permute.xlu0 0
      %1724 = vperm.xlu0 %1723, %v1590
      %v1725 = vpop.permute.xlu0 %1724
      %1728 = vset.pattern.permute.xlu0 0
      %1729 = vperm.xlu0 %1728, %v1591
      %v1730 = vpop.permute.xlu0 %1729
      %1733 = vset.pattern.permute.xlu0 0
      %1734 = vperm.xlu0 %1733, %v1592
      %v1735 = vpop.permute.xlu0 %1734
      %1738 = vset.pattern.permute.xlu0 0
      %1739 = vperm.xlu0 %1738, %v1593
      %v1740 = vpop.permute.xlu0 %1739
      %1743 = vset.pattern.permute.xlu0 0
      %1744 = vperm.xlu0 %1743, %v1594
      %v1745 = vpop.permute.xlu0 %1744
      %1748 = vset.pattern.permute.xlu0 0
      %1749 = vperm.xlu0 %1748, %v1595
      %v1750 = vpop.permute.xlu0 %1749
      %1753 = vset.pattern.permute.xlu0 0
      %1754 = vperm.xlu0 %1753, %v1596
      %v1755 = vpop.permute.xlu0 %1754
      %v1789 = vunpack.c.l.b16 %v1517
      %v1790 = vunpack.c.h.b16 %v1517
      %v1791 = vunpack.c.l.b16 %v1518
      %v1792 = vunpack.c.h.b16 %v1518
      %v1793 = vunpack.c.l.b16 %v1519
      %v1794 = vunpack.c.h.b16 %v1519
      %v1795 = vunpack.c.l.b16 %v1520
      %v1796 = vunpack.c.h.b16 %v1520
      %v1797 = vunpack.c.l.b16 %v1521
      %v1798 = vunpack.c.h.b16 %v1521
      %v1799 = vunpack.c.l.b16 %v1522
      %v1800 = vunpack.c.h.b16 %v1522
      %v1801 = vunpack.c.l.b16 %v1523
      %v1802 = vunpack.c.h.b16 %v1523
      %v1803 = vunpack.c.l.b16 %v1524
      %v1804 = vunpack.c.h.b16 %v1524
      %v1805 = vunpack.c.l.b16 %v1525
      %v1806 = vunpack.c.h.b16 %v1525
      %v1807 = vunpack.c.l.b16 %v1526
      %v1808 = vunpack.c.h.b16 %v1526
      %v1809 = vunpack.c.l.b16 %v1527
      %v1810 = vunpack.c.h.b16 %v1527
      %v1811 = vunpack.c.l.b16 %v1528
      %v1812 = vunpack.c.h.b16 %v1528
      %v1813 = vunpack.c.l.b16 %v1529
      %v1814 = vunpack.c.h.b16 %v1529
      %v1815 = vunpack.c.l.b16 %v1530
      %v1816 = vunpack.c.h.b16 %v1530
      %v1817 = vunpack.c.l.b16 %v1531
      %v1818 = vunpack.c.h.b16 %v1531
      %v1819 = vunpack.c.l.b16 %v1532
      %v1820 = vunpack.c.h.b16 %v1532
      %v1821 = vunpack.c.l.b16 %v1533
      %v1822 = vunpack.c.h.b16 %v1533
      %v1823 = vunpack.c.l.b16 %v1534
      %v1824 = vunpack.c.h.b16 %v1534
      %v1825 = vunpack.c.l.b16 %v1535
      %v1826 = vunpack.c.h.b16 %v1535
      %v1827 = vunpack.c.l.b16 %v1536
      %v1828 = vunpack.c.h.b16 %v1536
      %v1829 = vunpack.c.l.b16 %v1537
      %v1830 = vunpack.c.h.b16 %v1537
      %v1831 = vunpack.c.l.b16 %v1538
      %v1832 = vunpack.c.h.b16 %v1538
      %v1833 = vunpack.c.l.b16 %v1539
      %v1834 = vunpack.c.h.b16 %v1539
      %v1835 = vunpack.c.l.b16 %v1540
      %v1836 = vunpack.c.h.b16 %v1540
      %v1837 = vunpack.c.l.b16 %v1541
      %v1838 = vunpack.c.h.b16 %v1541
      %v1839 = vunpack.c.l.b16 %v1542
      %v1840 = vunpack.c.h.b16 %v1542
      %v1841 = vunpack.c.l.b16 %v1543
      %v1842 = vunpack.c.h.b16 %v1543
      %v1843 = vunpack.c.l.b16 %v1544
      %v1844 = vunpack.c.h.b16 %v1544
      %v1845 = vunpack.c.l.b16 %v1545
      %v1846 = vunpack.c.h.b16 %v1545
      %v1847 = vunpack.c.l.b16 %v1546
      %v1848 = vunpack.c.h.b16 %v1546
      %v1849 = vunpack.c.l.b16 %v1547
      %v1850 = vunpack.c.h.b16 %v1547
      %v1851 = vunpack.c.l.b16 %v1548
      %v1852 = vunpack.c.h.b16 %v1548
      %v1853 = vpack.c.b16 %v1791, %v1789
      %v1854 = vpack.c.b16 %v1792, %v1790
      %v1855 = vpack.c.b16 %v1795, %v1793
      %v1856 = vpack.c.b16 %v1796, %v1794
      %v1857 = vpack.c.b16 %v1799, %v1797
      %v1858 = vpack.c.b16 %v1800, %v1798
      %v1859 = vpack.c.b16 %v1803, %v1801
      %v1860 = vpack.c.b16 %v1804, %v1802
      %v1861 = vpack.c.b16 %v1807, %v1805
      %v1862 = vpack.c.b16 %v1808, %v1806
      %v1863 = vpack.c.b16 %v1811, %v1809
      %v1864 = vpack.c.b16 %v1812, %v1810
      %v1865 = vpack.c.b16 %v1815, %v1813
      %v1866 = vpack.c.b16 %v1816, %v1814
      %v1867 = vpack.c.b16 %v1819, %v1817
      %v1868 = vpack.c.b16 %v1820, %v1818
      %v1869 = vpack.c.b16 %v1823, %v1821
      %v1870 = vpack.c.b16 %v1824, %v1822
      %v1871 = vpack.c.b16 %v1827, %v1825
      %v1872 = vpack.c.b16 %v1828, %v1826
      %v1873 = vpack.c.b16 %v1831, %v1829
      %v1874 = vpack.c.b16 %v1832, %v1830
      %v1875 = vpack.c.b16 %v1835, %v1833
      %v1876 = vpack.c.b16 %v1836, %v1834
      %v1877 = vpack.c.b16 %v1839, %v1837
      %v1878 = vpack.c.b16 %v1840, %v1838
      %v1879 = vpack.c.b16 %v1843, %v1841
      %v1880 = vpack.c.b16 %v1844, %v1842
      %v1881 = vpack.c.b16 %v1847, %v1845
      %v1882 = vpack.c.b16 %v1848, %v1846
      %v1883 = vpack.c.b16 %v1851, %v1849
      %v1884 = vpack.c.b16 %v1852, %v1850
      %1917 = vmatprep.subr.bf16.mxu0 0
      %1918 = vmatpush1.bf16.msra.mxu0 %v1556
      %1919 = vmatprep.subr.bf16.mxu0 0
      %1920 = vmatpush1.bf16.msra.mxu0 %v1555
      %1921 = vmatprep.subr.bf16.mxu0 0
      %1922 = vmatpush1.bf16.msra.mxu0 %v1554
      %1923 = vmatprep.subr.bf16.mxu0 0
      %1924 = vmatpush1.bf16.msra.mxu0 %v1553
      %1925 = vmatprep.subr.bf16.mxu0 0
      %1926 = vmatpush1.bf16.msra.mxu0 %v1552
      %1927 = vmatprep.subr.bf16.mxu0 0
      %1928 = vmatpush1.bf16.msra.mxu0 %v1551
      %1929 = vmatprep.subr.bf16.mxu0 0
      %1930 = vmatpush1.bf16.msra.mxu0 %v1550
      %1931 = vmatprep.subr.bf16.mxu0 0
      %1932 = vmatpush1.bf16.msra.mxu0 %v1549
      %1933 = vmatprep.subr.bf16.mxu0 0
      %1934 = vmatpush2.bf16.msra.mxu0 %v1564
      %1935 = vmatprep.subr.bf16.mxu0 0
      %1936 = vmatpush2.bf16.msra.mxu0 %v1563
      %1937 = vmatprep.subr.bf16.mxu0 0
      %1938 = vmatpush2.bf16.msra.mxu0 %v1562
      %1939 = vmatprep.subr.bf16.mxu0 0
      %1940 = vmatpush2.bf16.msra.mxu0 %v1561
      %1941 = vmatprep.subr.bf16.mxu0 0
      %1942 = vmatpush2.bf16.msra.mxu0 %v1560
      %1943 = vmatprep.subr.bf16.mxu0 0
      %1944 = vmatpush2.bf16.msra.mxu0 %v1559
      %1945 = vmatprep.subr.bf16.mxu0 0
      %1946 = vmatpush2.bf16.msra.mxu0 %v1558
      %1947 = vmatprep.subr.bf16.mxu0 0
      %1948 = vmatpush2.bf16.msra.mxu0 %v1557
      %1949 = vmatprep.mubr.bf16.mxu0 %v1854
      %1950 = vmatmul.mubr.bf16.gmra.mxu0 %v1853
      %v1951 = vpop.f32.mrf.mxu0
      %v1952 = vadd.f32 %v1600, %v1951
      %v1953 = vpop.f32.mrf.mxu0
      %v1954 = vpop.f32.mrf.mxu0
      %v1955 = vadd.f32 %v1605, %v1954
      %v1956 = vpop.f32.mrf.mxu0
      %1957 = vmatprep.mubr.bf16.mxu0 %v1856
      %1958 = vmatmul.mubr.bf16.gmra.mxu0 %v1855
      %v1959 = vpop.f32.mrf.mxu0
      %v1960 = vadd.f32 %v1610, %v1959
      %v1961 = vpop.f32.mrf.mxu0
      %v1962 = vpop.f32.mrf.mxu0
      %v1963 = vadd.f32 %v1615, %v1962
      %v1964 = vpop.f32.mrf.mxu0
      %1965 = vmatprep.mubr.bf16.mxu0 %v1858
      %1966 = vmatmul.mubr.bf16.gmra.mxu0 %v1857
      %v1967 = vpop.f32.mrf.mxu0
      %v1968 = vadd.f32 %v1620, %v1967
      %v1969 = vpop.f32.mrf.mxu0
      %v1970 = vpop.f32.mrf.mxu0
      %v1971 = vadd.f32 %v1625, %v1970
      %v1972 = vpop.f32.mrf.mxu0
      %1973 = vmatprep.mubr.bf16.mxu0 %v1860
      %1974 = vmatmul.mubr.bf16.gmra.mxu0 %v1859
      %v1975 = vpop.f32.mrf.mxu0
      %v1976 = vadd.f32 %v1630, %v1975
      %v1977 = vpop.f32.mrf.mxu0
      %v1978 = vpop.f32.mrf.mxu0
      %v1979 = vadd.f32 %v1635, %v1978
      %v1980 = vpop.f32.mrf.mxu0
      %1981 = vmatprep.mubr.bf16.mxu0 %v1862
      %1982 = vmatmul.mubr.bf16.gmra.mxu0 %v1861
      %v1983 = vpop.f32.mrf.mxu0
      %v1984 = vadd.f32 %v1640, %v1983
      %v1985 = vpop.f32.mrf.mxu0
      %v1986 = vpop.f32.mrf.mxu0
      %v1987 = vadd.f32 %v1645, %v1986
      %v1988 = vpop.f32.mrf.mxu0
      %1989 = vmatprep.mubr.bf16.mxu0 %v1864
      %1990 = vmatmul.mubr.bf16.gmra.mxu0 %v1863
      %v1991 = vpop.f32.mrf.mxu0
      %v1992 = vadd.f32 %v1650, %v1991
      %v1993 = vpop.f32.mrf.mxu0
      %v1994 = vpop.f32.mrf.mxu0
      %v1995 = vadd.f32 %v1655, %v1994
      %v1996 = vpop.f32.mrf.mxu0
      %1997 = vmatprep.mubr.bf16.mxu0 %v1866
      %1998 = vmatmul.mubr.bf16.gmra.mxu0 %v1865
      %v1999 = vpop.f32.mrf.mxu0
      %v2000 = vadd.f32 %v1660, %v1999
      %v2001 = vpop.f32.mrf.mxu0
      %v2002 = vpop.f32.mrf.mxu0
      %v2003 = vadd.f32 %v1665, %v2002
      %v2004 = vpop.f32.mrf.mxu0
      %2005 = vmatprep.mubr.bf16.mxu0 %v1868
      %2006 = vmatmul.mubr.bf16.gmra.mxu0 %v1867
      %v2007 = vpop.f32.mrf.mxu0
      %v2008 = vadd.f32 %v1670, %v2007
      %v2009 = vpop.f32.mrf.mxu0
      %v2010 = vpop.f32.mrf.mxu0
      %v2011 = vadd.f32 %v1675, %v2010
      %v2012 = vpop.f32.mrf.mxu0
      %2013 = vmatprep.mubr.bf16.mxu0 %v1870
      %2014 = vmatmul.mubr.bf16.gmra.mxu0 %v1869
      %v2015 = vpop.f32.mrf.mxu0
      %v2016 = vadd.f32 %v1680, %v2015
      %v2017 = vpop.f32.mrf.mxu0
      %v2018 = vpop.f32.mrf.mxu0
      %v2019 = vadd.f32 %v1685, %v2018
      %v2020 = vpop.f32.mrf.mxu0
      %2021 = vmatprep.mubr.bf16.mxu0 %v1872
      %2022 = vmatmul.mubr.bf16.gmra.mxu0 %v1871
      %v2023 = vpop.f32.mrf.mxu0
      %v2024 = vadd.f32 %v1690, %v2023
      %v2025 = vpop.f32.mrf.mxu0
      %v2026 = vpop.f32.mrf.mxu0
      %v2027 = vadd.f32 %v1695, %v2026
      %v2028 = vpop.f32.mrf.mxu0
      %2029 = vmatprep.mubr.bf16.mxu0 %v1874
      %2030 = vmatmul.mubr.bf16.gmra.mxu0 %v1873
      %v2031 = vpop.f32.mrf.mxu0
      %v2032 = vadd.f32 %v1700, %v2031
      %v2033 = vpop.f32.mrf.mxu0
      %v2034 = vpop.f32.mrf.mxu0
      %v2035 = vadd.f32 %v1705, %v2034
      %v2036 = vpop.f32.mrf.mxu0
      %2037 = vmatprep.mubr.bf16.mxu0 %v1876
      %2038 = vmatmul.mubr.bf16.gmra.mxu0 %v1875
      %v2039 = vpop.f32.mrf.mxu0
      %v2040 = vadd.f32 %v1710, %v2039
      %v2041 = vpop.f32.mrf.mxu0
      %v2042 = vpop.f32.mrf.mxu0
      %v2043 = vadd.f32 %v1715, %v2042
      %v2044 = vpop.f32.mrf.mxu0
      %2045 = vmatprep.mubr.bf16.mxu0 %v1878
      %2046 = vmatmul.mubr.bf16.gmra.mxu0 %v1877
      %v2047 = vpop.f32.mrf.mxu0
      %v2048 = vadd.f32 %v1720, %v2047
      %v2049 = vpop.f32.mrf.mxu0
      %v2050 = vpop.f32.mrf.mxu0
      %v2051 = vadd.f32 %v1725, %v2050
      %v2052 = vpop.f32.mrf.mxu0
      %2053 = vmatprep.mubr.bf16.mxu0 %v1880
      %2054 = vmatmul.mubr.bf16.gmra.mxu0 %v1879
      %v2055 = vpop.f32.mrf.mxu0
      %v2056 = vadd.f32 %v1730, %v2055
      %v2057 = vpop.f32.mrf.mxu0
      %v2058 = vpop.f32.mrf.mxu0
      %v2059 = vadd.f32 %v1735, %v2058
      %v2060 = vpop.f32.mrf.mxu0
      %2061 = vmatprep.mubr.bf16.mxu0 %v1882
      %2062 = vmatmul.mubr.bf16.gmra.mxu0 %v1881
      %v2063 = vpop.f32.mrf.mxu0
      %v2064 = vadd.f32 %v1740, %v2063
      %v2065 = vpop.f32.mrf.mxu0
      %v2066 = vpop.f32.mrf.mxu0
      %v2067 = vadd.f32 %v1745, %v2066
      %v2068 = vpop.f32.mrf.mxu0
      %2069 = vmatprep.mubr.bf16.mxu0 %v1884
      %2070 = vmatmul.mubr.bf16.gmra.mxu0 %v1883
      %v2071 = vpop.f32.mrf.mxu0
      %v2072 = vadd.f32 %v1750, %v2071
      %v2073 = vpop.f32.mrf.mxu0
      %v2074 = vpop.f32.mrf.mxu0
      %v2075 = vadd.f32 %v1755, %v2074
      %v2076 = vpop.f32.mrf.mxu0
      %2077 = vdwg.mxu0
      %v2078 = vmax.f32 %v1952, 0.0
      %v2079 = vmax.f32 %v1955, 0.0
      %v2080 = vmax.f32 %v1960, 0.0
      %v2081 = vmax.f32 %v1963, 0.0
      %v2082 = vmax.f32 %v1968, 0.0
      %v2083 = vmax.f32 %v1971, 0.0
      %v2084 = vmax.f32 %v1976, 0.0
      %v2085 = vmax.f32 %v1979, 0.0
      %v2086 = vmax.f32 %v1984, 0.0
      %v2087 = vmax.f32 %v1987, 0.0
      %v2088 = vmax.f32 %v1992, 0.0
      %v2089 = vmax.f32 %v1995, 0.0
      %v2090 = vmax.f32 %v2000, 0.0
      %v2091 = vmax.f32 %v2003, 0.0
      %v2092 = vmax.f32 %v2008, 0.0
      %v2093 = vmax.f32 %v2011, 0.0
      %v2094 = vmax.f32 %v2016, 0.0
      %v2095 = vmax.f32 %v2019, 0.0
      %v2096 = vmax.f32 %v2024, 0.0
      %v2097 = vmax.f32 %v2027, 0.0
      %v2098 = vmax.f32 %v2032, 0.0
      %v2099 = vmax.f32 %v2035, 0.0
      %v2100 = vmax.f32 %v2040, 0.0
      %v2101 = vmax.f32 %v2043, 0.0
      %v2102 = vmax.f32 %v2048, 0.0
      %v2103 = vmax.f32 %v2051, 0.0
      %v2104 = vmax.f32 %v2056, 0.0
      %v2105 = vmax.f32 %v2059, 0.0
      %v2106 = vmax.f32 %v2064, 0.0
      %v2107 = vmax.f32 %v2067, 0.0
      %v2108 = vmax.f32 %v2072, 0.0
      %v2109 = vmax.f32 %v2075, 0.0
      %v2110 = vld [vmem:[%s10] sm:$0xff]
      %v2111 = vld [vmem:[%s10 + $0x8] sm:$0xff]
      %v2112 = vld [vmem:[%s10 + $0x10] sm:$0xff]
      %v2113 = vld [vmem:[%s10 + $0x18] sm:$0xff]
      %v2114 = vld [vmem:[%s10 + $0x20] sm:$0xff]
      %v2115 = vld [vmem:[%s10 + $0x28] sm:$0xff]
      %v2116 = vld [vmem:[%s10 + $0x30] sm:$0xff]
      %v2117 = vld [vmem:[%s10 + $0x38] sm:$0xff]
      %v2118 = vld [vmem:[%s10 + $0x40] sm:$0xff]
      %v2119 = vld [vmem:[%s10 + $0x48] sm:$0xff]
      %v2120 = vld [vmem:[%s10 + $0x50] sm:$0xff]
      %v2121 = vld [vmem:[%s10 + $0x58] sm:$0xff]
      %v2122 = vld [vmem:[%s10 + $0x60] sm:$0xff]
      %v2123 = vld [vmem:[%s10 + $0x68] sm:$0xff]
      %v2124 = vld [vmem:[%s10 + $0x70] sm:$0xff]
      %v2125 = vld [vmem:[%s10 + $0x78] sm:$0xff]
      %v2126 = vld [vmem:[%s10 + $0x80] sm:$0xff]
      %v2127 = vld [vmem:[%s10 + $0x88] sm:$0xff]
      %v2128 = vld [vmem:[%s10 + $0x90] sm:$0xff]
      %v2129 = vld [vmem:[%s10 + $0x98] sm:$0xff]
      %v2130 = vld [vmem:[%s10 + $0xa0] sm:$0xff]
      %v2131 = vld [vmem:[%s10 + $0xa8] sm:$0xff]
      %v2132 = vld [vmem:[%s10 + $0xb0] sm:$0xff]
      %v2133 = vld [vmem:[%s10 + $0xb8] sm:$0xff]
      %v2134 = vld [vmem:[%s10 + $0xc0] sm:$0xff]
      %v2135 = vld [vmem:[%s10 + $0xc8] sm:$0xff]
      %v2136 = vld [vmem:[%s10 + $0xd0] sm:$0xff]
      %v2137 = vld [vmem:[%s10 + $0xd8] sm:$0xff]
      %v2138 = vld [vmem:[%s10 + $0xe0] sm:$0xff]
      %v2139 = vld [vmem:[%s10 + $0xe8] sm:$0xff]
      %v2140 = vld [vmem:[%s10 + $0xf0] sm:$0xff]
      %v2141 = vld [vmem:[%s10 + $0xf8] sm:$0xff]
      %v2142 = vpack.c.bf16 %v2079, %v2078
      %v2143 = vpack.c.bf16 %v2081, %v2080
      %v2144 = vpack.c.bf16 %v2083, %v2082
      %v2145 = vpack.c.bf16 %v2085, %v2084
      %v2146 = vpack.c.bf16 %v2087, %v2086
      %v2147 = vpack.c.bf16 %v2089, %v2088
      %v2148 = vpack.c.bf16 %v2091, %v2090
      %v2149 = vpack.c.bf16 %v2093, %v2092
      %v2150 = vpack.c.bf16 %v2095, %v2094
      %v2151 = vpack.c.bf16 %v2097, %v2096
      %v2152 = vpack.c.bf16 %v2099, %v2098
      %v2153 = vpack.c.bf16 %v2101, %v2100
      %v2154 = vpack.c.bf16 %v2103, %v2102
      %v2155 = vpack.c.bf16 %v2105, %v2104
      %v2156 = vpack.c.bf16 %v2107, %v2106
      %v2157 = vpack.c.bf16 %v2109, %v2108
      %v2190 = vunpack.c.l.b16 %v2110
      %v2191 = vunpack.c.h.b16 %v2110
      %v2192 = vunpack.c.l.b16 %v2111
      %v2193 = vunpack.c.h.b16 %v2111
      %v2194 = vunpack.c.l.b16 %v2112
      %v2195 = vunpack.c.h.b16 %v2112
      %v2196 = vunpack.c.l.b16 %v2113
      %v2197 = vunpack.c.h.b16 %v2113
      %v2198 = vunpack.c.l.b16 %v2114
      %v2199 = vunpack.c.h.b16 %v2114
      %v2200 = vunpack.c.l.b16 %v2115
      %v2201 = vunpack.c.h.b16 %v2115
      %v2202 = vunpack.c.l.b16 %v2116
      %v2203 = vunpack.c.h.b16 %v2116
      %v2204 = vunpack.c.l.b16 %v2117
      %v2205 = vunpack.c.h.b16 %v2117
      %v2206 = vunpack.c.l.b16 %v2118
      %v2207 = vunpack.c.h.b16 %v2118
      %v2208 = vunpack.c.l.b16 %v2119
      %v2209 = vunpack.c.h.b16 %v2119
      %v2210 = vunpack.c.l.b16 %v2120
      %v2211 = vunpack.c.h.b16 %v2120
      %v2212 = vunpack.c.l.b16 %v2121
      %v2213 = vunpack.c.h.b16 %v2121
      %v2214 = vunpack.c.l.b16 %v2122
      %v2215 = vunpack.c.h.b16 %v2122
      %v2216 = vunpack.c.l.b16 %v2123
      %v2217 = vunpack.c.h.b16 %v2123
      %v2218 = vunpack.c.l.b16 %v2124
      %v2219 = vunpack.c.h.b16 %v2124
      %v2220 = vunpack.c.l.b16 %v2125
      %v2221 = vunpack.c.h.b16 %v2125
      %v2222 = vunpack.c.l.b16 %v2126
      %v2223 = vunpack.c.h.b16 %v2126
      %v2224 = vunpack.c.l.b16 %v2127
      %v2225 = vunpack.c.h.b16 %v2127
      %v2226 = vunpack.c.l.b16 %v2128
      %v2227 = vunpack.c.h.b16 %v2128
      %v2228 = vunpack.c.l.b16 %v2129
      %v2229 = vunpack.c.h.b16 %v2129
      %v2230 = vunpack.c.l.b16 %v2130
      %v2231 = vunpack.c.h.b16 %v2130
      %v2232 = vunpack.c.l.b16 %v2131
      %v2233 = vunpack.c.h.b16 %v2131
      %v2234 = vunpack.c.l.b16 %v2132
      %v2235 = vunpack.c.h.b16 %v2132
      %v2236 = vunpack.c.l.b16 %v2133
      %v2237 = vunpack.c.h.b16 %v2133
      %v2238 = vunpack.c.l.b16 %v2134
      %v2239 = vunpack.c.h.b16 %v2134
      %v2240 = vunpack.c.l.b16 %v2135
      %v2241 = vunpack.c.h.b16 %v2135
      %v2242 = vunpack.c.l.b16 %v2136
      %v2243 = vunpack.c.h.b16 %v2136
      %v2244 = vunpack.c.l.b16 %v2137
      %v2245 = vunpack.c.h.b16 %v2137
      %v2246 = vunpack.c.l.b16 %v2138
      %v2247 = vunpack.c.h.b16 %v2138
      %v2248 = vunpack.c.l.b16 %v2139
      %v2249 = vunpack.c.h.b16 %v2139
      %v2250 = vunpack.c.l.b16 %v2140
      %v2251 = vunpack.c.h.b16 %v2140
      %v2252 = vunpack.c.l.b16 %v2141
      %v2253 = vunpack.c.h.b16 %v2141
      %v2254 = vpack.c.b16 %v2192, %v2190
      %v2255 = vpack.c.b16 %v2193, %v2191
      %v2256 = vpack.c.b16 %v2196, %v2194
      %v2257 = vpack.c.b16 %v2197, %v2195
      %v2258 = vpack.c.b16 %v2200, %v2198
      %v2259 = vpack.c.b16 %v2201, %v2199
      %v2260 = vpack.c.b16 %v2204, %v2202
      %v2261 = vpack.c.b16 %v2205, %v2203
      %v2262 = vpack.c.b16 %v2208, %v2206
      %v2263 = vpack.c.b16 %v2209, %v2207
      %v2264 = vpack.c.b16 %v2212, %v2210
      %v2265 = vpack.c.b16 %v2213, %v2211
      %v2266 = vpack.c.b16 %v2216, %v2214
      %v2267 = vpack.c.b16 %v2217, %v2215
      %v2268 = vpack.c.b16 %v2220, %v2218
      %v2269 = vpack.c.b16 %v2221, %v2219
      %v2270 = vpack.c.b16 %v2224, %v2222
      %v2271 = vpack.c.b16 %v2225, %v2223
      %v2272 = vpack.c.b16 %v2228, %v2226
      %v2273 = vpack.c.b16 %v2229, %v2227
      %v2274 = vpack.c.b16 %v2232, %v2230
      %v2275 = vpack.c.b16 %v2233, %v2231
      %v2276 = vpack.c.b16 %v2236, %v2234
      %v2277 = vpack.c.b16 %v2237, %v2235
      %v2278 = vpack.c.b16 %v2240, %v2238
      %v2279 = vpack.c.b16 %v2241, %v2239
      %v2280 = vpack.c.b16 %v2244, %v2242
      %v2281 = vpack.c.b16 %v2245, %v2243
      %v2282 = vpack.c.b16 %v2248, %v2246
      %v2283 = vpack.c.b16 %v2249, %v2247
      %v2284 = vpack.c.b16 %v2252, %v2250
      %v2285 = vpack.c.b16 %v2253, %v2251
      %2318 = vmatprep.subr.bf16.mxu0 0
      %2319 = vmatpush1.bf16.msra.mxu0 %v2149
      %2320 = vmatprep.subr.bf16.mxu0 0
      %2321 = vmatpush1.bf16.msra.mxu0 %v2148
      %2322 = vmatprep.subr.bf16.mxu0 0
      %2323 = vmatpush1.bf16.msra.mxu0 %v2147
      %2324 = vmatprep.subr.bf16.mxu0 0
      %2325 = vmatpush1.bf16.msra.mxu0 %v2146
      %2326 = vmatprep.subr.bf16.mxu0 0
      %2327 = vmatpush1.bf16.msra.mxu0 %v2145
      %2328 = vmatprep.subr.bf16.mxu0 0
      %2329 = vmatpush1.bf16.msra.mxu0 %v2144
      %2330 = vmatprep.subr.bf16.mxu0 0
      %2331 = vmatpush1.bf16.msra.mxu0 %v2143
      %2332 = vmatprep.subr.bf16.mxu0 0
      %2333 = vmatpush1.bf16.msra.mxu0 %v2142
      %2334 = vmatprep.subr.bf16.mxu0 0
      %2335 = vmatpush2.bf16.msra.mxu0 %v2157
      %2336 = vmatprep.subr.bf16.mxu0 0
      %2337 = vmatpush2.bf16.msra.mxu0 %v2156
      %2338 = vmatprep.subr.bf16.mxu0 0
      %2339 = vmatpush2.bf16.msra.mxu0 %v2155
      %2340 = vmatprep.subr.bf16.mxu0 0
      %2341 = vmatpush2.bf16.msra.mxu0 %v2154
      %2342 = vmatprep.subr.bf16.mxu0 0
      %2343 = vmatpush2.bf16.msra.mxu0 %v2153
      %2344 = vmatprep.subr.bf16.mxu0 0
      %2345 = vmatpush2.bf16.msra.mxu0 %v2152
      %2346 = vmatprep.subr.bf16.mxu0 0
      %2347 = vmatpush2.bf16.msra.mxu0 %v2151
      %2348 = vmatprep.subr.bf16.mxu0 0
      %2349 = vmatpush2.bf16.msra.mxu0 %v2150
      %2350 = vmatprep.mubr.bf16.mxu0 %v2255
      %2351 = vmatmul.mubr.bf16.gmra.mxu0 %v2254
      %v2352 = vpop.f32.mrf.mxu0
      %v2353 = vadd.f32 0.0, %v2352
      %v2354 = vpop.f32.mrf.mxu0
      %v2355 = vpop.f32.mrf.mxu0
      %v2356 = vadd.f32 0.0, %v2355
      %v2357 = vpop.f32.mrf.mxu0
      %2358 = vmatprep.mubr.bf16.mxu0 %v2257
      %2359 = vmatmul.mubr.bf16.gmra.mxu0 %v2256
      %v2360 = vpop.f32.mrf.mxu0
      %v2361 = vadd.f32 0.0, %v2360
      %v2362 = vpop.f32.mrf.mxu0
      %v2363 = vpop.f32.mrf.mxu0
      %v2364 = vadd.f32 0.0, %v2363
      %v2365 = vpop.f32.mrf.mxu0
      %2366 = vmatprep.mubr.bf16.mxu0 %v2259
      %2367 = vmatmul.mubr.bf16.gmra.mxu0 %v2258
      %v2368 = vpop.f32.mrf.mxu0
      %v2369 = vadd.f32 0.0, %v2368
      %v2370 = vpop.f32.mrf.mxu0
      %v2371 = vpop.f32.mrf.mxu0
      %v2372 = vadd.f32 0.0, %v2371
      %v2373 = vpop.f32.mrf.mxu0
      %2374 = vmatprep.mubr.bf16.mxu0 %v2261
      %2375 = vmatmul.mubr.bf16.gmra.mxu0 %v2260
      %v2376 = vpop.f32.mrf.mxu0
      %v2377 = vadd.f32 0.0, %v2376
      %v2378 = vpop.f32.mrf.mxu0
      %v2379 = vpop.f32.mrf.mxu0
      %v2380 = vadd.f32 0.0, %v2379
      %v2381 = vpop.f32.mrf.mxu0
      %2382 = vmatprep.mubr.bf16.mxu0 %v2263
      %2383 = vmatmul.mubr.bf16.gmra.mxu0 %v2262
      %v2384 = vpop.f32.mrf.mxu0
      %v2385 = vadd.f32 0.0, %v2384
      %v2386 = vpop.f32.mrf.mxu0
      %v2387 = vpop.f32.mrf.mxu0
      %v2388 = vadd.f32 0.0, %v2387
      %v2389 = vpop.f32.mrf.mxu0
      %2390 = vmatprep.mubr.bf16.mxu0 %v2265
      %2391 = vmatmul.mubr.bf16.gmra.mxu0 %v2264
      %v2392 = vpop.f32.mrf.mxu0
      %v2393 = vadd.f32 0.0, %v2392
      %v2394 = vpop.f32.mrf.mxu0
      %v2395 = vpop.f32.mrf.mxu0
      %v2396 = vadd.f32 0.0, %v2395
      %v2397 = vpop.f32.mrf.mxu0
      %2398 = vmatprep.mubr.bf16.mxu0 %v2267
      %2399 = vmatmul.mubr.bf16.gmra.mxu0 %v2266
      %v2400 = vpop.f32.mrf.mxu0
      %v2401 = vadd.f32 0.0, %v2400
      %v2402 = vpop.f32.mrf.mxu0
      %v2403 = vpop.f32.mrf.mxu0
      %v2404 = vadd.f32 0.0, %v2403
      %v2405 = vpop.f32.mrf.mxu0
      %2406 = vmatprep.mubr.bf16.mxu0 %v2269
      %2407 = vmatmul.mubr.bf16.gmra.mxu0 %v2268
      %v2408 = vpop.f32.mrf.mxu0
      %v2409 = vadd.f32 0.0, %v2408
      %v2410 = vpop.f32.mrf.mxu0
      %v2411 = vpop.f32.mrf.mxu0
      %v2412 = vadd.f32 0.0, %v2411
      %v2413 = vpop.f32.mrf.mxu0
      %2414 = vmatprep.mubr.bf16.mxu0 %v2271
      %2415 = vmatmul.mubr.bf16.gmra.mxu0 %v2270
      %v2416 = vpop.f32.mrf.mxu0
      %v2417 = vadd.f32 0.0, %v2416
      %v2418 = vpop.f32.mrf.mxu0
      %v2419 = vpop.f32.mrf.mxu0
      %v2420 = vadd.f32 0.0, %v2419
      %v2421 = vpop.f32.mrf.mxu0
      %2422 = vmatprep.mubr.bf16.mxu0 %v2273
      %2423 = vmatmul.mubr.bf16.gmra.mxu0 %v2272
      %v2424 = vpop.f32.mrf.mxu0
      %v2425 = vadd.f32 0.0, %v2424
      %v2426 = vpop.f32.mrf.mxu0
      %v2427 = vpop.f32.mrf.mxu0
      %v2428 = vadd.f32 0.0, %v2427
      %v2429 = vpop.f32.mrf.mxu0
      %2430 = vmatprep.mubr.bf16.mxu0 %v2275
      %2431 = vmatmul.mubr.bf16.gmra.mxu0 %v2274
      %v2432 = vpop.f32.mrf.mxu0
      %v2433 = vadd.f32 0.0, %v2432
      %v2434 = vpop.f32.mrf.mxu0
      %v2435 = vpop.f32.mrf.mxu0
      %v2436 = vadd.f32 0.0, %v2435
      %v2437 = vpop.f32.mrf.mxu0
      %2438 = vmatprep.mubr.bf16.mxu0 %v2277
      %2439 = vmatmul.mubr.bf16.gmra.mxu0 %v2276
      %v2440 = vpop.f32.mrf.mxu0
      %v2441 = vadd.f32 0.0, %v2440
      %v2442 = vpop.f32.mrf.mxu0
      %v2443 = vpop.f32.mrf.mxu0
      %v2444 = vadd.f32 0.0, %v2443
      %v2445 = vpop.f32.mrf.mxu0
      %2446 = vmatprep.mubr.bf16.mxu0 %v2279
      %2447 = vmatmul.mubr.bf16.gmra.mxu0 %v2278
      %v2448 = vpop.f32.mrf.mxu0
      %v2449 = vadd.f32 0.0, %v2448
      %v2450 = vpop.f32.mrf.mxu0
      %v2451 = vpop.f32.mrf.mxu0
      %v2452 = vadd.f32 0.0, %v2451
      %v2453 = vpop.f32.mrf.mxu0
      %2454 = vmatprep.mubr.bf16.mxu0 %v2281
      %2455 = vmatmul.mubr.bf16.gmra.mxu0 %v2280
      %v2456 = vpop.f32.mrf.mxu0
      %v2457 = vadd.f32 0.0, %v2456
      %v2458 = vpop.f32.mrf.mxu0
      %v2459 = vpop.f32.mrf.mxu0
      %v2460 = vadd.f32 0.0, %v2459
      %v2461 = vpop.f32.mrf.mxu0
      %2462 = vmatprep.mubr.bf16.mxu0 %v2283
      %2463 = vmatmul.mubr.bf16.gmra.mxu0 %v2282
      %v2464 = vpop.f32.mrf.mxu0
      %v2465 = vadd.f32 0.0, %v2464
      %v2466 = vpop.f32.mrf.mxu0
      %v2467 = vpop.f32.mrf.mxu0
      %v2468 = vadd.f32 0.0, %v2467
      %v2469 = vpop.f32.mrf.mxu0
      %2470 = vmatprep.mubr.bf16.mxu0 %v2285
      %2471 = vmatmul.mubr.bf16.gmra.mxu0 %v2284
      %v2472 = vpop.f32.mrf.mxu0
      %v2473 = vadd.f32 0.0, %v2472
      %v2474 = vpop.f32.mrf.mxu0
      %v2475 = vpop.f32.mrf.mxu0
      %v2476 = vadd.f32 0.0, %v2475
      %v2477 = vpop.f32.mrf.mxu0
      %2478 = vdwg.mxu0
      %v2479 = vmax.f32 %v2353, 0.0
      %v2480 = vmax.f32 %v2356, 0.0
      %v2481 = vmax.f32 %v2361, 0.0
      %v2482 = vmax.f32 %v2364, 0.0
      %v2483 = vmax.f32 %v2369, 0.0
      %v2484 = vmax.f32 %v2372, 0.0
      %v2485 = vmax.f32 %v2377, 0.0
      %v2486 = vmax.f32 %v2380, 0.0
      %v2487 = vmax.f32 %v2385, 0.0
      %v2488 = vmax.f32 %v2388, 0.0
      %v2489 = vmax.f32 %v2393, 0.0
      %v2490 = vmax.f32 %v2396, 0.0
      %v2491 = vmax.f32 %v2401, 0.0
      %v2492 = vmax.f32 %v2404, 0.0
      %v2493 = vmax.f32 %v2409, 0.0
      %v2494 = vmax.f32 %v2412, 0.0
      %v2495 = vmax.f32 %v2417, 0.0
      %v2496 = vmax.f32 %v2420, 0.0
      %v2497 = vmax.f32 %v2425, 0.0
      %v2498 = vmax.f32 %v2428, 0.0
      %v2499 = vmax.f32 %v2433, 0.0
      %v2500 = vmax.f32 %v2436, 0.0
      %v2501 = vmax.f32 %v2441, 0.0
      %v2502 = vmax.f32 %v2444, 0.0
      %v2503 = vmax.f32 %v2449, 0.0
      %v2504 = vmax.f32 %v2452, 0.0
      %v2505 = vmax.f32 %v2457, 0.0
      %v2506 = vmax.f32 %v2460, 0.0
      %v2507 = vmax.f32 %v2465, 0.0
      %v2508 = vmax.f32 %v2468, 0.0
      %v2509 = vmax.f32 %v2473, 0.0
      %v2510 = vmax.f32 %v2476, 0.0
      %v2511 = vld [vmem:[%s2] sm:$0x1]
      %v2513 = vlaneseq
      %v2514 = vshrl.u32 %v2513, 7
      %v2515 = vsub.s32 0, %v2514
      %v2516 = vrot.slane %v2511, %v2515
      %v2518 = vmul.f32 %v2479, %v2516
      %v2519 = vmul.f32 %v2480, %v2516
      %v2520 = vmul.f32 %v2481, %v2516
      %v2521 = vmul.f32 %v2482, %v2516
      %v2522 = vmul.f32 %v2483, %v2516
      %v2523 = vmul.f32 %v2484, %v2516
      %v2524 = vmul.f32 %v2485, %v2516
      %v2525 = vmul.f32 %v2486, %v2516
      %v2526 = vmul.f32 %v2487, %v2516
      %v2527 = vmul.f32 %v2488, %v2516
      %v2528 = vmul.f32 %v2489, %v2516
      %v2529 = vmul.f32 %v2490, %v2516
      %v2530 = vmul.f32 %v2491, %v2516
      %v2531 = vmul.f32 %v2492, %v2516
      %v2532 = vmul.f32 %v2493, %v2516
      %v2533 = vmul.f32 %v2494, %v2516
      %v2534 = vmul.f32 %v2495, %v2516
      %v2535 = vmul.f32 %v2496, %v2516
      %v2536 = vmul.f32 %v2497, %v2516
      %v2537 = vmul.f32 %v2498, %v2516
      %v2538 = vmul.f32 %v2499, %v2516
      %v2539 = vmul.f32 %v2500, %v2516
      %v2540 = vmul.f32 %v2501, %v2516
      %v2541 = vmul.f32 %v2502, %v2516
      %v2542 = vmul.f32 %v2503, %v2516
      %v2543 = vmul.f32 %v2504, %v2516
      %v2544 = vmul.f32 %v2505, %v2516
      %v2545 = vmul.f32 %v2506, %v2516
      %v2546 = vmul.f32 %v2507, %v2516
      %v2547 = vmul.f32 %v2508, %v2516
      %v2548 = vmul.f32 %v2509, %v2516
      %v2549 = vmul.f32 %v2510, %v2516
      %v2550 = vld [vmem:[%s3] sm:$0xff]
      %v2551 = vld [vmem:[%s3 + $0x8] sm:$0xff]
      %v2552 = vld [vmem:[%s3 + $0x10] sm:$0xff]
      %v2553 = vld [vmem:[%s3 + $0x18] sm:$0xff]
      %v2554 = vld [vmem:[%s3 + $0x20] sm:$0xff]
      %v2555 = vld [vmem:[%s3 + $0x28] sm:$0xff]
      %v2556 = vld [vmem:[%s3 + $0x30] sm:$0xff]
      %v2557 = vld [vmem:[%s3 + $0x38] sm:$0xff]
      %v2558 = vld [vmem:[%s3 + $0x40] sm:$0xff]
      %v2559 = vld [vmem:[%s3 + $0x48] sm:$0xff]
      %v2560 = vld [vmem:[%s3 + $0x50] sm:$0xff]
      %v2561 = vld [vmem:[%s3 + $0x58] sm:$0xff]
      %v2562 = vld [vmem:[%s3 + $0x60] sm:$0xff]
      %v2563 = vld [vmem:[%s3 + $0x68] sm:$0xff]
      %v2564 = vld [vmem:[%s3 + $0x70] sm:$0xff]
      %v2565 = vld [vmem:[%s3 + $0x78] sm:$0xff]
      %2566 = vset.pattern.permute.xlu0 0
      %2567 = vperm.xlu0 %2566, %v2550
      %v2568 = vpop.permute.xlu0 %2567
      %2569 = vset.pattern.permute.xlu0 0
      %2570 = vperm.xlu0 %2569, %v2551
      %v2571 = vpop.permute.xlu0 %2570
      %2572 = vset.pattern.permute.xlu0 0
      %2573 = vperm.xlu0 %2572, %v2552
      %v2574 = vpop.permute.xlu0 %2573
      %2575 = vset.pattern.permute.xlu0 0
      %2576 = vperm.xlu0 %2575, %v2553
      %v2577 = vpop.permute.xlu0 %2576
      %2578 = vset.pattern.permute.xlu0 0
      %2579 = vperm.xlu0 %2578, %v2554
      %v2580 = vpop.permute.xlu0 %2579
      %2581 = vset.pattern.permute.xlu0 0
      %2582 = vperm.xlu0 %2581, %v2555
      %v2583 = vpop.permute.xlu0 %2582
      %2584 = vset.pattern.permute.xlu0 0
      %2585 = vperm.xlu0 %2584, %v2556
      %v2586 = vpop.permute.xlu0 %2585
      %2587 = vset.pattern.permute.xlu0 0
      %2588 = vperm.xlu0 %2587, %v2557
      %v2589 = vpop.permute.xlu0 %2588
      %2590 = vset.pattern.permute.xlu0 0
      %2591 = vperm.xlu0 %2590, %v2558
      %v2592 = vpop.permute.xlu0 %2591
      %2593 = vset.pattern.permute.xlu0 0
      %2594 = vperm.xlu0 %2593, %v2559
      %v2595 = vpop.permute.xlu0 %2594
      %2596 = vset.pattern.permute.xlu0 0
      %2597 = vperm.xlu0 %2596, %v2560
      %v2598 = vpop.permute.xlu0 %2597
      %2599 = vset.pattern.permute.xlu0 0
      %2600 = vperm.xlu0 %2599, %v2561
      %v2601 = vpop.permute.xlu0 %2600
      %2602 = vset.pattern.permute.xlu0 0
      %2603 = vperm.xlu0 %2602, %v2562
      %v2604 = vpop.permute.xlu0 %2603
      %2605 = vset.pattern.permute.xlu0 0
      %2606 = vperm.xlu0 %2605, %v2563
      %v2607 = vpop.permute.xlu0 %2606
      %2608 = vset.pattern.permute.xlu0 0
      %2609 = vperm.xlu0 %2608, %v2564
      %v2610 = vpop.permute.xlu0 %2609
      %2611 = vset.pattern.permute.xlu0 0
      %2612 = vperm.xlu0 %2611, %v2565
      %v2613 = vpop.permute.xlu0 %2612
      %vm2614 = vcmp.eq.s32.totalorder %v442, %v2568
      %vm2615 = vcmp.eq.s32.totalorder %v442, %v2571
      %vm2616 = vcmp.eq.s32.totalorder %v442, %v2574
      %vm2617 = vcmp.eq.s32.totalorder %v442, %v2577
      %vm2618 = vcmp.eq.s32.totalorder %v442, %v2580
      %vm2619 = vcmp.eq.s32.totalorder %v442, %v2583
      %vm2620 = vcmp.eq.s32.totalorder %v442, %v2586
      %vm2621 = vcmp.eq.s32.totalorder %v442, %v2589
      %vm2622 = vcmp.eq.s32.totalorder %v442, %v2592
      %vm2623 = vcmp.eq.s32.totalorder %v442, %v2595
      %vm2624 = vcmp.eq.s32.totalorder %v442, %v2598
      %vm2625 = vcmp.eq.s32.totalorder %v442, %v2601
      %vm2626 = vcmp.eq.s32.totalorder %v442, %v2604
      %vm2627 = vcmp.eq.s32.totalorder %v442, %v2607
      %vm2628 = vcmp.eq.s32.totalorder %v442, %v2610
      %vm2629 = vcmp.eq.s32.totalorder %v442, %v2613
      %v2630 = vsel %vm2614, 1, 0
      %v2631 = vsel %vm2615, 1, 0
      %v2632 = vsel %vm2616, 1, 0
      %v2633 = vsel %vm2617, 1, 0
      %v2634 = vsel %vm2618, 1, 0
      %v2635 = vsel %vm2619, 1, 0
      %v2636 = vsel %vm2620, 1, 0
      %v2637 = vsel %vm2621, 1, 0
      %v2638 = vsel %vm2622, 1, 0
      %v2639 = vsel %vm2623, 1, 0
      %v2640 = vsel %vm2624, 1, 0
      %v2641 = vsel %vm2625, 1, 0
      %v2642 = vsel %vm2626, 1, 0
      %v2643 = vsel %vm2627, 1, 0
      %v2644 = vsel %vm2628, 1, 0
      %v2645 = vsel %vm2629, 1, 0
      %v2646 = vcvt.s32.f32 %v2630
      %v2647 = vcvt.s32.f32 %v2631
      %v2648 = vcvt.s32.f32 %v2632
      %v2649 = vcvt.s32.f32 %v2633
      %v2650 = vcvt.s32.f32 %v2634
      %v2651 = vcvt.s32.f32 %v2635
      %v2652 = vcvt.s32.f32 %v2636
      %v2653 = vcvt.s32.f32 %v2637
      %v2654 = vcvt.s32.f32 %v2638
      %v2655 = vcvt.s32.f32 %v2639
      %v2656 = vcvt.s32.f32 %v2640
      %v2657 = vcvt.s32.f32 %v2641
      %v2658 = vcvt.s32.f32 %v2642
      %v2659 = vcvt.s32.f32 %v2643
      %v2660 = vcvt.s32.f32 %v2644
      %v2661 = vcvt.s32.f32 %v2645
      %2662 = vmatprep.subr.mxu0 0.0
      %2663 = vmatpush1.msra.mxu0 %v2661
      %2664 = vmatprep.subr.mxu0 0.0
      %2665 = vmatpush1.msra.mxu0 %v2660
      %2666 = vmatprep.subr.mxu0 0.0
      %2667 = vmatpush1.msra.mxu0 %v2659
      %2668 = vmatprep.subr.mxu0 0.0
      %2669 = vmatpush1.msra.mxu0 %v2658
      %2670 = vmatprep.subr.mxu0 0.0
      %2671 = vmatpush1.msra.mxu0 %v2657
      %2672 = vmatprep.subr.mxu0 0.0
      %2673 = vmatpush1.msra.mxu0 %v2656
      %2674 = vmatprep.subr.mxu0 0.0
      %2675 = vmatpush1.msra.mxu0 %v2655
      %2676 = vmatprep.subr.mxu0 0.0
      %2677 = vmatpush1.msra.mxu0 %v2654
      %2678 = vmatprep.subr.mxu0 0.0
      %2679 = vmatpush1.msra.mxu0 %v2653
      %2680 = vmatprep.subr.mxu0 0.0
      %2681 = vmatpush1.msra.mxu0 %v2652
      %2682 = vmatprep.subr.mxu0 0.0
      %2683 = vmatpush1.msra.mxu0 %v2651
      %2684 = vmatprep.subr.mxu0 0.0
      %2685 = vmatpush1.msra.mxu0 %v2650
      %2686 = vmatprep.subr.mxu0 0.0
      %2687 = vmatpush1.msra.mxu0 %v2649
      %2688 = vmatprep.subr.mxu0 0.0
      %2689 = vmatpush1.msra.mxu0 %v2648
      %2690 = vmatprep.subr.mxu0 0.0
      %2691 = vmatpush1.msra.mxu0 %v2647
      %2692 = vmatprep.subr.mxu0 0.0
      %2693 = vmatpush1.msra.mxu0 %v2646
      %2694 = vmatprep.subr.mxu0 0.0
      %2695 = vmatpush2.msra.mxu0 0.0
      %2696 = vmatprep.subr.mxu0 0.0
      %2697 = vmatpush2.msra.mxu0 0.0
      %2698 = vmatprep.subr.mxu0 0.0
      %2699 = vmatpush2.msra.mxu0 0.0
      %2700 = vmatprep.subr.mxu0 0.0
      %2701 = vmatpush2.msra.mxu0 0.0
      %2702 = vmatprep.subr.mxu0 0.0
      %2703 = vmatpush2.msra.mxu0 0.0
      %2704 = vmatprep.subr.mxu0 0.0
      %2705 = vmatpush2.msra.mxu0 0.0
      %2706 = vmatprep.subr.mxu0 0.0
      %2707 = vmatpush2.msra.mxu0 0.0
      %2708 = vmatprep.subr.mxu0 0.0
      %2709 = vmatpush2.msra.mxu0 0.0
      %2710 = vmatprep.subr.mxu0 0.0
      %2711 = vmatpush2.msra.mxu0 0.0
      %2712 = vmatprep.subr.mxu0 0.0
      %2713 = vmatpush2.msra.mxu0 0.0
      %2714 = vmatprep.subr.mxu0 0.0
      %2715 = vmatpush2.msra.mxu0 0.0
      %2716 = vmatprep.subr.mxu0 0.0
      %2717 = vmatpush2.msra.mxu0 0.0
      %2718 = vmatprep.subr.mxu0 0.0
      %2719 = vmatpush2.msra.mxu0 0.0
      %2720 = vmatprep.subr.mxu0 0.0
      %2721 = vmatpush2.msra.mxu0 0.0
      %2722 = vmatprep.subr.mxu0 0.0
      %2723 = vmatpush2.msra.mxu0 0.0
      %2724 = vmatprep.subr.mxu0 0.0
      %2725 = vmatpush2.msra.mxu0 0.0
      %2726 = vmatprep.mubr.f32.mxu0 0.0
      %2727 = vmatmul.mubr.f32.gmra.mxu0 %v2518
      %v2728 = vpop.f32.mrf.mxu0
      %v2729 = vadd.f32 0.0, %v2728
      %v2730 = vpop.f32.mrf.mxu0
      %2731 = vmatprep.mubr.f32.mxu0 0.0
      %2732 = vmatmul.mubr.f32.gmra.mxu0 %v2519
      %v2733 = vpop.f32.mrf.mxu0
      %v2734 = vadd.f32 0.0, %v2733
      %v2735 = vpop.f32.mrf.mxu0
      %2736 = vmatprep.mubr.f32.mxu0 0.0
      %2737 = vmatmul.mubr.f32.gmra.mxu0 %v2520
      %v2738 = vpop.f32.mrf.mxu0
      %v2739 = vadd.f32 0.0, %v2738
      %v2740 = vpop.f32.mrf.mxu0
      %2741 = vmatprep.mubr.f32.mxu0 0.0
      %2742 = vmatmul.mubr.f32.gmra.mxu0 %v2521
      %v2743 = vpop.f32.mrf.mxu0
      %v2744 = vadd.f32 0.0, %v2743
      %v2745 = vpop.f32.mrf.mxu0
      %2746 = vmatprep.mubr.f32.mxu0 0.0
      %2747 = vmatmul.mubr.f32.gmra.mxu0 %v2522
      %v2748 = vpop.f32.mrf.mxu0
      %v2749 = vadd.f32 0.0, %v2748
      %v2750 = vpop.f32.mrf.mxu0
      %2751 = vmatprep.mubr.f32.mxu0 0.0
      %2752 = vmatmul.mubr.f32.gmra.mxu0 %v2523
      %v2753 = vpop.f32.mrf.mxu0
      %v2754 = vadd.f32 0.0, %v2753
      %v2755 = vpop.f32.mrf.mxu0
      %2756 = vmatprep.mubr.f32.mxu0 0.0
      %2757 = vmatmul.mubr.f32.gmra.mxu0 %v2524
      %v2758 = vpop.f32.mrf.mxu0
      %v2759 = vadd.f32 0.0, %v2758
      %v2760 = vpop.f32.mrf.mxu0
      %2761 = vmatprep.mubr.f32.mxu0 0.0
      %2762 = vmatmul.mubr.f32.gmra.mxu0 %v2525
      %v2763 = vpop.f32.mrf.mxu0
      %v2764 = vadd.f32 0.0, %v2763
      %v2765 = vpop.f32.mrf.mxu0
      %2766 = vmatprep.mubr.f32.mxu0 0.0
      %2767 = vmatmul.mubr.f32.gmra.mxu0 %v2526
      %v2768 = vpop.f32.mrf.mxu0
      %v2769 = vadd.f32 0.0, %v2768
      %v2770 = vpop.f32.mrf.mxu0
      %2771 = vmatprep.mubr.f32.mxu0 0.0
      %2772 = vmatmul.mubr.f32.gmra.mxu0 %v2527
      %v2773 = vpop.f32.mrf.mxu0
      %v2774 = vadd.f32 0.0, %v2773
      %v2775 = vpop.f32.mrf.mxu0
      %2776 = vmatprep.mubr.f32.mxu0 0.0
      %2777 = vmatmul.mubr.f32.gmra.mxu0 %v2528
      %v2778 = vpop.f32.mrf.mxu0
      %v2779 = vadd.f32 0.0, %v2778
      %v2780 = vpop.f32.mrf.mxu0
      %2781 = vmatprep.mubr.f32.mxu0 0.0
      %2782 = vmatmul.mubr.f32.gmra.mxu0 %v2529
      %v2783 = vpop.f32.mrf.mxu0
      %v2784 = vadd.f32 0.0, %v2783
      %v2785 = vpop.f32.mrf.mxu0
      %2786 = vmatprep.mubr.f32.mxu0 0.0
      %2787 = vmatmul.mubr.f32.gmra.mxu0 %v2530
      %v2788 = vpop.f32.mrf.mxu0
      %v2789 = vadd.f32 0.0, %v2788
      %v2790 = vpop.f32.mrf.mxu0
      %2791 = vmatprep.mubr.f32.mxu0 0.0
      %2792 = vmatmul.mubr.f32.gmra.mxu0 %v2531
      %v2793 = vpop.f32.mrf.mxu0
      %v2794 = vadd.f32 0.0, %v2793
      %v2795 = vpop.f32.mrf.mxu0
      %2796 = vmatprep.mubr.f32.mxu0 0.0
      %2797 = vmatmul.mubr.f32.gmra.mxu0 %v2532
      %v2798 = vpop.f32.mrf.mxu0
      %v2799 = vadd.f32 0.0, %v2798
      %v2800 = vpop.f32.mrf.mxu0
      %2801 = vmatprep.mubr.f32.mxu0 0.0
      %2802 = vmatmul.mubr.f32.gmra.mxu0 %v2533
      %v2803 = vpop.f32.mrf.mxu0
      %v2804 = vadd.f32 0.0, %v2803
      %v2805 = vpop.f32.mrf.mxu0
      %2806 = vmatprep.mubr.f32.mxu0 0.0
      %2807 = vmatmul.mubr.f32.gmra.mxu0 %v2534
      %v2808 = vpop.f32.mrf.mxu0
      %v2809 = vadd.f32 0.0, %v2808
      %v2810 = vpop.f32.mrf.mxu0
      %2811 = vmatprep.mubr.f32.mxu0 0.0
      %2812 = vmatmul.mubr.f32.gmra.mxu0 %v2535
      %v2813 = vpop.f32.mrf.mxu0
      %v2814 = vadd.f32 0.0, %v2813
      %v2815 = vpop.f32.mrf.mxu0
      %2816 = vmatprep.mubr.f32.mxu0 0.0
      %2817 = vmatmul.mubr.f32.gmra.mxu0 %v2536
      %v2818 = vpop.f32.mrf.mxu0
      %v2819 = vadd.f32 0.0, %v2818
      %v2820 = vpop.f32.mrf.mxu0
      %2821 = vmatprep.mubr.f32.mxu0 0.0
      %2822 = vmatmul.mubr.f32.gmra.mxu0 %v2537
      %v2823 = vpop.f32.mrf.mxu0
      %v2824 = vadd.f32 0.0, %v2823
      %v2825 = vpop.f32.mrf.mxu0
      %2826 = vmatprep.mubr.f32.mxu0 0.0
      %2827 = vmatmul.mubr.f32.gmra.mxu0 %v2538
      %v2828 = vpop.f32.mrf.mxu0
      %v2829 = vadd.f32 0.0, %v2828
      %v2830 = vpop.f32.mrf.mxu0
      %2831 = vmatprep.mubr.f32.mxu0 0.0
      %2832 = vmatmul.mubr.f32.gmra.mxu0 %v2539
      %v2833 = vpop.f32.mrf.mxu0
      %v2834 = vadd.f32 0.0, %v2833
      %v2835 = vpop.f32.mrf.mxu0
      %2836 = vmatprep.mubr.f32.mxu0 0.0
      %2837 = vmatmul.mubr.f32.gmra.mxu0 %v2540
      %v2838 = vpop.f32.mrf.mxu0
      %v2839 = vadd.f32 0.0, %v2838
      %v2840 = vpop.f32.mrf.mxu0
      %2841 = vmatprep.mubr.f32.mxu0 0.0
      %2842 = vmatmul.mubr.f32.gmra.mxu0 %v2541
      %v2843 = vpop.f32.mrf.mxu0
      %v2844 = vadd.f32 0.0, %v2843
      %v2845 = vpop.f32.mrf.mxu0
      %2846 = vmatprep.mubr.f32.mxu0 0.0
      %2847 = vmatmul.mubr.f32.gmra.mxu0 %v2542
      %v2848 = vpop.f32.mrf.mxu0
      %v2849 = vadd.f32 0.0, %v2848
      %v2850 = vpop.f32.mrf.mxu0
      %2851 = vmatprep.mubr.f32.mxu0 0.0
      %2852 = vmatmul.mubr.f32.gmra.mxu0 %v2543
      %v2853 = vpop.f32.mrf.mxu0
      %v2854 = vadd.f32 0.0, %v2853
      %v2855 = vpop.f32.mrf.mxu0
      %2856 = vmatprep.mubr.f32.mxu0 0.0
      %2857 = vmatmul.mubr.f32.gmra.mxu0 %v2544
      %v2858 = vpop.f32.mrf.mxu0
      %v2859 = vadd.f32 0.0, %v2858
      %v2860 = vpop.f32.mrf.mxu0
      %2861 = vmatprep.mubr.f32.mxu0 0.0
      %2862 = vmatmul.mubr.f32.gmra.mxu0 %v2545
      %v2863 = vpop.f32.mrf.mxu0
      %v2864 = vadd.f32 0.0, %v2863
      %v2865 = vpop.f32.mrf.mxu0
      %2866 = vmatprep.mubr.f32.mxu0 0.0
      %2867 = vmatmul.mubr.f32.gmra.mxu0 %v2546
      %v2868 = vpop.f32.mrf.mxu0
      %v2869 = vadd.f32 0.0, %v2868
      %v2870 = vpop.f32.mrf.mxu0
      %2871 = vmatprep.mubr.f32.mxu0 0.0
      %2872 = vmatmul.mubr.f32.gmra.mxu0 %v2547
      %v2873 = vpop.f32.mrf.mxu0
      %v2874 = vadd.f32 0.0, %v2873
      %v2875 = vpop.f32.mrf.mxu0
      %2876 = vmatprep.mubr.f32.mxu0 0.0
      %2877 = vmatmul.mubr.f32.gmra.mxu0 %v2548
      %v2878 = vpop.f32.mrf.mxu0
      %v2879 = vadd.f32 0.0, %v2878
      %v2880 = vpop.f32.mrf.mxu0
      %2881 = vmatprep.mubr.f32.mxu0 0.0
      %2882 = vmatmul.mubr.f32.gmra.mxu0 %v2549
      %v2883 = vpop.f32.mrf.mxu0
      %v2884 = vadd.f32 0.0, %v2883
      %v2885 = vpop.f32.mrf.mxu0
      %2886 = vdwg.mxu0
      %2887 = vmatprep.subr.mxu0 0.0
      %2888 = vmatpush1.msra.mxu0 %v2804
      %2889 = vmatprep.subr.mxu0 0.0
      %2890 = vmatpush1.msra.mxu0 %v2799
      %2891 = vmatprep.subr.mxu0 0.0
      %2892 = vmatpush1.msra.mxu0 %v2794
      %2893 = vmatprep.subr.mxu0 0.0
      %2894 = vmatpush1.msra.mxu0 %v2789
      %2895 = vmatprep.subr.mxu0 0.0
      %2896 = vmatpush1.msra.mxu0 %v2784
      %2897 = vmatprep.subr.mxu0 0.0
      %2898 = vmatpush1.msra.mxu0 %v2779
      %2899 = vmatprep.subr.mxu0 0.0
      %2900 = vmatpush1.msra.mxu0 %v2774
      %2901 = vmatprep.subr.mxu0 0.0
      %2902 = vmatpush1.msra.mxu0 %v2769
      %2903 = vmatprep.subr.mxu0 0.0
      %2904 = vmatpush1.msra.mxu0 %v2764
      %2905 = vmatprep.subr.mxu0 0.0
      %2906 = vmatpush1.msra.mxu0 %v2759
      %2907 = vmatprep.subr.mxu0 0.0
      %2908 = vmatpush1.msra.mxu0 %v2754
      %2909 = vmatprep.subr.mxu0 0.0
      %2910 = vmatpush1.msra.mxu0 %v2749
      %2911 = vmatprep.subr.mxu0 0.0
      %2912 = vmatpush1.msra.mxu0 %v2744
      %2913 = vmatprep.subr.mxu0 0.0
      %2914 = vmatpush1.msra.mxu0 %v2739
      %2915 = vmatprep.subr.mxu0 0.0
      %2916 = vmatpush1.msra.mxu0 %v2734
      %2917 = vmatprep.subr.mxu0 0.0
      %2918 = vmatpush1.msra.mxu0 %v2729
      %2919 = vmatprep.subr.mxu0 0.0
      %2920 = vmatpush2.msra.mxu0 %v2884
      %2921 = vmatprep.subr.mxu0 0.0
      %2922 = vmatpush2.msra.mxu0 %v2879
      %2923 = vmatprep.subr.mxu0 0.0
      %2924 = vmatpush2.msra.mxu0 %v2874
      %2925 = vmatprep.subr.mxu0 0.0
      %2926 = vmatpush2.msra.mxu0 %v2869
      %2927 = vmatprep.subr.mxu0 0.0
      %2928 = vmatpush2.msra.mxu0 %v2864
      %2929 = vmatprep.subr.mxu0 0.0
      %2930 = vmatpush2.msra.mxu0 %v2859
      %2931 = vmatprep.subr.mxu0 0.0
      %2932 = vmatpush2.msra.mxu0 %v2854
      %2933 = vmatprep.subr.mxu0 0.0
      %2934 = vmatpush2.msra.mxu0 %v2849
      %2935 = vmatprep.subr.mxu0 0.0
      %2936 = vmatpush2.msra.mxu0 %v2844
      %2937 = vmatprep.subr.mxu0 0.0
      %2938 = vmatpush2.msra.mxu0 %v2839
      %2939 = vmatprep.subr.mxu0 0.0
      %2940 = vmatpush2.msra.mxu0 %v2834
      %2941 = vmatprep.subr.mxu0 0.0
      %2942 = vmatpush2.msra.mxu0 %v2829
      %2943 = vmatprep.subr.mxu0 0.0
      %2944 = vmatpush2.msra.mxu0 %v2824
      %2945 = vmatprep.subr.mxu0 0.0
      %2946 = vmatpush2.msra.mxu0 %v2819
      %2947 = vmatprep.subr.mxu0 0.0
      %2948 = vmatpush2.msra.mxu0 %v2814
      %2949 = vmatprep.subr.mxu0 0.0
      %2950 = vmatpush2.msra.mxu0 %v2809
      %2951 = vmatprep.mubr.f32.mxu0 1.0
      %2952 = vmatmul.mubr.f32.gmra.mxu0 1.0
      %v2953 = vpop.f32.mrf.mxu0
      %v2954 = vadd.f32 0.0, %v2953
      %v2955 = vpop.f32.mrf.mxu0
      %2956 = vdwg.mxu0
      %v2957 = vmul.f32 %v2954, 0.00390625
      %v2958 = vlaneseq
      %v2959 = vshrl.u32 %v2958, 7
      %v2960 = vsub.s32 0, %v2959
      %v2961 = vrot.slane %v2957, %v2960
      %v2962 = vsub.f32 %v2729, %v2961
      %v2963 = vsub.f32 %v2734, %v2961
      %v2964 = vsub.f32 %v2739, %v2961
      %v2965 = vsub.f32 %v2744, %v2961
      %v2966 = vsub.f32 %v2749, %v2961
      %v2967 = vsub.f32 %v2754, %v2961
      %v2968 = vsub.f32 %v2759, %v2961
      %v2969 = vsub.f32 %v2764, %v2961
      %v2970 = vsub.f32 %v2769, %v2961
      %v2971 = vsub.f32 %v2774, %v2961
      %v2972 = vsub.f32 %v2779, %v2961
      %v2973 = vsub.f32 %v2784, %v2961
      %v2974 = vsub.f32 %v2789, %v2961
      %v2975 = vsub.f32 %v2794, %v2961
      %v2976 = vsub.f32 %v2799, %v2961
      %v2977 = vsub.f32 %v2804, %v2961
      %v2978 = vsub.f32 %v2809, %v2961
      %v2979 = vsub.f32 %v2814, %v2961
      %v2980 = vsub.f32 %v2819, %v2961
      %v2981 = vsub.f32 %v2824, %v2961
      %v2982 = vsub.f32 %v2829, %v2961
      %v2983 = vsub.f32 %v2834, %v2961
      %v2984 = vsub.f32 %v2839, %v2961
      %v2985 = vsub.f32 %v2844, %v2961
      %v2986 = vsub.f32 %v2849, %v2961
      %v2987 = vsub.f32 %v2854, %v2961
      %v2988 = vsub.f32 %v2859, %v2961
      %v2989 = vsub.f32 %v2864, %v2961
      %v2990 = vsub.f32 %v2869, %v2961
      %v2991 = vsub.f32 %v2874, %v2961
      %v2992 = vsub.f32 %v2879, %v2961
      %v2993 = vsub.f32 %v2884, %v2961
      %v2994 = vmul.f32 %v2962, %v2962
      %v2995 = vmul.f32 %v2963, %v2963
      %v2996 = vmul.f32 %v2964, %v2964
      %v2997 = vmul.f32 %v2965, %v2965
      %v2998 = vmul.f32 %v2966, %v2966
      %v2999 = vmul.f32 %v2967, %v2967
      %v3000 = vmul.f32 %v2968, %v2968
      %v3001 = vmul.f32 %v2969, %v2969
      %v3002 = vmul.f32 %v2970, %v2970
      %v3003 = vmul.f32 %v2971, %v2971
      %v3004 = vmul.f32 %v2972, %v2972
      %v3005 = vmul.f32 %v2973, %v2973
      %v3006 = vmul.f32 %v2974, %v2974
      %v3007 = vmul.f32 %v2975, %v2975
      %v3008 = vmul.f32 %v2976, %v2976
      %v3009 = vmul.f32 %v2977, %v2977
      %v3010 = vmul.f32 %v2978, %v2978
      %v3011 = vmul.f32 %v2979, %v2979
      %v3012 = vmul.f32 %v2980, %v2980
      %v3013 = vmul.f32 %v2981, %v2981
      %v3014 = vmul.f32 %v2982, %v2982
      %v3015 = vmul.f32 %v2983, %v2983
      %v3016 = vmul.f32 %v2984, %v2984
      %v3017 = vmul.f32 %v2985, %v2985
      %v3018 = vmul.f32 %v2986, %v2986
      %v3019 = vmul.f32 %v2987, %v2987
      %v3020 = vmul.f32 %v2988, %v2988
      %v3021 = vmul.f32 %v2989, %v2989
      %v3022 = vmul.f32 %v2990, %v2990
      %v3023 = vmul.f32 %v2991, %v2991
      %v3024 = vmul.f32 %v2992, %v2992
      %v3025 = vmul.f32 %v2993, %v2993
      %3026 = vmatprep.subr.mxu0 0.0
      %3027 = vmatpush1.msra.mxu0 %v3009
      %3028 = vmatprep.subr.mxu0 0.0
      %3029 = vmatpush1.msra.mxu0 %v3008
      %3030 = vmatprep.subr.mxu0 0.0
      %3031 = vmatpush1.msra.mxu0 %v3007
      %3032 = vmatprep.subr.mxu0 0.0
      %3033 = vmatpush1.msra.mxu0 %v3006
      %3034 = vmatprep.subr.mxu0 0.0
      %3035 = vmatpush1.msra.mxu0 %v3005
      %3036 = vmatprep.subr.mxu0 0.0
      %3037 = vmatpush1.msra.mxu0 %v3004
      %3038 = vmatprep.subr.mxu0 0.0
      %3039 = vmatpush1.msra.mxu0 %v3003
      %3040 = vmatprep.subr.mxu0 0.0
      %3041 = vmatpush1.msra.mxu0 %v3002
      %3042 = vmatprep.subr.mxu0 0.0
      %3043 = vmatpush1.msra.mxu0 %v3001
      %3044 = vmatprep.subr.mxu0 0.0
      %3045 = vmatpush1.msra.mxu0 %v3000
      %3046 = vmatprep.subr.mxu0 0.0
      %3047 = vmatpush1.msra.mxu0 %v2999
      %3048 = vmatprep.subr.mxu0 0.0
      %3049 = vmatpush1.msra.mxu0 %v2998
      %3050 = vmatprep.subr.mxu0 0.0
      %3051 = vmatpush1.msra.mxu0 %v2997
      %3052 = vmatprep.subr.mxu0 0.0
      %3053 = vmatpush1.msra.mxu0 %v2996
      %3054 = vmatprep.subr.mxu0 0.0
      %3055 = vmatpush1.msra.mxu0 %v2995
      %3056 = vmatprep.subr.mxu0 0.0
      %3057 = vmatpush1.msra.mxu0 %v2994
      %3058 = vmatprep.subr.mxu0 0.0
      %3059 = vmatpush2.msra.mxu0 %v3025
      %3060 = vmatprep.subr.mxu0 0.0
      %3061 = vmatpush2.msra.mxu0 %v3024
      %3062 = vmatprep.subr.mxu0 0.0
      %3063 = vmatpush2.msra.mxu0 %v3023
      %3064 = vmatprep.subr.mxu0 0.0
      %3065 = vmatpush2.msra.mxu0 %v3022
      %3066 = vmatprep.subr.mxu0 0.0
      %3067 = vmatpush2.msra.mxu0 %v3021
      %3068 = vmatprep.subr.mxu0 0.0
      %3069 = vmatpush2.msra.mxu0 %v3020
      %3070 = vmatprep.subr.mxu0 0.0
      %3071 = vmatpush2.msra.mxu0 %v3019
      %3072 = vmatprep.subr.mxu0 0.0
      %3073 = vmatpush2.msra.mxu0 %v3018
      %3074 = vmatprep.subr.mxu0 0.0
      %3075 = vmatpush2.msra.mxu0 %v3017
      %3076 = vmatprep.subr.mxu0 0.0
      %3077 = vmatpush2.msra.mxu0 %v3016
      %3078 = vmatprep.subr.mxu0 0.0
      %3079 = vmatpush2.msra.mxu0 %v3015
      %3080 = vmatprep.subr.mxu0 0.0
      %3081 = vmatpush2.msra.mxu0 %v3014
      %3082 = vmatprep.subr.mxu0 0.0
      %3083 = vmatpush2.msra.mxu0 %v3013
      %3084 = vmatprep.subr.mxu0 0.0
      %3085 = vmatpush2.msra.mxu0 %v3012
      %3086 = vmatprep.subr.mxu0 0.0
      %3087 = vmatpush2.msra.mxu0 %v3011
      %3088 = vmatprep.subr.mxu0 0.0
      %3089 = vmatpush2.msra.mxu0 %v3010
      %3090 = vmatprep.mubr.f32.mxu0 1.0
      %3091 = vmatmul.mubr.f32.gmra.mxu0 1.0
      %v3092 = vpop.f32.mrf.mxu0
      %v3093 = vadd.f32 0.0, %v3092
      %v3094 = vpop.f32.mrf.mxu0
      %3095 = vdwg.mxu0
      %v3096 = vmul.f32 %v3093, 0.00390625
      %v3097 = vadd.f32 %v3096, 1e-05
      %v3098 = vrsqrt.pop %v3097
      %v3099 = vlaneseq
      %v3100 = vshrl.u32 %v3099, 7
      %v3101 = vsub.s32 0, %v3100
      %v3102 = vrot.slane %v3098, %v3101
      %v3103 = vmul.f32 %v2962, %v3102
      %v3104 = vmul.f32 %v2963, %v3102
      %v3105 = vmul.f32 %v2964, %v3102
      %v3106 = vmul.f32 %v2965, %v3102
      %v3107 = vmul.f32 %v2966, %v3102
      %v3108 = vmul.f32 %v2967, %v3102
      %v3109 = vmul.f32 %v2968, %v3102
      %v3110 = vmul.f32 %v2969, %v3102
      %v3111 = vmul.f32 %v2970, %v3102
      %v3112 = vmul.f32 %v2971, %v3102
      %v3113 = vmul.f32 %v2972, %v3102
      %v3114 = vmul.f32 %v2973, %v3102
      %v3115 = vmul.f32 %v2974, %v3102
      %v3116 = vmul.f32 %v2975, %v3102
      %v3117 = vmul.f32 %v2976, %v3102
      %v3118 = vmul.f32 %v2977, %v3102
      %v3119 = vmul.f32 %v2978, %v3102
      %v3120 = vmul.f32 %v2979, %v3102
      %v3121 = vmul.f32 %v2980, %v3102
      %v3122 = vmul.f32 %v2981, %v3102
      %v3123 = vmul.f32 %v2982, %v3102
      %v3124 = vmul.f32 %v2983, %v3102
      %v3125 = vmul.f32 %v2984, %v3102
      %v3126 = vmul.f32 %v2985, %v3102
      %v3127 = vmul.f32 %v2986, %v3102
      %v3128 = vmul.f32 %v2987, %v3102
      %v3129 = vmul.f32 %v2988, %v3102
      %v3130 = vmul.f32 %v2989, %v3102
      %v3131 = vmul.f32 %v2990, %v3102
      %v3132 = vmul.f32 %v2991, %v3102
      %v3133 = vmul.f32 %v2992, %v3102
      %v3134 = vmul.f32 %v2993, %v3102
      %v3135 = vld [vmem:[%s11] sm:$0xff]
      %v3136 = vld [vmem:[%s11 + $0x8] sm:$0xff]
      %v3137 = vld [vmem:[%s11 + $0x10] sm:$0xff]
      %v3138 = vld [vmem:[%s11 + $0x18] sm:$0xff]
      %v3139 = vld [vmem:[%s11 + $0x20] sm:$0xff]
      %v3140 = vld [vmem:[%s11 + $0x28] sm:$0xff]
      %v3141 = vld [vmem:[%s11 + $0x30] sm:$0xff]
      %v3142 = vld [vmem:[%s11 + $0x38] sm:$0xff]
      %v3143 = vld [vmem:[%s11 + $0x40] sm:$0xff]
      %v3144 = vld [vmem:[%s11 + $0x48] sm:$0xff]
      %v3145 = vld [vmem:[%s11 + $0x50] sm:$0xff]
      %v3146 = vld [vmem:[%s11 + $0x58] sm:$0xff]
      %v3147 = vld [vmem:[%s11 + $0x60] sm:$0xff]
      %v3148 = vld [vmem:[%s11 + $0x68] sm:$0xff]
      %v3149 = vld [vmem:[%s11 + $0x70] sm:$0xff]
      %v3150 = vld [vmem:[%s11 + $0x78] sm:$0xff]
      %v3151 = vld [vmem:[%s11 + $0x80] sm:$0xff]
      %v3152 = vld [vmem:[%s11 + $0x88] sm:$0xff]
      %v3153 = vld [vmem:[%s11 + $0x90] sm:$0xff]
      %v3154 = vld [vmem:[%s11 + $0x98] sm:$0xff]
      %v3155 = vld [vmem:[%s11 + $0xa0] sm:$0xff]
      %v3156 = vld [vmem:[%s11 + $0xa8] sm:$0xff]
      %v3157 = vld [vmem:[%s11 + $0xb0] sm:$0xff]
      %v3158 = vld [vmem:[%s11 + $0xb8] sm:$0xff]
      %v3159 = vld [vmem:[%s11 + $0xc0] sm:$0xff]
      %v3160 = vld [vmem:[%s11 + $0xc8] sm:$0xff]
      %v3161 = vld [vmem:[%s11 + $0xd0] sm:$0xff]
      %v3162 = vld [vmem:[%s11 + $0xd8] sm:$0xff]
      %v3163 = vld [vmem:[%s11 + $0xe0] sm:$0xff]
      %v3164 = vld [vmem:[%s11 + $0xe8] sm:$0xff]
      %v3165 = vld [vmem:[%s11 + $0xf0] sm:$0xff]
      %v3166 = vld [vmem:[%s11 + $0xf8] sm:$0xff]
      %v3167 = vpack.c.bf16 %v3104, %v3103
      %v3168 = vpack.c.bf16 %v3106, %v3105
      %v3169 = vpack.c.bf16 %v3108, %v3107
      %v3170 = vpack.c.bf16 %v3110, %v3109
      %v3171 = vpack.c.bf16 %v3112, %v3111
      %v3172 = vpack.c.bf16 %v3114, %v3113
      %v3173 = vpack.c.bf16 %v3116, %v3115
      %v3174 = vpack.c.bf16 %v3118, %v3117
      %v3175 = vpack.c.bf16 %v3120, %v3119
      %v3176 = vpack.c.bf16 %v3122, %v3121
      %v3177 = vpack.c.bf16 %v3124, %v3123
      %v3178 = vpack.c.bf16 %v3126, %v3125
      %v3179 = vpack.c.bf16 %v3128, %v3127
      %v3180 = vpack.c.bf16 %v3130, %v3129
      %v3181 = vpack.c.bf16 %v3132, %v3131
      %v3182 = vpack.c.bf16 %v3134, %v3133
      %v3215 = vunpack.c.l.b16 %v3135
      %v3216 = vunpack.c.h.b16 %v3135
      %v3217 = vunpack.c.l.b16 %v3136
      %v3218 = vunpack.c.h.b16 %v3136
      %v3219 = vunpack.c.l.b16 %v3137
      %v3220 = vunpack.c.h.b16 %v3137
      %v3221 = vunpack.c.l.b16 %v3138
      %v3222 = vunpack.c.h.b16 %v3138
      %v3223 = vunpack.c.l.b16 %v3139
      %v3224 = vunpack.c.h.b16 %v3139
      %v3225 = vunpack.c.l.b16 %v3140
      %v3226 = vunpack.c.h.b16 %v3140
      %v3227 = vunpack.c.l.b16 %v3141
      %v3228 = vunpack.c.h.b16 %v3141
      %v3229 = vunpack.c.l.b16 %v3142
      %v3230 = vunpack.c.h.b16 %v3142
      %v3231 = vunpack.c.l.b16 %v3143
      %v3232 = vunpack.c.h.b16 %v3143
      %v3233 = vunpack.c.l.b16 %v3144
      %v3234 = vunpack.c.h.b16 %v3144
      %v3235 = vunpack.c.l.b16 %v3145
      %v3236 = vunpack.c.h.b16 %v3145
      %v3237 = vunpack.c.l.b16 %v3146
      %v3238 = vunpack.c.h.b16 %v3146
      %v3239 = vunpack.c.l.b16 %v3147
      %v3240 = vunpack.c.h.b16 %v3147
      %v3241 = vunpack.c.l.b16 %v3148
      %v3242 = vunpack.c.h.b16 %v3148
      %v3243 = vunpack.c.l.b16 %v3149
      %v3244 = vunpack.c.h.b16 %v3149
      %v3245 = vunpack.c.l.b16 %v3150
      %v3246 = vunpack.c.h.b16 %v3150
      %v3247 = vunpack.c.l.b16 %v3151
      %v3248 = vunpack.c.h.b16 %v3151
      %v3249 = vunpack.c.l.b16 %v3152
      %v3250 = vunpack.c.h.b16 %v3152
      %v3251 = vunpack.c.l.b16 %v3153
      %v3252 = vunpack.c.h.b16 %v3153
      %v3253 = vunpack.c.l.b16 %v3154
      %v3254 = vunpack.c.h.b16 %v3154
      %v3255 = vunpack.c.l.b16 %v3155
      %v3256 = vunpack.c.h.b16 %v3155
      %v3257 = vunpack.c.l.b16 %v3156
      %v3258 = vunpack.c.h.b16 %v3156
      %v3259 = vunpack.c.l.b16 %v3157
      %v3260 = vunpack.c.h.b16 %v3157
      %v3261 = vunpack.c.l.b16 %v3158
      %v3262 = vunpack.c.h.b16 %v3158
      %v3263 = vunpack.c.l.b16 %v3159
      %v3264 = vunpack.c.h.b16 %v3159
      %v3265 = vunpack.c.l.b16 %v3160
      %v3266 = vunpack.c.h.b16 %v3160
      %v3267 = vunpack.c.l.b16 %v3161
      %v3268 = vunpack.c.h.b16 %v3161
      %v3269 = vunpack.c.l.b16 %v3162
      %v3270 = vunpack.c.h.b16 %v3162
      %v3271 = vunpack.c.l.b16 %v3163
      %v3272 = vunpack.c.h.b16 %v3163
      %v3273 = vunpack.c.l.b16 %v3164
      %v3274 = vunpack.c.h.b16 %v3164
      %v3275 = vunpack.c.l.b16 %v3165
      %v3276 = vunpack.c.h.b16 %v3165
      %v3277 = vunpack.c.l.b16 %v3166
      %v3278 = vunpack.c.h.b16 %v3166
      %v3279 = vpack.c.b16 %v3217, %v3215
      %v3280 = vpack.c.b16 %v3218, %v3216
      %v3281 = vpack.c.b16 %v3221, %v3219
      %v3282 = vpack.c.b16 %v3222, %v3220
      %v3283 = vpack.c.b16 %v3225, %v3223
      %v3284 = vpack.c.b16 %v3226, %v3224
      %v3285 = vpack.c.b16 %v3229, %v3227
      %v3286 = vpack.c.b16 %v3230, %v3228
      %v3287 = vpack.c.b16 %v3233, %v3231
      %v3288 = vpack.c.b16 %v3234, %v3232
      %v3289 = vpack.c.b16 %v3237, %v3235
      %v3290 = vpack.c.b16 %v3238, %v3236
      %v3291 = vpack.c.b16 %v3241, %v3239
      %v3292 = vpack.c.b16 %v3242, %v3240
      %v3293 = vpack.c.b16 %v3245, %v3243
      %v3294 = vpack.c.b16 %v3246, %v3244
      %v3295 = vpack.c.b16 %v3249, %v3247
      %v3296 = vpack.c.b16 %v3250, %v3248
      %v3297 = vpack.c.b16 %v3253, %v3251
      %v3298 = vpack.c.b16 %v3254, %v3252
      %v3299 = vpack.c.b16 %v3257, %v3255
      %v3300 = vpack.c.b16 %v3258, %v3256
      %v3301 = vpack.c.b16 %v3261, %v3259
      %v3302 = vpack.c.b16 %v3262, %v3260
      %v3303 = vpack.c.b16 %v3265, %v3263
      %v3304 = vpack.c.b16 %v3266, %v3264
      %v3305 = vpack.c.b16 %v3269, %v3267
      %v3306 = vpack.c.b16 %v3270, %v3268
      %v3307 = vpack.c.b16 %v3273, %v3271
      %v3308 = vpack.c.b16 %v3274, %v3272
      %v3309 = vpack.c.b16 %v3277, %v3275
      %v3310 = vpack.c.b16 %v3278, %v3276
      %3343 = vmatprep.subr.bf16.mxu0 0
      %3344 = vmatpush1.bf16.msra.mxu0 %v3174
      %3345 = vmatprep.subr.bf16.mxu0 0
      %3346 = vmatpush1.bf16.msra.mxu0 %v3173
      %3347 = vmatprep.subr.bf16.mxu0 0
      %3348 = vmatpush1.bf16.msra.mxu0 %v3172
      %3349 = vmatprep.subr.bf16.mxu0 0
      %3350 = vmatpush1.bf16.msra.mxu0 %v3171
      %3351 = vmatprep.subr.bf16.mxu0 0
      %3352 = vmatpush1.bf16.msra.mxu0 %v3170
      %3353 = vmatprep.subr.bf16.mxu0 0
      %3354 = vmatpush1.bf16.msra.mxu0 %v3169
      %3355 = vmatprep.subr.bf16.mxu0 0
      %3356 = vmatpush1.bf16.msra.mxu0 %v3168
      %3357 = vmatprep.subr.bf16.mxu0 0
      %3358 = vmatpush1.bf16.msra.mxu0 %v3167
      %3359 = vmatprep.subr.bf16.mxu0 0
      %3360 = vmatpush2.bf16.msra.mxu0 %v3182
      %3361 = vmatprep.subr.bf16.mxu0 0
      %3362 = vmatpush2.bf16.msra.mxu0 %v3181
      %3363 = vmatprep.subr.bf16.mxu0 0
      %3364 = vmatpush2.bf16.msra.mxu0 %v3180
      %3365 = vmatprep.subr.bf16.mxu0 0
      %3366 = vmatpush2.bf16.msra.mxu0 %v3179
      %3367 = vmatprep.subr.bf16.mxu0 0
      %3368 = vmatpush2.bf16.msra.mxu0 %v3178
      %3369 = vmatprep.subr.bf16.mxu0 0
      %3370 = vmatpush2.bf16.msra.mxu0 %v3177
      %3371 = vmatprep.subr.bf16.mxu0 0
      %3372 = vmatpush2.bf16.msra.mxu0 %v3176
      %3373 = vmatprep.subr.bf16.mxu0 0
      %3374 = vmatpush2.bf16.msra.mxu0 %v3175
      %3375 = vmatprep.mubr.bf16.mxu0 %v3280
      %3376 = vmatmul.mubr.bf16.gmra.mxu0 %v3279
      %v3377 = vpop.f32.mrf.mxu0
      %v3378 = vadd.f32 0.0, %v3377
      %v3379 = vpop.f32.mrf.mxu0
      %v3380 = vpop.f32.mrf.mxu0
      %v3381 = vadd.f32 0.0, %v3380
      %v3382 = vpop.f32.mrf.mxu0
      %3383 = vmatprep.mubr.bf16.mxu0 %v3282
      %3384 = vmatmul.mubr.bf16.gmra.mxu0 %v3281
      %v3385 = vpop.f32.mrf.mxu0
      %v3386 = vadd.f32 0.0, %v3385
      %v3387 = vpop.f32.mrf.mxu0
      %v3388 = vpop.f32.mrf.mxu0
      %v3389 = vadd.f32 0.0, %v3388
      %v3390 = vpop.f32.mrf.mxu0
      %3391 = vmatprep.mubr.bf16.mxu0 %v3284
      %3392 = vmatmul.mubr.bf16.gmra.mxu0 %v3283
      %v3393 = vpop.f32.mrf.mxu0
      %v3394 = vadd.f32 0.0, %v3393
      %v3395 = vpop.f32.mrf.mxu0
      %v3396 = vpop.f32.mrf.mxu0
      %v3397 = vadd.f32 0.0, %v3396
      %v3398 = vpop.f32.mrf.mxu0
      %3399 = vmatprep.mubr.bf16.mxu0 %v3286
      %3400 = vmatmul.mubr.bf16.gmra.mxu0 %v3285
      %v3401 = vpop.f32.mrf.mxu0
      %v3402 = vadd.f32 0.0, %v3401
      %v3403 = vpop.f32.mrf.mxu0
      %v3404 = vpop.f32.mrf.mxu0
      %v3405 = vadd.f32 0.0, %v3404
      %v3406 = vpop.f32.mrf.mxu0
      %3407 = vmatprep.mubr.bf16.mxu0 %v3288
      %3408 = vmatmul.mubr.bf16.gmra.mxu0 %v3287
      %v3409 = vpop.f32.mrf.mxu0
      %v3410 = vadd.f32 0.0, %v3409
      %v3411 = vpop.f32.mrf.mxu0
      %v3412 = vpop.f32.mrf.mxu0
      %v3413 = vadd.f32 0.0, %v3412
      %v3414 = vpop.f32.mrf.mxu0
      %3415 = vmatprep.mubr.bf16.mxu0 %v3290
      %3416 = vmatmul.mubr.bf16.gmra.mxu0 %v3289
      %v3417 = vpop.f32.mrf.mxu0
      %v3418 = vadd.f32 0.0, %v3417
      %v3419 = vpop.f32.mrf.mxu0
      %v3420 = vpop.f32.mrf.mxu0
      %v3421 = vadd.f32 0.0, %v3420
      %v3422 = vpop.f32.mrf.mxu0
      %3423 = vmatprep.mubr.bf16.mxu0 %v3292
      %3424 = vmatmul.mubr.bf16.gmra.mxu0 %v3291
      %v3425 = vpop.f32.mrf.mxu0
      %v3426 = vadd.f32 0.0, %v3425
      %v3427 = vpop.f32.mrf.mxu0
      %v3428 = vpop.f32.mrf.mxu0
      %v3429 = vadd.f32 0.0, %v3428
      %v3430 = vpop.f32.mrf.mxu0
      %3431 = vmatprep.mubr.bf16.mxu0 %v3294
      %3432 = vmatmul.mubr.bf16.gmra.mxu0 %v3293
      %v3433 = vpop.f32.mrf.mxu0
      %v3434 = vadd.f32 0.0, %v3433
      %v3435 = vpop.f32.mrf.mxu0
      %v3436 = vpop.f32.mrf.mxu0
      %v3437 = vadd.f32 0.0, %v3436
      %v3438 = vpop.f32.mrf.mxu0
      %3439 = vmatprep.mubr.bf16.mxu0 %v3296
      %3440 = vmatmul.mubr.bf16.gmra.mxu0 %v3295
      %v3441 = vpop.f32.mrf.mxu0
      %v3442 = vadd.f32 0.0, %v3441
      %v3443 = vpop.f32.mrf.mxu0
      %v3444 = vpop.f32.mrf.mxu0
      %v3445 = vadd.f32 0.0, %v3444
      %v3446 = vpop.f32.mrf.mxu0
      %3447 = vmatprep.mubr.bf16.mxu0 %v3298
      %3448 = vmatmul.mubr.bf16.gmra.mxu0 %v3297
      %v3449 = vpop.f32.mrf.mxu0
      %v3450 = vadd.f32 0.0, %v3449
      %v3451 = vpop.f32.mrf.mxu0
      %v3452 = vpop.f32.mrf.mxu0
      %v3453 = vadd.f32 0.0, %v3452
      %v3454 = vpop.f32.mrf.mxu0
      %3455 = vmatprep.mubr.bf16.mxu0 %v3300
      %3456 = vmatmul.mubr.bf16.gmra.mxu0 %v3299
      %v3457 = vpop.f32.mrf.mxu0
      %v3458 = vadd.f32 0.0, %v3457
      %v3459 = vpop.f32.mrf.mxu0
      %v3460 = vpop.f32.mrf.mxu0
      %v3461 = vadd.f32 0.0, %v3460
      %v3462 = vpop.f32.mrf.mxu0
      %3463 = vmatprep.mubr.bf16.mxu0 %v3302
      %3464 = vmatmul.mubr.bf16.gmra.mxu0 %v3301
      %v3465 = vpop.f32.mrf.mxu0
      %v3466 = vadd.f32 0.0, %v3465
      %v3467 = vpop.f32.mrf.mxu0
      %v3468 = vpop.f32.mrf.mxu0
      %v3469 = vadd.f32 0.0, %v3468
      %v3470 = vpop.f32.mrf.mxu0
      %3471 = vmatprep.mubr.bf16.mxu0 %v3304
      %3472 = vmatmul.mubr.bf16.gmra.mxu0 %v3303
      %v3473 = vpop.f32.mrf.mxu0
      %v3474 = vadd.f32 0.0, %v3473
      %v3475 = vpop.f32.mrf.mxu0
      %v3476 = vpop.f32.mrf.mxu0
      %v3477 = vadd.f32 0.0, %v3476
      %v3478 = vpop.f32.mrf.mxu0
      %3479 = vmatprep.mubr.bf16.mxu0 %v3306
      %3480 = vmatmul.mubr.bf16.gmra.mxu0 %v3305
      %v3481 = vpop.f32.mrf.mxu0
      %v3482 = vadd.f32 0.0, %v3481
      %v3483 = vpop.f32.mrf.mxu0
      %v3484 = vpop.f32.mrf.mxu0
      %v3485 = vadd.f32 0.0, %v3484
      %v3486 = vpop.f32.mrf.mxu0
      %3487 = vmatprep.mubr.bf16.mxu0 %v3308
      %3488 = vmatmul.mubr.bf16.gmra.mxu0 %v3307
      %v3489 = vpop.f32.mrf.mxu0
      %v3490 = vadd.f32 0.0, %v3489
      %v3491 = vpop.f32.mrf.mxu0
      %v3492 = vpop.f32.mrf.mxu0
      %v3493 = vadd.f32 0.0, %v3492
      %v3494 = vpop.f32.mrf.mxu0
      %3495 = vmatprep.mubr.bf16.mxu0 %v3310
      %3496 = vmatmul.mubr.bf16.gmra.mxu0 %v3309
      %v3497 = vpop.f32.mrf.mxu0
      %v3498 = vadd.f32 0.0, %v3497
      %v3499 = vpop.f32.mrf.mxu0
      %v3500 = vpop.f32.mrf.mxu0
      %v3501 = vadd.f32 0.0, %v3500
      %v3502 = vpop.f32.mrf.mxu0
      %3503 = vdwg.mxu0
      %v3504 = vmax.f32 %v3378, 0.0
      %v3505 = vmax.f32 %v3381, 0.0
      %v3506 = vmax.f32 %v3386, 0.0
      %v3507 = vmax.f32 %v3389, 0.0
      %v3508 = vmax.f32 %v3394, 0.0
      %v3509 = vmax.f32 %v3397, 0.0
      %v3510 = vmax.f32 %v3402, 0.0
      %v3511 = vmax.f32 %v3405, 0.0
      %v3512 = vmax.f32 %v3410, 0.0
      %v3513 = vmax.f32 %v3413, 0.0
      %v3514 = vmax.f32 %v3418, 0.0
      %v3515 = vmax.f32 %v3421, 0.0
      %v3516 = vmax.f32 %v3426, 0.0
      %v3517 = vmax.f32 %v3429, 0.0
      %v3518 = vmax.f32 %v3434, 0.0
      %v3519 = vmax.f32 %v3437, 0.0
      %v3520 = vmax.f32 %v3442, 0.0
      %v3521 = vmax.f32 %v3445, 0.0
      %v3522 = vmax.f32 %v3450, 0.0
      %v3523 = vmax.f32 %v3453, 0.0
      %v3524 = vmax.f32 %v3458, 0.0
      %v3525 = vmax.f32 %v3461, 0.0
      %v3526 = vmax.f32 %v3466, 0.0
      %v3527 = vmax.f32 %v3469, 0.0
      %v3528 = vmax.f32 %v3474, 0.0
      %v3529 = vmax.f32 %v3477, 0.0
      %v3530 = vmax.f32 %v3482, 0.0
      %v3531 = vmax.f32 %v3485, 0.0
      %v3532 = vmax.f32 %v3490, 0.0
      %v3533 = vmax.f32 %v3493, 0.0
      %v3534 = vmax.f32 %v3498, 0.0
      %v3535 = vmax.f32 %v3501, 0.0
      %v3536 = vld [vmem:[%s12] sm:$0xff]
      %v3537 = vld [vmem:[%s12 + $0x8] sm:$0xff]
      %v3538 = vld [vmem:[%s12 + $0x10] sm:$0xff]
      %v3539 = vld [vmem:[%s12 + $0x18] sm:$0xff]
      %v3540 = vld [vmem:[%s12 + $0x20] sm:$0xff]
      %v3541 = vld [vmem:[%s12 + $0x28] sm:$0xff]
      %v3542 = vld [vmem:[%s12 + $0x30] sm:$0xff]
      %v3543 = vld [vmem:[%s12 + $0x38] sm:$0xff]
      %v3544 = vld [vmem:[%s12 + $0x40] sm:$0xff]
      %v3545 = vld [vmem:[%s12 + $0x48] sm:$0xff]
      %v3546 = vld [vmem:[%s12 + $0x50] sm:$0xff]
      %v3547 = vld [vmem:[%s12 + $0x58] sm:$0xff]
      %v3548 = vld [vmem:[%s12 + $0x60] sm:$0xff]
      %v3549 = vld [vmem:[%s12 + $0x68] sm:$0xff]
      %v3550 = vld [vmem:[%s12 + $0x70] sm:$0xff]
      %v3551 = vld [vmem:[%s12 + $0x78] sm:$0xff]
      %v3552 = vld [vmem:[%s12 + $0x80] sm:$0xff]
      %v3553 = vld [vmem:[%s12 + $0x88] sm:$0xff]
      %v3554 = vld [vmem:[%s12 + $0x90] sm:$0xff]
      %v3555 = vld [vmem:[%s12 + $0x98] sm:$0xff]
      %v3556 = vld [vmem:[%s12 + $0xa0] sm:$0xff]
      %v3557 = vld [vmem:[%s12 + $0xa8] sm:$0xff]
      %v3558 = vld [vmem:[%s12 + $0xb0] sm:$0xff]
      %v3559 = vld [vmem:[%s12 + $0xb8] sm:$0xff]
      %v3560 = vld [vmem:[%s12 + $0xc0] sm:$0xff]
      %v3561 = vld [vmem:[%s12 + $0xc8] sm:$0xff]
      %v3562 = vld [vmem:[%s12 + $0xd0] sm:$0xff]
      %v3563 = vld [vmem:[%s12 + $0xd8] sm:$0xff]
      %v3564 = vld [vmem:[%s12 + $0xe0] sm:$0xff]
      %v3565 = vld [vmem:[%s12 + $0xe8] sm:$0xff]
      %v3566 = vld [vmem:[%s12 + $0xf0] sm:$0xff]
      %v3567 = vld [vmem:[%s12 + $0xf8] sm:$0xff]
      %v3568 = vpack.c.bf16 %v3505, %v3504
      %v3569 = vpack.c.bf16 %v3507, %v3506
      %v3570 = vpack.c.bf16 %v3509, %v3508
      %v3571 = vpack.c.bf16 %v3511, %v3510
      %v3572 = vpack.c.bf16 %v3513, %v3512
      %v3573 = vpack.c.bf16 %v3515, %v3514
      %v3574 = vpack.c.bf16 %v3517, %v3516
      %v3575 = vpack.c.bf16 %v3519, %v3518
      %v3576 = vpack.c.bf16 %v3521, %v3520
      %v3577 = vpack.c.bf16 %v3523, %v3522
      %v3578 = vpack.c.bf16 %v3525, %v3524
      %v3579 = vpack.c.bf16 %v3527, %v3526
      %v3580 = vpack.c.bf16 %v3529, %v3528
      %v3581 = vpack.c.bf16 %v3531, %v3530
      %v3582 = vpack.c.bf16 %v3533, %v3532
      %v3583 = vpack.c.bf16 %v3535, %v3534
      %v3616 = vunpack.c.l.b16 %v3536
      %v3617 = vunpack.c.h.b16 %v3536
      %v3618 = vunpack.c.l.b16 %v3537
      %v3619 = vunpack.c.h.b16 %v3537
      %v3620 = vunpack.c.l.b16 %v3538
      %v3621 = vunpack.c.h.b16 %v3538
      %v3622 = vunpack.c.l.b16 %v3539
      %v3623 = vunpack.c.h.b16 %v3539
      %v3624 = vunpack.c.l.b16 %v3540
      %v3625 = vunpack.c.h.b16 %v3540
      %v3626 = vunpack.c.l.b16 %v3541
      %v3627 = vunpack.c.h.b16 %v3541
      %v3628 = vunpack.c.l.b16 %v3542
      %v3629 = vunpack.c.h.b16 %v3542
      %v3630 = vunpack.c.l.b16 %v3543
      %v3631 = vunpack.c.h.b16 %v3543
      %v3632 = vunpack.c.l.b16 %v3544
      %v3633 = vunpack.c.h.b16 %v3544
      %v3634 = vunpack.c.l.b16 %v3545
      %v3635 = vunpack.c.h.b16 %v3545
      %v3636 = vunpack.c.l.b16 %v3546
      %v3637 = vunpack.c.h.b16 %v3546
      %v3638 = vunpack.c.l.b16 %v3547
      %v3639 = vunpack.c.h.b16 %v3547
      %v3640 = vunpack.c.l.b16 %v3548
      %v3641 = vunpack.c.h.b16 %v3548
      %v3642 = vunpack.c.l.b16 %v3549
      %v3643 = vunpack.c.h.b16 %v3549
      %v3644 = vunpack.c.l.b16 %v3550
      %v3645 = vunpack.c.h.b16 %v3550
      %v3646 = vunpack.c.l.b16 %v3551
      %v3647 = vunpack.c.h.b16 %v3551
      %v3648 = vunpack.c.l.b16 %v3552
      %v3649 = vunpack.c.h.b16 %v3552
      %v3650 = vunpack.c.l.b16 %v3553
      %v3651 = vunpack.c.h.b16 %v3553
      %v3652 = vunpack.c.l.b16 %v3554
      %v3653 = vunpack.c.h.b16 %v3554
      %v3654 = vunpack.c.l.b16 %v3555
      %v3655 = vunpack.c.h.b16 %v3555
      %v3656 = vunpack.c.l.b16 %v3556
      %v3657 = vunpack.c.h.b16 %v3556
      %v3658 = vunpack.c.l.b16 %v3557
      %v3659 = vunpack.c.h.b16 %v3557
      %v3660 = vunpack.c.l.b16 %v3558
      %v3661 = vunpack.c.h.b16 %v3558
      %v3662 = vunpack.c.l.b16 %v3559
      %v3663 = vunpack.c.h.b16 %v3559
      %v3664 = vunpack.c.l.b16 %v3560
      %v3665 = vunpack.c.h.b16 %v3560
      %v3666 = vunpack.c.l.b16 %v3561
      %v3667 = vunpack.c.h.b16 %v3561
      %v3668 = vunpack.c.l.b16 %v3562
      %v3669 = vunpack.c.h.b16 %v3562
      %v3670 = vunpack.c.l.b16 %v3563
      %v3671 = vunpack.c.h.b16 %v3563
      %v3672 = vunpack.c.l.b16 %v3564
      %v3673 = vunpack.c.h.b16 %v3564
      %v3674 = vunpack.c.l.b16 %v3565
      %v3675 = vunpack.c.h.b16 %v3565
      %v3676 = vunpack.c.l.b16 %v3566
      %v3677 = vunpack.c.h.b16 %v3566
      %v3678 = vunpack.c.l.b16 %v3567
      %v3679 = vunpack.c.h.b16 %v3567
      %v3680 = vpack.c.b16 %v3618, %v3616
      %v3681 = vpack.c.b16 %v3619, %v3617
      %v3682 = vpack.c.b16 %v3622, %v3620
      %v3683 = vpack.c.b16 %v3623, %v3621
      %v3684 = vpack.c.b16 %v3626, %v3624
      %v3685 = vpack.c.b16 %v3627, %v3625
      %v3686 = vpack.c.b16 %v3630, %v3628
      %v3687 = vpack.c.b16 %v3631, %v3629
      %v3688 = vpack.c.b16 %v3634, %v3632
      %v3689 = vpack.c.b16 %v3635, %v3633
      %v3690 = vpack.c.b16 %v3638, %v3636
      %v3691 = vpack.c.b16 %v3639, %v3637
      %v3692 = vpack.c.b16 %v3642, %v3640
      %v3693 = vpack.c.b16 %v3643, %v3641
      %v3694 = vpack.c.b16 %v3646, %v3644
      %v3695 = vpack.c.b16 %v3647, %v3645
      %v3696 = vpack.c.b16 %v3650, %v3648
      %v3697 = vpack.c.b16 %v3651, %v3649
      %v3698 = vpack.c.b16 %v3654, %v3652
      %v3699 = vpack.c.b16 %v3655, %v3653
      %v3700 = vpack.c.b16 %v3658, %v3656
      %v3701 = vpack.c.b16 %v3659, %v3657
      %v3702 = vpack.c.b16 %v3662, %v3660
      %v3703 = vpack.c.b16 %v3663, %v3661
      %v3704 = vpack.c.b16 %v3666, %v3664
      %v3705 = vpack.c.b16 %v3667, %v3665
      %v3706 = vpack.c.b16 %v3670, %v3668
      %v3707 = vpack.c.b16 %v3671, %v3669
      %v3708 = vpack.c.b16 %v3674, %v3672
      %v3709 = vpack.c.b16 %v3675, %v3673
      %v3710 = vpack.c.b16 %v3678, %v3676
      %v3711 = vpack.c.b16 %v3679, %v3677
      %3744 = vmatprep.subr.bf16.mxu0 0
      %3745 = vmatpush1.bf16.msra.mxu0 %v3575
      %3746 = vmatprep.subr.bf16.mxu0 0
      %3747 = vmatpush1.bf16.msra.mxu0 %v3574
      %3748 = vmatprep.subr.bf16.mxu0 0
      %3749 = vmatpush1.bf16.msra.mxu0 %v3573
      %3750 = vmatprep.subr.bf16.mxu0 0
      %3751 = vmatpush1.bf16.msra.mxu0 %v3572
      %3752 = vmatprep.subr.bf16.mxu0 0
      %3753 = vmatpush1.bf16.msra.mxu0 %v3571
      %3754 = vmatprep.subr.bf16.mxu0 0
      %3755 = vmatpush1.bf16.msra.mxu0 %v3570
      %3756 = vmatprep.subr.bf16.mxu0 0
      %3757 = vmatpush1.bf16.msra.mxu0 %v3569
      %3758 = vmatprep.subr.bf16.mxu0 0
      %3759 = vmatpush1.bf16.msra.mxu0 %v3568
      %3760 = vmatprep.subr.bf16.mxu0 0
      %3761 = vmatpush2.bf16.msra.mxu0 %v3583
      %3762 = vmatprep.subr.bf16.mxu0 0
      %3763 = vmatpush2.bf16.msra.mxu0 %v3582
      %3764 = vmatprep.subr.bf16.mxu0 0
      %3765 = vmatpush2.bf16.msra.mxu0 %v3581
      %3766 = vmatprep.subr.bf16.mxu0 0
      %3767 = vmatpush2.bf16.msra.mxu0 %v3580
      %3768 = vmatprep.subr.bf16.mxu0 0
      %3769 = vmatpush2.bf16.msra.mxu0 %v3579
      %3770 = vmatprep.subr.bf16.mxu0 0
      %3771 = vmatpush2.bf16.msra.mxu0 %v3578
      %3772 = vmatprep.subr.bf16.mxu0 0
      %3773 = vmatpush2.bf16.msra.mxu0 %v3577
      %3774 = vmatprep.subr.bf16.mxu0 0
      %3775 = vmatpush2.bf16.msra.mxu0 %v3576
      %3776 = vmatprep.mubr.bf16.mxu0 %v3681
      %3777 = vmatmul.mubr.bf16.gmra.mxu0 %v3680
      %v3778 = vpop.f32.mrf.mxu0
      %v3779 = vadd.f32 0.0, %v3778
      %v3780 = vpop.f32.mrf.mxu0
      %v3781 = vpop.f32.mrf.mxu0
      %v3782 = vadd.f32 0.0, %v3781
      %v3783 = vpop.f32.mrf.mxu0
      %3784 = vmatprep.mubr.bf16.mxu0 %v3683
      %3785 = vmatmul.mubr.bf16.gmra.mxu0 %v3682
      %v3786 = vpop.f32.mrf.mxu0
      %v3787 = vadd.f32 0.0, %v3786
      %v3788 = vpop.f32.mrf.mxu0
      %v3789 = vpop.f32.mrf.mxu0
      %v3790 = vadd.f32 0.0, %v3789
      %v3791 = vpop.f32.mrf.mxu0
      %3792 = vmatprep.mubr.bf16.mxu0 %v3685
      %3793 = vmatmul.mubr.bf16.gmra.mxu0 %v3684
      %v3794 = vpop.f32.mrf.mxu0
      %v3795 = vadd.f32 0.0, %v3794
      %v3796 = vpop.f32.mrf.mxu0
      %v3797 = vpop.f32.mrf.mxu0
      %v3798 = vadd.f32 0.0, %v3797
      %v3799 = vpop.f32.mrf.mxu0
      %3800 = vmatprep.mubr.bf16.mxu0 %v3687
      %3801 = vmatmul.mubr.bf16.gmra.mxu0 %v3686
      %v3802 = vpop.f32.mrf.mxu0
      %v3803 = vadd.f32 0.0, %v3802
      %v3804 = vpop.f32.mrf.mxu0
      %v3805 = vpop.f32.mrf.mxu0
      %v3806 = vadd.f32 0.0, %v3805
      %v3807 = vpop.f32.mrf.mxu0
      %3808 = vmatprep.mubr.bf16.mxu0 %v3689
      %3809 = vmatmul.mubr.bf16.gmra.mxu0 %v3688
      %v3810 = vpop.f32.mrf.mxu0
      %v3811 = vadd.f32 0.0, %v3810
      %v3812 = vpop.f32.mrf.mxu0
      %v3813 = vpop.f32.mrf.mxu0
      %v3814 = vadd.f32 0.0, %v3813
      %v3815 = vpop.f32.mrf.mxu0
      %3816 = vmatprep.mubr.bf16.mxu0 %v3691
      %3817 = vmatmul.mubr.bf16.gmra.mxu0 %v3690
      %v3818 = vpop.f32.mrf.mxu0
      %v3819 = vadd.f32 0.0, %v3818
      %v3820 = vpop.f32.mrf.mxu0
      %v3821 = vpop.f32.mrf.mxu0
      %v3822 = vadd.f32 0.0, %v3821
      %v3823 = vpop.f32.mrf.mxu0
      %3824 = vmatprep.mubr.bf16.mxu0 %v3693
      %3825 = vmatmul.mubr.bf16.gmra.mxu0 %v3692
      %v3826 = vpop.f32.mrf.mxu0
      %v3827 = vadd.f32 0.0, %v3826
      %v3828 = vpop.f32.mrf.mxu0
      %v3829 = vpop.f32.mrf.mxu0
      %v3830 = vadd.f32 0.0, %v3829
      %v3831 = vpop.f32.mrf.mxu0
      %3832 = vmatprep.mubr.bf16.mxu0 %v3695
      %3833 = vmatmul.mubr.bf16.gmra.mxu0 %v3694
      %v3834 = vpop.f32.mrf.mxu0
      %v3835 = vadd.f32 0.0, %v3834
      %v3836 = vpop.f32.mrf.mxu0
      %v3837 = vpop.f32.mrf.mxu0
      %v3838 = vadd.f32 0.0, %v3837
      %v3839 = vpop.f32.mrf.mxu0
      %3840 = vmatprep.mubr.bf16.mxu0 %v3697
      %3841 = vmatmul.mubr.bf16.gmra.mxu0 %v3696
      %v3842 = vpop.f32.mrf.mxu0
      %v3843 = vadd.f32 0.0, %v3842
      %v3844 = vpop.f32.mrf.mxu0
      %v3845 = vpop.f32.mrf.mxu0
      %v3846 = vadd.f32 0.0, %v3845
      %v3847 = vpop.f32.mrf.mxu0
      %3848 = vmatprep.mubr.bf16.mxu0 %v3699
      %3849 = vmatmul.mubr.bf16.gmra.mxu0 %v3698
      %v3850 = vpop.f32.mrf.mxu0
      %v3851 = vadd.f32 0.0, %v3850
      %v3852 = vpop.f32.mrf.mxu0
      %v3853 = vpop.f32.mrf.mxu0
      %v3854 = vadd.f32 0.0, %v3853
      %v3855 = vpop.f32.mrf.mxu0
      %3856 = vmatprep.mubr.bf16.mxu0 %v3701
      %3857 = vmatmul.mubr.bf16.gmra.mxu0 %v3700
      %v3858 = vpop.f32.mrf.mxu0
      %v3859 = vadd.f32 0.0, %v3858
      %v3860 = vpop.f32.mrf.mxu0
      %v3861 = vpop.f32.mrf.mxu0
      %v3862 = vadd.f32 0.0, %v3861
      %v3863 = vpop.f32.mrf.mxu0
      %3864 = vmatprep.mubr.bf16.mxu0 %v3703
      %3865 = vmatmul.mubr.bf16.gmra.mxu0 %v3702
      %v3866 = vpop.f32.mrf.mxu0
      %v3867 = vadd.f32 0.0, %v3866
      %v3868 = vpop.f32.mrf.mxu0
      %v3869 = vpop.f32.mrf.mxu0
      %v3870 = vadd.f32 0.0, %v3869
      %v3871 = vpop.f32.mrf.mxu0
      %3872 = vmatprep.mubr.bf16.mxu0 %v3705
      %3873 = vmatmul.mubr.bf16.gmra.mxu0 %v3704
      %v3874 = vpop.f32.mrf.mxu0
      %v3875 = vadd.f32 0.0, %v3874
      %v3876 = vpop.f32.mrf.mxu0
      %v3877 = vpop.f32.mrf.mxu0
      %v3878 = vadd.f32 0.0, %v3877
      %v3879 = vpop.f32.mrf.mxu0
      %3880 = vmatprep.mubr.bf16.mxu0 %v3707
      %3881 = vmatmul.mubr.bf16.gmra.mxu0 %v3706
      %v3882 = vpop.f32.mrf.mxu0
      %v3883 = vadd.f32 0.0, %v3882
      %v3884 = vpop.f32.mrf.mxu0
      %v3885 = vpop.f32.mrf.mxu0
      %v3886 = vadd.f32 0.0, %v3885
      %v3887 = vpop.f32.mrf.mxu0
      %3888 = vmatprep.mubr.bf16.mxu0 %v3709
      %3889 = vmatmul.mubr.bf16.gmra.mxu0 %v3708
      %v3890 = vpop.f32.mrf.mxu0
      %v3891 = vadd.f32 0.0, %v3890
      %v3892 = vpop.f32.mrf.mxu0
      %v3893 = vpop.f32.mrf.mxu0
      %v3894 = vadd.f32 0.0, %v3893
      %v3895 = vpop.f32.mrf.mxu0
      %3896 = vmatprep.mubr.bf16.mxu0 %v3711
      %3897 = vmatmul.mubr.bf16.gmra.mxu0 %v3710
      %v3898 = vpop.f32.mrf.mxu0
      %v3899 = vadd.f32 0.0, %v3898
      %v3900 = vpop.f32.mrf.mxu0
      %v3901 = vpop.f32.mrf.mxu0
      %v3902 = vadd.f32 0.0, %v3901
      %v3903 = vpop.f32.mrf.mxu0
      %3904 = vdwg.mxu0
      %v3905 = vmax.f32 %v3779, 0.0
      %v3906 = vmax.f32 %v3782, 0.0
      %v3907 = vmax.f32 %v3787, 0.0
      %v3908 = vmax.f32 %v3790, 0.0
      %v3909 = vmax.f32 %v3795, 0.0
      %v3910 = vmax.f32 %v3798, 0.0
      %v3911 = vmax.f32 %v3803, 0.0
      %v3912 = vmax.f32 %v3806, 0.0
      %v3913 = vmax.f32 %v3811, 0.0
      %v3914 = vmax.f32 %v3814, 0.0
      %v3915 = vmax.f32 %v3819, 0.0
      %v3916 = vmax.f32 %v3822, 0.0
      %v3917 = vmax.f32 %v3827, 0.0
      %v3918 = vmax.f32 %v3830, 0.0
      %v3919 = vmax.f32 %v3835, 0.0
      %v3920 = vmax.f32 %v3838, 0.0
      %v3921 = vmax.f32 %v3843, 0.0
      %v3922 = vmax.f32 %v3846, 0.0
      %v3923 = vmax.f32 %v3851, 0.0
      %v3924 = vmax.f32 %v3854, 0.0
      %v3925 = vmax.f32 %v3859, 0.0
      %v3926 = vmax.f32 %v3862, 0.0
      %v3927 = vmax.f32 %v3867, 0.0
      %v3928 = vmax.f32 %v3870, 0.0
      %v3929 = vmax.f32 %v3875, 0.0
      %v3930 = vmax.f32 %v3878, 0.0
      %v3931 = vmax.f32 %v3883, 0.0
      %v3932 = vmax.f32 %v3886, 0.0
      %v3933 = vmax.f32 %v3891, 0.0
      %v3934 = vmax.f32 %v3894, 0.0
      %v3935 = vmax.f32 %v3899, 0.0
      %v3936 = vmax.f32 %v3902, 0.0
      %v3937 = vld [vmem:[%s13] sm:$0x3]
      %v3938 = vpack.c.bf16 %v3906, %v3905
      %v3939 = vpack.c.bf16 %v3908, %v3907
      %v3940 = vpack.c.bf16 %v3910, %v3909
      %v3941 = vpack.c.bf16 %v3912, %v3911
      %v3942 = vpack.c.bf16 %v3914, %v3913
      %v3943 = vpack.c.bf16 %v3916, %v3915
      %v3944 = vpack.c.bf16 %v3918, %v3917
      %v3945 = vpack.c.bf16 %v3920, %v3919
      %v3946 = vpack.c.bf16 %v3922, %v3921
      %v3947 = vpack.c.bf16 %v3924, %v3923
      %v3948 = vpack.c.bf16 %v3926, %v3925
      %v3949 = vpack.c.bf16 %v3928, %v3927
      %v3950 = vpack.c.bf16 %v3930, %v3929
      %v3951 = vpack.c.bf16 %v3932, %v3931
      %v3952 = vpack.c.bf16 %v3934, %v3933
      %v3953 = vpack.c.bf16 %v3936, %v3935
      %v3954 = vld [vmem:[%s14] sm:$0x3]
      %3956 = vset.pattern.permute.xlu0 0
      %3957 = vperm.xlu0 %3956, %v3954
      %v3958 = vpop.permute.xlu0 %3957
      %v3962 = vunpack.c.l.s4 1966171168
      %v3963 = vunpack.c.0.s8 %v3962
      %v3964 = vlaneseq
      %v3965 = vshrl.u32 %v3964, 7
      %v3966 = vsub.s32 %v3963, %v3965
      %v3967 = vrot.slane %v3937, %v3966
      %v3968 = vcombine.high %v3967, %v3967
      %v3970 = vunpack.c.l.s4 1966171168
      %v3971 = vunpack.c.0.s8 %v3970
      %v3972 = vlaneseq
      %v3973 = vshrl.u32 %v3972, 7
      %v3974 = vsub.s32 %v3971, %v3973
      %v3975 = vrot.slane %v3967, %v3974
      %v3977 = vunpack.c.l.s4 1966171168
      %v3978 = vunpack.c.0.s8 %v3977
      %v3979 = vlaneseq
      %v3980 = vshrl.u32 %v3979, 7
      %v3981 = vsub.s32 %v3978, %v3980
      %v3982 = vrot.slane %v3968, %v3981
      %3985 = vmatprep.subr.bf16.mxu0 0
      %3986 = vmatpush1.bf16.msra.mxu0 %v3945
      %3987 = vmatprep.subr.bf16.mxu0 0
      %3988 = vmatpush1.bf16.msra.mxu0 %v3944
      %3989 = vmatprep.subr.bf16.mxu0 0
      %3990 = vmatpush1.bf16.msra.mxu0 %v3943
      %3991 = vmatprep.subr.bf16.mxu0 0
      %3992 = vmatpush1.bf16.msra.mxu0 %v3942
      %3993 = vmatprep.subr.bf16.mxu0 0
      %3994 = vmatpush1.bf16.msra.mxu0 %v3941
      %3995 = vmatprep.subr.bf16.mxu0 0
      %3996 = vmatpush1.bf16.msra.mxu0 %v3940
      %3997 = vmatprep.subr.bf16.mxu0 0
      %3998 = vmatpush1.bf16.msra.mxu0 %v3939
      %3999 = vmatprep.subr.bf16.mxu0 0
      %4000 = vmatpush1.bf16.msra.mxu0 %v3938
      %4001 = vmatprep.subr.bf16.mxu0 0
      %4002 = vmatpush2.bf16.msra.mxu0 %v3953
      %4003 = vmatprep.subr.bf16.mxu0 0
      %4004 = vmatpush2.bf16.msra.mxu0 %v3952
      %4005 = vmatprep.subr.bf16.mxu0 0
      %4006 = vmatpush2.bf16.msra.mxu0 %v3951
      %4007 = vmatprep.subr.bf16.mxu0 0
      %4008 = vmatpush2.bf16.msra.mxu0 %v3950
      %4009 = vmatprep.subr.bf16.mxu0 0
      %4010 = vmatpush2.bf16.msra.mxu0 %v3949
      %4011 = vmatprep.subr.bf16.mxu0 0
      %4012 = vmatpush2.bf16.msra.mxu0 %v3948
      %4013 = vmatprep.subr.bf16.mxu0 0
      %4014 = vmatpush2.bf16.msra.mxu0 %v3947
      %4015 = vmatprep.subr.bf16.mxu0 0
      %4016 = vmatpush2.bf16.msra.mxu0 %v3946
      %4017 = vmatprep.mubr.bf16.mxu0 %v3982
      %4018 = vmatmul.mubr.bf16.gmra.mxu0 %v3975
      %v4019 = vpop.f32.mrf.mxu0
      %v4020 = vadd.f32 %v3958, %v4019
      %v4021 = vpop.f32.mrf.mxu0
      %v4022 = vpop.f32.mrf.mxu0
      %v4023 = vpop.f32.mrf.mxu0
      %4024 = vdwg.mxu0
      %vm4025 = vcmask 25600
      %4026 = vst.msk [vmem:[#allocation3] sm:$0x3] %vm4025, %v4020
    $region69: #{jet_cls_forward.1} parent=1 // pred_fallthru
      _
    // Predicated region
    $region70: #{jet_cls_forward.1} parent=1 // pred_check
      _
    $region71: #{jet_cls_forward.1} parent=1 // pred_check_branch
      %4028 = sbr.rel (0) target = $region73
    $region72: #{jet_cls_forward.1} parent=1 // pred_region
      %s4030 = ssub.s32 32, 32
      %4031 = vsyncadd [#allocation4], %s4030
      %s4033 = sshll.u32 [#allocation3], 4
      %s4034 = int_to_ptr.vmem [resolvable:$true] %s4033
      %4036 = dma.vmem_to_hbm [thread:$0]  %s4034, 32, %s15, [#allocation4]
    $region73: #{jet_cls_forward.1} parent=1 // pred_fallthru
      _
    // Predicated region
    $region74: #{jet_cls_forward.1} parent=1 // pred_check
      _
    $region75: #{jet_cls_forward.1} parent=1 // pred_check_branch
      %4038 = sbr.rel (0) target = $region77
    $region76: #{jet_cls_forward.1} parent=1 // pred_region
      %4039 = dma.done [#allocation4], 32
    $region77: #{jet_cls_forward.1} parent=1 // pred_fallthru
      _
    %4040 = vsyncpa [#allocation4], 1

</llo_original>
